<compile_context>
chip_gen: v7x
topology: tpu7x:2x2x1
jax: 0.10.0
libtpu: 0.0.40
codegen_flags: <defaults>
</compile_context>

<pallas_src>
import math
import jax
import jax.numpy as jnp
import numpy as np
from jax import lax
from jax.experimental import pallas as pl
from jax.experimental.pallas import tpu as pltpu


def _round_up(v, m):
    return (v + m - 1) // m * m


# ----------------------------- in-kernel recurrence ---------------------------
def _lstm_recurrence(gx_scr, whh_ref, h_scr, c_scr, T, out_seq_ref=None):
    """Serial LSTM recurrence over T steps.

    gx_scr : VMEM scratch (T*B, 4*H) -- precomputed x @ W_ih^T + b, time-major.
    whh_ref: (H, 4*H) recurrent weights (read from VMEM each step).
    h_scr / c_scr: (B, H) state scratch.
    out_seq_ref: optional (T, B, H) output ref (hidden sequence).
    """
    B, H = h_scr.shape

    def step(t, carry):
        row0 = pl.multiple_of(t * B, B)          # sublane-aligned start
        gates = (gx_scr[pl.ds(row0, B), :]
                 + jnp.dot(h_scr[...], whh_ref[...],
                           preferred_element_type=jnp.float32))   # (B, 4H)
        # PyTorch gate order i, f, g, o; each gate is a lane-aligned H block.
        i = jax.nn.sigmoid(gates[:, 0 * H:1 * H])
        f = jax.nn.sigmoid(gates[:, 1 * H:2 * H])
        g = jnp.tanh(gates[:, 2 * H:3 * H])
        o = jax.nn.sigmoid(gates[:, 3 * H:4 * H])
        c_new = f * c_scr[...] + i * g
        h_new = o * jnp.tanh(c_new)
        h_scr[...] = h_new
        c_scr[...] = c_new
        if out_seq_ref is not None:
            out_seq_ref[t] = h_new
        return carry

    lax.fori_loop(0, T, step, 0, unroll=True)


# ------------------------- LSTM layer kernel (mid layers) ---------------------
def lstm_layer_kernel(x_ref, wih_ref, whh_ref, b_ref, out_ref,
                      gx_scr, h_scr, c_scr):
    # Hoisted input projection: ONE big (T*B, Din) @ (Din, 4H) matmul.
    gx_scr[...] = (jnp.dot(x_ref[...], wih_ref[...],
                           preferred_element_type=jnp.float32) + b_ref[...])
    h_scr[...] = jnp.zeros_like(h_scr)
    c_scr[...] = jnp.zeros_like(c_scr)
    T = out_ref.shape[0]
    _lstm_recurrence(gx_scr, whh_ref, h_scr, c_scr, T, out_seq_ref=out_ref)


def lstm_layer(seq_flat, w_ih_t, w_hh_t, b_row, T):
    """seq_flat: (T*B, Din) time-major rows. Returns (T, B, H) hidden states."""
    M, _ = seq_flat.shape
    B = M // T
    H, G = w_hh_t.shape
    return pl.pallas_call(
        lstm_layer_kernel,
        out_shape=jax.ShapeDtypeStruct((T, B, H), jnp.float32),
        scratch_shapes=[
            pltpu.VMEM((M, G), jnp.float32),   # gx: hoisted input projection
            pltpu.VMEM((B, H), jnp.float32),   # h state
            pltpu.VMEM((B, H), jnp.float32),   # c state
        ],
    )(seq_flat, w_ih_t, w_hh_t, b_row)


# --------------- final LSTM layer fused with fc + sigmoid epilogue ------------
def lstm_final_kernel(x_ref, wih_ref, whh_ref, b_ref, fcw_ref, fcb_ref,
                      out_ref, gx_scr, h_scr, c_scr):
    gx_scr[...] = (jnp.dot(x_ref[...], wih_ref[...],
                           preferred_element_type=jnp.float32) + b_ref[...])
    h_scr[...] = jnp.zeros_like(h_scr)
    c_scr[...] = jnp.zeros_like(c_scr)
    T = gx_scr.shape[0] // h_scr.shape[0]
    # Only the last hidden state is needed -> no (T,B,H) sequence written.
    _lstm_recurrence(gx_scr, whh_ref, h_scr, c_scr, T, out_seq_ref=None)
    out_ref[...] = jax.nn.sigmoid(
        jnp.dot(h_scr[...], fcw_ref[...], preferred_element_type=jnp.float32)
        + fcb_ref[...])


def lstm_final_layer(seq_flat, w_ih_t, w_hh_t, b_row, fc_w_t, fc_b_row, T):
    M, _ = seq_flat.shape
    B = M // T
    H, G = w_hh_t.shape
    C = fc_w_t.shape[1]
    return pl.pallas_call(
        lstm_final_kernel,
        out_shape=jax.ShapeDtypeStruct((B, C), jnp.float32),
        scratch_shapes=[
            pltpu.VMEM((M, G), jnp.float32),
            pltpu.VMEM((B, H), jnp.float32),
            pltpu.VMEM((B, H), jnp.float32),
        ],
    )(seq_flat, w_ih_t, w_hh_t, b_row, fc_w_t, fc_b_row)


# ------------------------------ model wrapper ---------------------------------
def rnn_lstm_forward(x_btd, params):
    """Equivalent of RNN_LSTM.forward. x_btd: (B, T, input_size)."""
    B, T, D = x_btd.shape
    B_pad = _round_up(B, 8)
    D_pad, H_pad = params["D_pad"], params["H_pad"]

    # Single tiny pad + time-major pass at the network input; every later
    # layer stays time-major (T*B rows) so reshapes are free.
    x_pad = jnp.zeros((T, B_pad, D_pad), jnp.float32)
    x_pad = x_pad.at[:, :B, :D].set(jnp.transpose(x_btd, (1, 0, 2)))
    seq_flat = x_pad.reshape(T * B_pad, D_pad)

    n_layers = len(params["lstm"])
    out_pad = None
    for layer, (w_ih_t, w_hh_t, b_row) in enumerate(params["lstm"]):
        if layer + 1 < n_layers:
            h_seq = lstm_layer(seq_flat, w_ih_t, w_hh_t, b_row, T)     # (T,Bp,Hp)
            seq_flat = h_seq.reshape(T * B_pad, H_pad)                 # free reshape
        else:
            out_pad = lstm_final_layer(seq_flat, w_ih_t, w_hh_t, b_row,
                                       params["fc_w_t"], params["fc_b_row"], T)
    return out_pad[:B, :params["C"]]


# ------------------------------ parameter setup --------------------------------
def init_params(key, input_size, hidden_size, num_layers, num_classes):
    """Raw PyTorch-layout weights (same init scheme as nn.LSTM / nn.Linear)."""
    k = 1.0 / math.sqrt(hidden_size)
    raw = {"lstm": []}
    for layer in range(num_layers):
        in_dim = input_size if layer == 0 else hidden_size
        key, k1, k2, k3, k4 = jax.random.split(key, 5)
        w_ih = jax.random.uniform(k1, (4 * hidden_size, in_dim), jnp.float32, -k, k)
        w_hh = jax.random.uniform(k2, (4 * hidden_size, hidden_size), jnp.float32, -k, k)
        b_ih = jax.random.uniform(k3, (4 * hidden_size,), jnp.float32, -k, k)
        b_hh = jax.random.uniform(k4, (4 * hidden_size,), jnp.float32, -k, k)
        raw["lstm"].append((w_ih, w_hh, b_ih, b_hh))
    key, k5, k6 = jax.random.split(key, 3)
    raw["fc_w"] = jax.random.uniform(k5, (num_classes, hidden_size), jnp.float32, -k, k)
    raw["fc_b"] = jax.random.uniform(k6, (num_classes,), jnp.float32, -k, k)
    return raw


def prepare_params(raw, input_size, hidden_size, num_classes):
    """Pad & transpose raw weights into the lane-aligned per-gate layout the
    kernels expect: gate g occupies columns [g*H_pad, g*H_pad + H), padded
    lanes are zero (which keeps padded h/c lanes exactly zero through time)."""
    H = hidden_size
    H_pad = _round_up(H, 128)
    D_pad = _round_up(input_size, 128)
    C_pad = _round_up(num_classes, 128)

    def pack_layer(w_ih, w_hh, b_ih, b_hh, in_pad):
        in_dim = w_ih.shape[1]
        w_ih_t = jnp.zeros((in_pad, 4 * H_pad), jnp.float32)
        w_hh_t = jnp.zeros((H_pad, 4 * H_pad), jnp.float32)
        b_row = jnp.zeros((1, 4 * H_pad), jnp.float32)
        b = b_ih + b_hh
        for g in range(4):
            w_ih_t = w_ih_t.at[:in_dim, g * H_pad:g * H_pad + H].set(
                w_ih[g * H:(g + 1) * H, :].T)
            w_hh_t = w_hh_t.at[:H, g * H_pad:g * H_pad + H].set(
                w_hh[g * H:(g + 1) * H, :].T)
            b_row = b_row.at[0, g * H_pad:g * H_pad + H].set(b[g * H:(g + 1) * H])
        return w_ih_t, w_hh_t, b_row

    params = {"lstm": [], "H_pad": H_pad, "D_pad": D_pad, "C_pad": C_pad,
              "H": H, "C": num_classes}
    for layer, (w_ih, w_hh, b_ih, b_hh) in enumerate(raw["lstm"]):
        in_pad = D_pad if layer == 0 else H_pad
        params["lstm"].append(pack_layer(w_ih, w_hh, b_ih, b_hh, in_pad))
    fc_w_t = jnp.zeros((H_pad, C_pad), jnp.float32)
    fc_w_t = fc_w_t.at[:H, :num_classes].set(raw["fc_w"].T)
    fc_b_row = jnp.zeros((1, C_pad), jnp.float32)
    fc_b_row = fc_b_row.at[0, :num_classes].set(raw["fc_b"])
    params["fc_w_t"] = fc_w_t
    params["fc_b_row"] = fc_b_row
    return params


# ---------------------------- pure-JAX reference -------------------------------
def reference_forward(x_btd, raw, hidden_size):
    B = x_btd.shape[0]
    H = hidden_size
    h_seq = jnp.transpose(x_btd, (1, 0, 2))
    for (w_ih, w_hh, b_ih, b_hh) in raw["lstm"]:
        h = jnp.zeros((B, H), jnp.float32)
        c = jnp.zeros((B, H), jnp.float32)
        outs = []
        for t in range(h_seq.shape[0]):
            gates = h_seq[t] @ w_ih.T + h @ w_hh.T + (b_ih + b_hh)
            i = jax.nn.sigmoid(gates[:, :H])
            f = jax.nn.sigmoid(gates[:, H:2 * H])
            g = jnp.tanh(gates[:, 2 * H:3 * H])
            o = jax.nn.sigmoid(gates[:, 3 * H:])
            c = f * c + i * g
            h = o * jnp.tanh(c)
            outs.append(h)
        h_seq = jnp.stack(outs, axis=0)
    return jax.nn.sigmoid(h_seq[-1] @ raw["fc_w"].T + raw["fc_b"])


if __name__ == "__main__":
    batch, seq_len = 2, 8
    input_size, hidden_size, num_layers, num_classes = 16, 32, 2, 1

    key = jax.random.PRNGKey(0)
    key, xk, pk = jax.random.split(key, 3)
    x = jax.random.normal(xk, (batch, seq_len, input_size), jnp.float32)

    raw = init_params(pk, input_size, hidden_size, num_layers, num_classes)
    params = prepare_params(raw, input_size, hidden_size, num_classes)

    out = rnn_lstm_forward(x, params)            # (batch, num_classes) in (0, 1)
    out = jax.block_until_ready(out)

    ref = jax.block_until_ready(reference_forward(x, raw, hidden_size))
    np.testing.assert_allclose(np.asarray(out), np.asarray(ref),
                               rtol=1e-5, atol=1e-5)
    print("KERNEL_OK")
</pallas_src>

<mosaic_0001>
module attributes {stable_mosaic.version = 11 : i64} {
  func.func @lstm_layer_kernel(%arg0: memref<64x128xf32, #tpu.memory_space<vmem>>, %arg1: memref<128x512xf32, #tpu.memory_space<vmem>>, %arg2: memref<128x512xf32, #tpu.memory_space<vmem>>, %arg3: memref<1x512xf32, #tpu.memory_space<vmem>>, %arg4: memref<8x8x128xf32, #tpu.memory_space<vmem>>, %arg5: memref<64x512xf32, #tpu.memory_space<vmem>>, %arg6: memref<8x128xf32, #tpu.memory_space<vmem>>, %arg7: memref<8x128xf32, #tpu.memory_space<vmem>>) attributes {dimension_semantics = [], scalar_prefetch = 0 : i64, scratch_operands = 3 : i64, tpu.core_type = #tpu.core_type<tc>} {
    %c0 = arith.constant 0 : index
    %c0_0 = arith.constant 0 : index
    %0 = vector.load %arg0[%c0, %c0_0] : memref<64x128xf32, #tpu.memory_space<vmem>>, vector<64x128xf32>
    %c0_1 = arith.constant 0 : index
    %c0_2 = arith.constant 0 : index
    %1 = vector.load %arg1[%c0_1, %c0_2] : memref<128x512xf32, #tpu.memory_space<vmem>>, vector<128x512xf32>
    %cst = arith.constant dense<0.000000e+00> : vector<64x512xf32>
    %2 = tpu.matmul %0, %1, %cst {dimension_numbers = #tpu.dot_dimension_numbers<[1], [0], [0], [1], [0, 0, 1, 1], [], []>} : vector<64x128xf32>, vector<128x512xf32>, vector<64x512xf32> -> vector<64x512xf32>
    %c0_3 = arith.constant 0 : index
    %c0_4 = arith.constant 0 : index
    %3 = vector.load %arg3[%c0_3, %c0_4] : memref<1x512xf32, #tpu.memory_space<vmem>>, vector<1x512xf32>
    %4 = vector.broadcast %3 : vector<1x512xf32> to vector<64x512xf32>
    %5 = arith.addf %2, %4 : vector<64x512xf32>
    %c0_5 = arith.constant 0 : index
    %c0_6 = arith.constant 0 : index
    %6 = vector.load %arg5[%c0_5, %c0_6] : memref<64x512xf32, #tpu.memory_space<vmem>>, vector<64x512xf32>
    tpu.vector_store %arg5[%c0_5, %c0_6], %5 {strides = array<i32>} : memref<64x512xf32, #tpu.memory_space<vmem>>, vector<64x512xf32>,
    %cst_7 = arith.constant 0.000000e+00 : f32
    %7 = vector.broadcast %cst_7 : f32 to vector<8x128xf32>
    %c0_8 = arith.constant 0 : index
    %c0_9 = arith.constant 0 : index
    %8 = vector.load %arg6[%c0_8, %c0_9] : memref<8x128xf32, #tpu.memory_space<vmem>>, vector<8x128xf32>
    tpu.vector_store %arg6[%c0_8, %c0_9], %7 {strides = array<i32>} : memref<8x128xf32, #tpu.memory_space<vmem>>, vector<8x128xf32>,
    %cst_10 = arith.constant 0.000000e+00 : f32
    %9 = vector.broadcast %cst_10 : f32 to vector<8x128xf32>
    %c0_11 = arith.constant 0 : index
    %c0_12 = arith.constant 0 : index
    %10 = vector.load %arg7[%c0_11, %c0_12] : memref<8x128xf32, #tpu.memory_space<vmem>>, vector<8x128xf32>
    tpu.vector_store %arg7[%c0_11, %c0_12], %9 {strides = array<i32>} : memref<8x128xf32, #tpu.memory_space<vmem>>, vector<8x128xf32>,
    %c0_i32 = arith.constant 0 : i32
    %c8_i32 = arith.constant 8 : i32
    %11 = arith.muli %c0_i32, %c8_i32 : i32
    %12 = tpu.assume_multiple %11, 8 : i32
    %13 = arith.index_cast %12 : i32 to index
    %c0_13 = arith.constant 0 : index
    %14 = vector.load %arg5[%13, %c0_13] : memref<64x512xf32, #tpu.memory_space<vmem>>, vector<8x512xf32>
    %c0_14 = arith.constant 0 : index
    %c0_15 = arith.constant 0 : index
    %15 = vector.load %arg6[%c0_14, %c0_15] : memref<8x128xf32, #tpu.memory_space<vmem>>, vector<8x128xf32>
    %c0_16 = arith.constant 0 : index
    %c0_17 = arith.constant 0 : index
    %16 = vector.load %arg2[%c0_16, %c0_17] : memref<128x512xf32, #tpu.memory_space<vmem>>, vector<128x512xf32>
    %cst_18 = arith.constant dense<0.000000e+00> : vector<8x512xf32>
    %17 = tpu.matmul %15, %16, %cst_18 {dimension_numbers = #tpu.dot_dimension_numbers<[1], [0], [0], [1], [0, 0, 1, 1], [], []>} : vector<8x128xf32>, vector<128x512xf32>, vector<8x512xf32> -> vector<8x512xf32>
    %18 = arith.addf %14, %17 : vector<8x512xf32>
    %19 = vector.extract_strided_slice %18 {offsets = [0, 0], sizes = [8, 128], strides = [1, 1]} : vector<8x512xf32> to vector<8x128xf32>
    %20 = arith.negf %19 : vector<8x128xf32>
    %21 = math.exp %20 : vector<8x128xf32>
    %cst_19 = arith.constant 1.000000e+00 : f32
    %22 = vector.broadcast %cst_19 : f32 to vector<8x128xf32>
    %23 = arith.addf %22, %21 : vector<8x128xf32>
    %24 = arith.divf %22, %23 : vector<8x128xf32>
    %25 = vector.extract_strided_slice %18 {offsets = [0, 128], sizes = [8, 128], strides = [1, 1]} : vector<8x512xf32> to vector<8x128xf32>
    %26 = arith.negf %25 : vector<8x128xf32>
    %27 = math.exp %26 : vector<8x128xf32>
    %cst_20 = arith.constant 1.000000e+00 : f32
    %28 = vector.broadcast %cst_20 : f32 to vector<8x128xf32>
    %29 = arith.addf %28, %27 : vector<8x128xf32>
    %30 = arith.divf %28, %29 : vector<8x128xf32>
    %31 = vector.extract_strided_slice %18 {offsets = [0, 256], sizes = [8, 128], strides = [1, 1]} : vector<8x512xf32> to vector<8x128xf32>
    %32 = math.tanh %31 : vector<8x128xf32>
    %33 = vector.extract_strided_slice %18 {offsets = [0, 384], sizes = [8, 128], strides = [1, 1]} : vector<8x512xf32> to vector<8x128xf32>
    %34 = arith.negf %33 : vector<8x128xf32>
    %35 = math.exp %34 : vector<8x128xf32>
    %cst_21 = arith.constant 1.000000e+00 : f32
    %36 = vector.broadcast %cst_21 : f32 to vector<8x128xf32>
    %37 = arith.addf %36, %35 : vector<8x128xf32>
    %38 = arith.divf %36, %37 : vector<8x128xf32>
    %c0_22 = arith.constant 0 : index
    %c0_23 = arith.constant 0 : index
    %39 = vector.load %arg7[%c0_22, %c0_23] : memref<8x128xf32, #tpu.memory_space<vmem>>, vector<8x128xf32>
    %40 = arith.mulf %30, %39 : vector<8x128xf32>
    %41 = arith.mulf %24, %32 : vector<8x128xf32>
    %42 = arith.addf %40, %41 : vector<8x128xf32>
    %43 = math.tanh %42 : vector<8x128xf32>
    %44 = arith.mulf %38, %43 : vector<8x128xf32>
    %c0_24 = arith.constant 0 : index
    %c0_25 = arith.constant 0 : index
    %45 = vector.load %arg6[%c0_24, %c0_25] : memref<8x128xf32, #tpu.memory_space<vmem>>, vector<8x128xf32>
    tpu.vector_store %arg6[%c0_24, %c0_25], %44 {strides = array<i32>} : memref<8x128xf32, #tpu.memory_space<vmem>>, vector<8x128xf32>,
    %c0_26 = arith.constant 0 : index
    %c0_27 = arith.constant 0 : index
    %46 = vector.load %arg7[%c0_26, %c0_27] : memref<8x128xf32, #tpu.memory_space<vmem>>, vector<8x128xf32>
    tpu.vector_store %arg7[%c0_26, %c0_27], %42 {strides = array<i32>} : memref<8x128xf32, #tpu.memory_space<vmem>>, vector<8x128xf32>,
    %47 = arith.index_cast %c0_i32 : i32 to index
    %c0_28 = arith.constant 0 : index
    %c0_29 = arith.constant 0 : index
    %48 = vector.load %arg4[%47, %c0_28, %c0_29] : memref<8x8x128xf32, #tpu.memory_space<vmem>>, vector<1x8x128xf32>
    %49 = vector.shape_cast %48 : vector<1x8x128xf32> to vector<8x128xf32>
    %50 = vector.shape_cast %44 : vector<8x128xf32> to vector<1x8x128xf32>
    tpu.vector_store %arg4[%47, %c0_28, %c0_29], %50 {strides = array<i32>} : memref<8x8x128xf32, #tpu.memory_space<vmem>>, vector<1x8x128xf32>,
    %c1_i32 = arith.constant 1 : i32
    %c8_i32_30 = arith.constant 8 : i32
    %51 = arith.muli %c1_i32, %c8_i32_30 : i32
    %52 = tpu.assume_multiple %51, 8 : i32
    %53 = arith.index_cast %52 : i32 to index
    %c0_31 = arith.constant 0 : index
    %54 = vector.load %arg5[%53, %c0_31] : memref<64x512xf32, #tpu.memory_space<vmem>>, vector<8x512xf32>
    %c0_32 = arith.constant 0 : index
    %c0_33 = arith.constant 0 : index
    %55 = vector.load %arg6[%c0_32, %c0_33] : memref<8x128xf32, #tpu.memory_space<vmem>>, vector<8x128xf32>
    %c0_34 = arith.constant 0 : index
    %c0_35 = arith.constant 0 : index
    %56 = vector.load %arg2[%c0_34, %c0_35] : memref<128x512xf32, #tpu.memory_space<vmem>>, vector<128x512xf32>
    %cst_36 = arith.constant dense<0.000000e+00> : vector<8x512xf32>
    %57 = tpu.matmul %55, %56, %cst_36 {dimension_numbers = #tpu.dot_dimension_numbers<[1], [0], [0], [1], [0, 0, 1, 1], [], []>} : vector<8x128xf32>, vector<128x512xf32>, vector<8x512xf32> -> vector<8x512xf32>
    %58 = arith.addf %54, %57 : vector<8x512xf32>
    %59 = vector.extract_strided_slice %58 {offsets = [0, 0], sizes = [8, 128], strides = [1, 1]} : vector<8x512xf32> to vector<8x128xf32>
    %60 = arith.negf %59 : vector<8x128xf32>
    %61 = math.exp %60 : vector<8x128xf32>
    %cst_37 = arith.constant 1.000000e+00 : f32
    %62 = vector.broadcast %cst_37 : f32 to vector<8x128xf32>
    %63 = arith.addf %62, %61 : vector<8x128xf32>
    %64 = arith.divf %62, %63 : vector<8x128xf32>
    %65 = vector.extract_strided_slice %58 {offsets = [0, 128], sizes = [8, 128], strides = [1, 1]} : vector<8x512xf32> to vector<8x128xf32>
    %66 = arith.negf %65 : vector<8x128xf32>
    %67 = math.exp %66 : vector<8x128xf32>
    %cst_38 = arith.constant 1.000000e+00 : f32
    %68 = vector.broadcast %cst_38 : f32 to vector<8x128xf32>
    %69 = arith.addf %68, %67 : vector<8x128xf32>
    %70 = arith.divf %68, %69 : vector<8x128xf32>
    %71 = vector.extract_strided_slice %58 {offsets = [0, 256], sizes = [8, 128], strides = [1, 1]} : vector<8x512xf32> to vector<8x128xf32>
    %72 = math.tanh %71 : vector<8x128xf32>
    %73 = vector.extract_strided_slice %58 {offsets = [0, 384], sizes = [8, 128], strides = [1, 1]} : vector<8x512xf32> to vector<8x128xf32>
    %74 = arith.negf %73 : vector<8x128xf32>
    %75 = math.exp %74 : vector<8x128xf32>
    %cst_39 = arith.constant 1.000000e+00 : f32
    %76 = vector.broadcast %cst_39 : f32 to vector<8x128xf32>
    %77 = arith.addf %76, %75 : vector<8x128xf32>
    %78 = arith.divf %76, %77 : vector<8x128xf32>
    %c0_40 = arith.constant 0 : index
    %c0_41 = arith.constant 0 : index
    %79 = vector.load %arg7[%c0_40, %c0_41] : memref<8x128xf32, #tpu.memory_space<vmem>>, vector<8x128xf32>
    %80 = arith.mulf %70, %79 : vector<8x128xf32>
    %81 = arith.mulf %64, %72 : vector<8x128xf32>
    %82 = arith.addf %80, %81 : vector<8x128xf32>
    %83 = math.tanh %82 : vector<8x128xf32>
    %84 = arith.mulf %78, %83 : vector<8x128xf32>
    %c0_42 = arith.constant 0 : index
    %c0_43 = arith.constant 0 : index
    %85 = vector.load %arg6[%c0_42, %c0_43] : memref<8x128xf32, #tpu.memory_space<vmem>>, vector<8x128xf32>
    tpu.vector_store %arg6[%c0_42, %c0_43], %84 {strides = array<i32>} : memref<8x128xf32, #tpu.memory_space<vmem>>, vector<8x128xf32>,
    %c0_44 = arith.constant 0 : index
    %c0_45 = arith.constant 0 : index
    %86 = vector.load %arg7[%c0_44, %c0_45] : memref<8x128xf32, #tpu.memory_space<vmem>>, vector<8x128xf32>
    tpu.vector_store %arg7[%c0_44, %c0_45], %82 {strides = array<i32>} : memref<8x128xf32, #tpu.memory_space<vmem>>, vector<8x128xf32>,
    %87 = arith.index_cast %c1_i32 : i32 to index
    %c0_46 = arith.constant 0 : index
    %c0_47 = arith.constant 0 : index
    %88 = vector.load %arg4[%87, %c0_46, %c0_47] : memref<8x8x128xf32, #tpu.memory_space<vmem>>, vector<1x8x128xf32>
    %89 = vector.shape_cast %88 : vector<1x8x128xf32> to vector<8x128xf32>
    %90 = vector.shape_cast %84 : vector<8x128xf32> to vector<1x8x128xf32>
    tpu.vector_store %arg4[%87, %c0_46, %c0_47], %90 {strides = array<i32>} : memref<8x8x128xf32, #tpu.memory_space<vmem>>, vector<1x8x128xf32>,
    %c2_i32 = arith.constant 2 : i32
    %c8_i32_48 = arith.constant 8 : i32
    %91 = arith.muli %c2_i32, %c8_i32_48 : i32
    %92 = tpu.assume_multiple %91, 8 : i32
    %93 = arith.index_cast %92 : i32 to index
    %c0_49 = arith.constant 0 : index
    %94 = vector.load %arg5[%93, %c0_49] : memref<64x512xf32, #tpu.memory_space<vmem>>, vector<8x512xf32>
    %c0_50 = arith.constant 0 : index
    %c0_51 = arith.constant 0 : index
    %95 = vector.load %arg6[%c0_50, %c0_51] : memref<8x128xf32, #tpu.memory_space<vmem>>, vector<8x128xf32>
    %c0_52 = arith.constant 0 : index
    %c0_53 = arith.constant 0 : index
    %96 = vector.load %arg2[%c0_52, %c0_53] : memref<128x512xf32, #tpu.memory_space<vmem>>, vector<128x512xf32>
    %cst_54 = arith.constant dense<0.000000e+00> : vector<8x512xf32>
    %97 = tpu.matmul %95, %96, %cst_54 {dimension_numbers = #tpu.dot_dimension_numbers<[1], [0], [0], [1], [0, 0, 1, 1], [], []>} : vector<8x128xf32>, vector<128x512xf32>, vector<8x512xf32> -> vector<8x512xf32>
    %98 = arith.addf %94, %97 : vector<8x512xf32>
    %99 = vector.extract_strided_slice %98 {offsets = [0, 0], sizes = [8, 128], strides = [1, 1]} : vector<8x512xf32> to vector<8x128xf32>
    %100 = arith.negf %99 : vector<8x128xf32>
    %101 = math.exp %100 : vector<8x128xf32>
    %cst_55 = arith.constant 1.000000e+00 : f32
    %102 = vector.broadcast %cst_55 : f32 to vector<8x128xf32>
    %103 = arith.addf %102, %101 : vector<8x128xf32>
    %104 = arith.divf %102, %103 : vector<8x128xf32>
    %105 = vector.extract_strided_slice %98 {offsets = [0, 128], sizes = [8, 128], strides = [1, 1]} : vector<8x512xf32> to vector<8x128xf32>
    %106 = arith.negf %105 : vector<8x128xf32>
    %107 = math.exp %106 : vector<8x128xf32>
    %cst_56 = arith.constant 1.000000e+00 : f32
    %108 = vector.broadcast %cst_56 : f32 to vector<8x128xf32>
    %109 = arith.addf %108, %107 : vector<8x128xf32>
    %110 = arith.divf %108, %109 : vector<8x128xf32>
    %111 = vector.extract_strided_slice %98 {offsets = [0, 256], sizes = [8, 128], strides = [1, 1]} : vector<8x512xf32> to vector<8x128xf32>
    %112 = math.tanh %111 : vector<8x128xf32>
    %113 = vector.extract_strided_slice %98 {offsets = [0, 384], sizes = [8, 128], strides = [1, 1]} : vector<8x512xf32> to vector<8x128xf32>
    %114 = arith.negf %113 : vector<8x128xf32>
    %115 = math.exp %114 : vector<8x128xf32>
    %cst_57 = arith.constant 1.000000e+00 : f32
    %116 = vector.broadcast %cst_57 : f32 to vector<8x128xf32>
    %117 = arith.addf %116, %115 : vector<8x128xf32>
    %118 = arith.divf %116, %117 : vector<8x128xf32>
    %c0_58 = arith.constant 0 : index
    %c0_59 = arith.constant 0 : index
    %119 = vector.load %arg7[%c0_58, %c0_59] : memref<8x128xf32, #tpu.memory_space<vmem>>, vector<8x128xf32>
    %120 = arith.mulf %110, %119 : vector<8x128xf32>
    %121 = arith.mulf %104, %112 : vector<8x128xf32>
    %122 = arith.addf %120, %121 : vector<8x128xf32>
    %123 = math.tanh %122 : vector<8x128xf32>
    %124 = arith.mulf %118, %123 : vector<8x128xf32>
    %c0_60 = arith.constant 0 : index
    %c0_61 = arith.constant 0 : index
    %125 = vector.load %arg6[%c0_60, %c0_61] : memref<8x128xf32, #tpu.memory_space<vmem>>, vector<8x128xf32>
    tpu.vector_store %arg6[%c0_60, %c0_61], %124 {strides = array<i32>} : memref<8x128xf32, #tpu.memory_space<vmem>>, vector<8x128xf32>,
    %c0_62 = arith.constant 0 : index
    %c0_63 = arith.constant 0 : index
    %126 = vector.load %arg7[%c0_62, %c0_63] : memref<8x128xf32, #tpu.memory_space<vmem>>, vector<8x128xf32>
    tpu.vector_store %arg7[%c0_62, %c0_63], %122 {strides = array<i32>} : memref<8x128xf32, #tpu.memory_space<vmem>>, vector<8x128xf32>,
    %127 = arith.index_cast %c2_i32 : i32 to index
    %c0_64 = arith.constant 0 : index
    %c0_65 = arith.constant 0 : index
    %128 = vector.load %arg4[%127, %c0_64, %c0_65] : memref<8x8x128xf32, #tpu.memory_space<vmem>>, vector<1x8x128xf32>
    %129 = vector.shape_cast %128 : vector<1x8x128xf32> to vector<8x128xf32>
    %130 = vector.shape_cast %124 : vector<8x128xf32> to vector<1x8x128xf32>
    tpu.vector_store %arg4[%127, %c0_64, %c0_65], %130 {strides = array<i32>} : memref<8x8x128xf32, #tpu.memory_space<vmem>>, vector<1x8x128xf32>,
    %c3_i32 = arith.constant 3 : i32
    %c8_i32_66 = arith.constant 8 : i32
    %131 = arith.muli %c3_i32, %c8_i32_66 : i32
    %132 = tpu.assume_multiple %131, 8 : i32
    %133 = arith.index_cast %132 : i32 to index
    %c0_67 = arith.constant 0 : index
    %134 = vector.load %arg5[%133, %c0_67] : memref<64x512xf32, #tpu.memory_space<vmem>>, vector<8x512xf32>
    %c0_68 = arith.constant 0 : index
    %c0_69 = arith.constant 0 : index
    %135 = vector.load %arg6[%c0_68, %c0_69] : memref<8x128xf32, #tpu.memory_space<vmem>>, vector<8x128xf32>
    %c0_70 = arith.constant 0 : index
    %c0_71 = arith.constant 0 : index
    %136 = vector.load %arg2[%c0_70, %c0_71] : memref<128x512xf32, #tpu.memory_space<vmem>>, vector<128x512xf32>
    %cst_72 = arith.constant dense<0.000000e+00> : vector<8x512xf32>
    %137 = tpu.matmul %135, %136, %cst_72 {dimension_numbers = #tpu.dot_dimension_numbers<[1], [0], [0], [1], [0, 0, 1, 1], [], []>} : vector<8x128xf32>, vector<128x512xf32>, vector<8x512xf32> -> vector<8x512xf32>
    %138 = arith.addf %134, %137 : vector<8x512xf32>
    %139 = vector.extract_strided_slice %138 {offsets = [0, 0], sizes = [8, 128], strides = [1, 1]} : vector<8x512xf32> to vector<8x128xf32>
    %140 = arith.negf %139 : vector<8x128xf32>
    %141 = math.exp %140 : vector<8x128xf32>
    %cst_73 = arith.constant 1.000000e+00 : f32
    %142 = vector.broadcast %cst_73 : f32 to vector<8x128xf32>
    %143 = arith.addf %142, %141 : vector<8x128xf32>
    %144 = arith.divf %142, %143 : vector<8x128xf32>
    %145 = vector.extract_strided_slice %138 {offsets = [0, 128], sizes = [8, 128], strides = [1, 1]} : vector<8x512xf32> to vector<8x128xf32>
    %146 = arith.negf %145 : vector<8x128xf32>
    %147 = math.exp %146 : vector<8x128xf32>
    %cst_74 = arith.constant 1.000000e+00 : f32
    %148 = vector.broadcast %cst_74 : f32 to vector<8x128xf32>
    %149 = arith.addf %148, %147 : vector<8x128xf32>
    %150 = arith.divf %148, %149 : vector<8x128xf32>
    %151 = vector.extract_strided_slice %138 {offsets = [0, 256], sizes = [8, 128], strides = [1, 1]} : vector<8x512xf32> to vector<8x128xf32>
    %152 = math.tanh %151 : vector<8x128xf32>
    %153 = vector.extract_strided_slice %138 {offsets = [0, 384], sizes = [8, 128], strides = [1, 1]} : vector<8x512xf32> to vector<8x128xf32>
    %154 = arith.negf %153 : vector<8x128xf32>
    %155 = math.exp %154 : vector<8x128xf32>
    %cst_75 = arith.constant 1.000000e+00 : f32
    %156 = vector.broadcast %cst_75 : f32 to vector<8x128xf32>
    %157 = arith.addf %156, %155 : vector<8x128xf32>
    %158 = arith.divf %156, %157 : vector<8x128xf32>
    %c0_76 = arith.constant 0 : index
    %c0_77 = arith.constant 0 : index
    %159 = vector.load %arg7[%c0_76, %c0_77] : memref<8x128xf32, #tpu.memory_space<vmem>>, vector<8x128xf32>
    %160 = arith.mulf %150, %159 : vector<8x128xf32>
    %161 = arith.mulf %144, %152 : vector<8x128xf32>
    %162 = arith.addf %160, %161 : vector<8x128xf32>
    %163 = math.tanh %162 : vector<8x128xf32>
    %164 = arith.mulf %158, %163 : vector<8x128xf32>
    %c0_78 = arith.constant 0 : index
    %c0_79 = arith.constant 0 : index
    %165 = vector.load %arg6[%c0_78, %c0_79] : memref<8x128xf32, #tpu.memory_space<vmem>>, vector<8x128xf32>
    tpu.vector_store %arg6[%c0_78, %c0_79], %164 {strides = array<i32>} : memref<8x128xf32, #tpu.memory_space<vmem>>, vector<8x128xf32>,
    %c0_80 = arith.constant 0 : index
    %c0_81 = arith.constant 0 : index
    %166 = vector.load %arg7[%c0_80, %c0_81] : memref<8x128xf32, #tpu.memory_space<vmem>>, vector<8x128xf32>
    tpu.vector_store %arg7[%c0_80, %c0_81], %162 {strides = array<i32>} : memref<8x128xf32, #tpu.memory_space<vmem>>, vector<8x128xf32>,
    %167 = arith.index_cast %c3_i32 : i32 to index
    %c0_82 = arith.constant 0 : index
    %c0_83 = arith.constant 0 : index
    %168 = vector.load %arg4[%167, %c0_82, %c0_83] : memref<8x8x128xf32, #tpu.memory_space<vmem>>, vector<1x8x128xf32>
    %169 = vector.shape_cast %168 : vector<1x8x128xf32> to vector<8x128xf32>
    %170 = vector.shape_cast %164 : vector<8x128xf32> to vector<1x8x128xf32>
    tpu.vector_store %arg4[%167, %c0_82, %c0_83], %170 {strides = array<i32>} : memref<8x8x128xf32, #tpu.memory_space<vmem>>, vector<1x8x128xf32>,
    %c4_i32 = arith.constant 4 : i32
    %c8_i32_84 = arith.constant 8 : i32
    %171 = arith.muli %c4_i32, %c8_i32_84 : i32
    %172 = tpu.assume_multiple %171, 8 : i32
    %173 = arith.index_cast %172 : i32 to index
    %c0_85 = arith.constant 0 : index
    %174 = vector.load %arg5[%173, %c0_85] : memref<64x512xf32, #tpu.memory_space<vmem>>, vector<8x512xf32>
    %c0_86 = arith.constant 0 : index
    %c0_87 = arith.constant 0 : index
    %175 = vector.load %arg6[%c0_86, %c0_87] : memref<8x128xf32, #tpu.memory_space<vmem>>, vector<8x128xf32>
    %c0_88 = arith.constant 0 : index
    %c0_89 = arith.constant 0 : index
    %176 = vector.load %arg2[%c0_88, %c0_89] : memref<128x512xf32, #tpu.memory_space<vmem>>, vector<128x512xf32>
    %cst_90 = arith.constant dense<0.000000e+00> : vector<8x512xf32>
    %177 = tpu.matmul %175, %176, %cst_90 {dimension_numbers = #tpu.dot_dimension_numbers<[1], [0], [0], [1], [0, 0, 1, 1], [], []>} : vector<8x128xf32>, vector<128x512xf32>, vector<8x512xf32> -> vector<8x512xf32>
    %178 = arith.addf %174, %177 : vector<8x512xf32>
    %179 = vector.extract_strided_slice %178 {offsets = [0, 0], sizes = [8, 128], strides = [1, 1]} : vector<8x512xf32> to vector<8x128xf32>
    %180 = arith.negf %179 : vector<8x128xf32>
    %181 = math.exp %180 : vector<8x128xf32>
    %cst_91 = arith.constant 1.000000e+00 : f32
    %182 = vector.broadcast %cst_91 : f32 to vector<8x128xf32>
    %183 = arith.addf %182, %181 : vector<8x128xf32>
    %184 = arith.divf %182, %183 : vector<8x128xf32>
    %185 = vector.extract_strided_slice %178 {offsets = [0, 128], sizes = [8, 128], strides = [1, 1]} : vector<8x512xf32> to vector<8x128xf32>
    %186 = arith.negf %185 : vector<8x128xf32>
    %187 = math.exp %186 : vector<8x128xf32>
    %cst_92 = arith.constant 1.000000e+00 : f32
    %188 = vector.broadcast %cst_92 : f32 to vector<8x128xf32>
    %189 = arith.addf %188, %187 : vector<8x128xf32>
    %190 = arith.divf %188, %189 : vector<8x128xf32>
    %191 = vector.extract_strided_slice %178 {offsets = [0, 256], sizes = [8, 128], strides = [1, 1]} : vector<8x512xf32> to vector<8x128xf32>
    %192 = math.tanh %191 : vector<8x128xf32>
    %193 = vector.extract_strided_slice %178 {offsets = [0, 384], sizes = [8, 128], strides = [1, 1]} : vector<8x512xf32> to vector<8x128xf32>
    %194 = arith.negf %193 : vector<8x128xf32>
    %195 = math.exp %194 : vector<8x128xf32>
    %cst_93 = arith.constant 1.000000e+00 : f32
    %196 = vector.broadcast %cst_93 : f32 to vector<8x128xf32>
    %197 = arith.addf %196, %195 : vector<8x128xf32>
    %198 = arith.divf %196, %197 : vector<8x128xf32>
    %c0_94 = arith.constant 0 : index
    %c0_95 = arith.constant 0 : index
    %199 = vector.load %arg7[%c0_94, %c0_95] : memref<8x128xf32, #tpu.memory_space<vmem>>, vector<8x128xf32>
    %200 = arith.mulf %190, %199 : vector<8x128xf32>
    %201 = arith.mulf %184, %192 : vector<8x128xf32>
    %202 = arith.addf %200, %201 : vector<8x128xf32>
    %203 = math.tanh %202 : vector<8x128xf32>
    %204 = arith.mulf %198, %203 : vector<8x128xf32>
    %c0_96 = arith.constant 0 : index
    %c0_97 = arith.constant 0 : index
    %205 = vector.load %arg6[%c0_96, %c0_97] : memref<8x128xf32, #tpu.memory_space<vmem>>, vector<8x128xf32>
    tpu.vector_store %arg6[%c0_96, %c0_97], %204 {strides = array<i32>} : memref<8x128xf32, #tpu.memory_space<vmem>>, vector<8x128xf32>,
    %c0_98 = arith.constant 0 : index
    %c0_99 = arith.constant 0 : index
    %206 = vector.load %arg7[%c0_98, %c0_99] : memref<8x128xf32, #tpu.memory_space<vmem>>, vector<8x128xf32>
    tpu.vector_store %arg7[%c0_98, %c0_99], %202 {strides = array<i32>} : memref<8x128xf32, #tpu.memory_space<vmem>>, vector<8x128xf32>,
    %207 = arith.index_cast %c4_i32 : i32 to index
    %c0_100 = arith.constant 0 : index
    %c0_101 = arith.constant 0 : index
    %208 = vector.load %arg4[%207, %c0_100, %c0_101] : memref<8x8x128xf32, #tpu.memory_space<vmem>>, vector<1x8x128xf32>
    %209 = vector.shape_cast %208 : vector<1x8x128xf32> to vector<8x128xf32>
    %210 = vector.shape_cast %204 : vector<8x128xf32> to vector<1x8x128xf32>
    tpu.vector_store %arg4[%207, %c0_100, %c0_101], %210 {strides = array<i32>} : memref<8x8x128xf32, #tpu.memory_space<vmem>>, vector<1x8x128xf32>,
    %c5_i32 = arith.constant 5 : i32
    %c8_i32_102 = arith.constant 8 : i32
    %211 = arith.muli %c5_i32, %c8_i32_102 : i32
    %212 = tpu.assume_multiple %211, 8 : i32
    %213 = arith.index_cast %212 : i32 to index
    %c0_103 = arith.constant 0 : index
    %214 = vector.load %arg5[%213, %c0_103] : memref<64x512xf32, #tpu.memory_space<vmem>>, vector<8x512xf32>
    %c0_104 = arith.constant 0 : index
    %c0_105 = arith.constant 0 : index
    %215 = vector.load %arg6[%c0_104, %c0_105] : memref<8x128xf32, #tpu.memory_space<vmem>>, vector<8x128xf32>
    %c0_106 = arith.constant 0 : index
    %c0_107 = arith.constant 0 : index
    %216 = vector.load %arg2[%c0_106, %c0_107] : memref<128x512xf32, #tpu.memory_space<vmem>>, vector<128x512xf32>
    %cst_108 = arith.constant dense<0.000000e+00> : vector<8x512xf32>
    %217 = tpu.matmul %215, %216, %cst_108 {dimension_numbers = #tpu.dot_dimension_numbers<[1], [0], [0], [1], [0, 0, 1, 1], [], []>} : vector<8x128xf32>, vector<128x512xf32>, vector<8x512xf32> -> vector<8x512xf32>
    %218 = arith.addf %214, %217 : vector<8x512xf32>
    %219 = vector.extract_strided_slice %218 {offsets = [0, 0], sizes = [8, 128], strides = [1, 1]} : vector<8x512xf32> to vector<8x128xf32>
    %220 = arith.negf %219 : vector<8x128xf32>
    %221 = math.exp %220 : vector<8x128xf32>
    %cst_109 = arith.constant 1.000000e+00 : f32
    %222 = vector.broadcast %cst_109 : f32 to vector<8x128xf32>
    %223 = arith.addf %222, %221 : vector<8x128xf32>
    %224 = arith.divf %222, %223 : vector<8x128xf32>
    %225 = vector.extract_strided_slice %218 {offsets = [0, 128], sizes = [8, 128], strides = [1, 1]} : vector<8x512xf32> to vector<8x128xf32>
    %226 = arith.negf %225 : vector<8x128xf32>
    %227 = math.exp %226 : vector<8x128xf32>
    %cst_110 = arith.constant 1.000000e+00 : f32
    %228 = vector.broadcast %cst_110 : f32 to vector<8x128xf32>
    %229 = arith.addf %228, %227 : vector<8x128xf32>
    %230 = arith.divf %228, %229 : vector<8x128xf32>
    %231 = vector.extract_strided_slice %218 {offsets = [0, 256], sizes = [8, 128], strides = [1, 1]} : vector<8x512xf32> to vector<8x128xf32>
    %232 = math.tanh %231 : vector<8x128xf32>
    %233 = vector.extract_strided_slice %218 {offsets = [0, 384], sizes = [8, 128], strides = [1, 1]} : vector<8x512xf32> to vector<8x128xf32>
    %234 = arith.negf %233 : vector<8x128xf32>
    %235 = math.exp %234 : vector<8x128xf32>
    %cst_111 = arith.constant 1.000000e+00 : f32
    %236 = vector.broadcast %cst_111 : f32 to vector<8x128xf32>
    %237 = arith.addf %236, %235 : vector<8x128xf32>
    %238 = arith.divf %236, %237 : vector<8x128xf32>
    %c0_112 = arith.constant 0 : index
    %c0_113 = arith.constant 0 : index
    %239 = vector.load %arg7[%c0_112, %c0_113] : memref<8x128xf32, #tpu.memory_space<vmem>>, vector<8x128xf32>
    %240 = arith.mulf %230, %239 : vector<8x128xf32>
    %241 = arith.mulf %224, %232 : vector<8x128xf32>
    %242 = arith.addf %240, %241 : vector<8x128xf32>
    %243 = math.tanh %242 : vector<8x128xf32>
    %244 = arith.mulf %238, %243 : vector<8x128xf32>
    %c0_114 = arith.constant 0 : index
    %c0_115 = arith.constant 0 : index
    %245 = vector.load %arg6[%c0_114, %c0_115] : memref<8x128xf32, #tpu.memory_space<vmem>>, vector<8x128xf32>
    tpu.vector_store %arg6[%c0_114, %c0_115], %244 {strides = array<i32>} : memref<8x128xf32, #tpu.memory_space<vmem>>, vector<8x128xf32>,
    %c0_116 = arith.constant 0 : index
    %c0_117 = arith.constant 0 : index
    %246 = vector.load %arg7[%c0_116, %c0_117] : memref<8x128xf32, #tpu.memory_space<vmem>>, vector<8x128xf32>
    tpu.vector_store %arg7[%c0_116, %c0_117], %242 {strides = array<i32>} : memref<8x128xf32, #tpu.memory_space<vmem>>, vector<8x128xf32>,
    %247 = arith.index_cast %c5_i32 : i32 to index
    %c0_118 = arith.constant 0 : index
    %c0_119 = arith.constant 0 : index
    %248 = vector.load %arg4[%247, %c0_118, %c0_119] : memref<8x8x128xf32, #tpu.memory_space<vmem>>, vector<1x8x128xf32>
    %249 = vector.shape_cast %248 : vector<1x8x128xf32> to vector<8x128xf32>
    %250 = vector.shape_cast %244 : vector<8x128xf32> to vector<1x8x128xf32>
    tpu.vector_store %arg4[%247, %c0_118, %c0_119], %250 {strides = array<i32>} : memref<8x8x128xf32, #tpu.memory_space<vmem>>, vector<1x8x128xf32>,
    %c6_i32 = arith.constant 6 : i32
    %c8_i32_120 = arith.constant 8 : i32
    %251 = arith.muli %c6_i32, %c8_i32_120 : i32
    %252 = tpu.assume_multiple %251, 8 : i32
    %253 = arith.index_cast %252 : i32 to index
    %c0_121 = arith.constant 0 : index
    %254 = vector.load %arg5[%253, %c0_121] : memref<64x512xf32, #tpu.memory_space<vmem>>, vector<8x512xf32>
    %c0_122 = arith.constant 0 : index
    %c0_123 = arith.constant 0 : index
    %255 = vector.load %arg6[%c0_122, %c0_123] : memref<8x128xf32, #tpu.memory_space<vmem>>, vector<8x128xf32>
    %c0_124 = arith.constant 0 : index
    %c0_125 = arith.constant 0 : index
    %256 = vector.load %arg2[%c0_124, %c0_125] : memref<128x512xf32, #tpu.memory_space<vmem>>, vector<128x512xf32>
    %cst_126 = arith.constant dense<0.000000e+00> : vector<8x512xf32>
    %257 = tpu.matmul %255, %256, %cst_126 {dimension_numbers = #tpu.dot_dimension_numbers<[1], [0], [0], [1], [0, 0, 1, 1], [], []>} : vector<8x128xf32>, vector<128x512xf32>, vector<8x512xf32> -> vector<8x512xf32>
    %258 = arith.addf %254, %257 : vector<8x512xf32>
    %259 = vector.extract_strided_slice %258 {offsets = [0, 0], sizes = [8, 128], strides = [1, 1]} : vector<8x512xf32> to vector<8x128xf32>
    %260 = arith.negf %259 : vector<8x128xf32>
    %261 = math.exp %260 : vector<8x128xf32>
    %cst_127 = arith.constant 1.000000e+00 : f32
    %262 = vector.broadcast %cst_127 : f32 to vector<8x128xf32>
    %263 = arith.addf %262, %261 : vector<8x128xf32>
    %264 = arith.divf %262, %263 : vector<8x128xf32>
    %265 = vector.extract_strided_slice %258 {offsets = [0, 128], sizes = [8, 128], strides = [1, 1]} : vector<8x512xf32> to vector<8x128xf32>
    %266 = arith.negf %265 : vector<8x128xf32>
    %267 = math.exp %266 : vector<8x128xf32>
    %cst_128 = arith.constant 1.000000e+00 : f32
    %268 = vector.broadcast %cst_128 : f32 to vector<8x128xf32>
    %269 = arith.addf %268, %267 : vector<8x128xf32>
    %270 = arith.divf %268, %269 : vector<8x128xf32>
    %271 = vector.extract_strided_slice %258 {offsets = [0, 256], sizes = [8, 128], strides = [1, 1]} : vector<8x512xf32> to vector<8x128xf32>
    %272 = math.tanh %271 : vector<8x128xf32>
    %273 = vector.extract_strided_slice %258 {offsets = [0, 384], sizes = [8, 128], strides = [1, 1]} : vector<8x512xf32> to vector<8x128xf32>
    %274 = arith.negf %273 : vector<8x128xf32>
    %275 = math.exp %274 : vector<8x128xf32>
    %cst_129 = arith.constant 1.000000e+00 : f32
    %276 = vector.broadcast %cst_129 : f32 to vector<8x128xf32>
    %277 = arith.addf %276, %275 : vector<8x128xf32>
    %278 = arith.divf %276, %277 : vector<8x128xf32>
    %c0_130 = arith.constant 0 : index
    %c0_131 = arith.constant 0 : index
    %279 = vector.load %arg7[%c0_130, %c0_131] : memref<8x128xf32, #tpu.memory_space<vmem>>, vector<8x128xf32>
    %280 = arith.mulf %270, %279 : vector<8x128xf32>
    %281 = arith.mulf %264, %272 : vector<8x128xf32>
    %282 = arith.addf %280, %281 : vector<8x128xf32>
    %283 = math.tanh %282 : vector<8x128xf32>
    %284 = arith.mulf %278, %283 : vector<8x128xf32>
    %c0_132 = arith.constant 0 : index
    %c0_133 = arith.constant 0 : index
    %285 = vector.load %arg6[%c0_132, %c0_133] : memref<8x128xf32, #tpu.memory_space<vmem>>, vector<8x128xf32>
    tpu.vector_store %arg6[%c0_132, %c0_133], %284 {strides = array<i32>} : memref<8x128xf32, #tpu.memory_space<vmem>>, vector<8x128xf32>,
    %c0_134 = arith.constant 0 : index
    %c0_135 = arith.constant 0 : index
    %286 = vector.load %arg7[%c0_134, %c0_135] : memref<8x128xf32, #tpu.memory_space<vmem>>, vector<8x128xf32>
    tpu.vector_store %arg7[%c0_134, %c0_135], %282 {strides = array<i32>} : memref<8x128xf32, #tpu.memory_space<vmem>>, vector<8x128xf32>,
    %287 = arith.index_cast %c6_i32 : i32 to index
    %c0_136 = arith.constant 0 : index
    %c0_137 = arith.constant 0 : index
    %288 = vector.load %arg4[%287, %c0_136, %c0_137] : memref<8x8x128xf32, #tpu.memory_space<vmem>>, vector<1x8x128xf32>
    %289 = vector.shape_cast %288 : vector<1x8x128xf32> to vector<8x128xf32>
    %290 = vector.shape_cast %284 : vector<8x128xf32> to vector<1x8x128xf32>
    tpu.vector_store %arg4[%287, %c0_136, %c0_137], %290 {strides = array<i32>} : memref<8x8x128xf32, #tpu.memory_space<vmem>>, vector<1x8x128xf32>,
    %c7_i32 = arith.constant 7 : i32
    %c8_i32_138 = arith.constant 8 : i32
    %291 = arith.muli %c7_i32, %c8_i32_138 : i32
    %292 = tpu.assume_multiple %291, 8 : i32
    %293 = arith.index_cast %292 : i32 to index
    %c0_139 = arith.constant 0 : index
    %294 = vector.load %arg5[%293, %c0_139] : memref<64x512xf32, #tpu.memory_space<vmem>>, vector<8x512xf32>
    %c0_140 = arith.constant 0 : index
    %c0_141 = arith.constant 0 : index
    %295 = vector.load %arg6[%c0_140, %c0_141] : memref<8x128xf32, #tpu.memory_space<vmem>>, vector<8x128xf32>
    %c0_142 = arith.constant 0 : index
    %c0_143 = arith.constant 0 : index
    %296 = vector.load %arg2[%c0_142, %c0_143] : memref<128x512xf32, #tpu.memory_space<vmem>>, vector<128x512xf32>
    %cst_144 = arith.constant dense<0.000000e+00> : vector<8x512xf32>
    %297 = tpu.matmul %295, %296, %cst_144 {dimension_numbers = #tpu.dot_dimension_numbers<[1], [0], [0], [1], [0, 0, 1, 1], [], []>} : vector<8x128xf32>, vector<128x512xf32>, vector<8x512xf32> -> vector<8x512xf32>
    %298 = arith.addf %294, %297 : vector<8x512xf32>
    %299 = vector.extract_strided_slice %298 {offsets = [0, 0], sizes = [8, 128], strides = [1, 1]} : vector<8x512xf32> to vector<8x128xf32>
    %300 = arith.negf %299 : vector<8x128xf32>
    %301 = math.exp %300 : vector<8x128xf32>
    %cst_145 = arith.constant 1.000000e+00 : f32
    %302 = vector.broadcast %cst_145 : f32 to vector<8x128xf32>
    %303 = arith.addf %302, %301 : vector<8x128xf32>
    %304 = arith.divf %302, %303 : vector<8x128xf32>
    %305 = vector.extract_strided_slice %298 {offsets = [0, 128], sizes = [8, 128], strides = [1, 1]} : vector<8x512xf32> to vector<8x128xf32>
    %306 = arith.negf %305 : vector<8x128xf32>
    %307 = math.exp %306 : vector<8x128xf32>
    %cst_146 = arith.constant 1.000000e+00 : f32
    %308 = vector.broadcast %cst_146 : f32 to vector<8x128xf32>
    %309 = arith.addf %308, %307 : vector<8x128xf32>
    %310 = arith.divf %308, %309 : vector<8x128xf32>
    %311 = vector.extract_strided_slice %298 {offsets = [0, 256], sizes = [8, 128], strides = [1, 1]} : vector<8x512xf32> to vector<8x128xf32>
    %312 = math.tanh %311 : vector<8x128xf32>
    %313 = vector.extract_strided_slice %298 {offsets = [0, 384], sizes = [8, 128], strides = [1, 1]} : vector<8x512xf32> to vector<8x128xf32>
    %314 = arith.negf %313 : vector<8x128xf32>
    %315 = math.exp %314 : vector<8x128xf32>
    %cst_147 = arith.constant 1.000000e+00 : f32
    %316 = vector.broadcast %cst_147 : f32 to vector<8x128xf32>
    %317 = arith.addf %316, %315 : vector<8x128xf32>
    %318 = arith.divf %316, %317 : vector<8x128xf32>
    %c0_148 = arith.constant 0 : index
    %c0_149 = arith.constant 0 : index
    %319 = vector.load %arg7[%c0_148, %c0_149] : memref<8x128xf32, #tpu.memory_space<vmem>>, vector<8x128xf32>
    %320 = arith.mulf %310, %319 : vector<8x128xf32>
    %321 = arith.mulf %304, %312 : vector<8x128xf32>
    %322 = arith.addf %320, %321 : vector<8x128xf32>
    %323 = math.tanh %322 : vector<8x128xf32>
    %324 = arith.mulf %318, %323 : vector<8x128xf32>
    %c0_150 = arith.constant 0 : index
    %c0_151 = arith.constant 0 : index
    %325 = vector.load %arg6[%c0_150, %c0_151] : memref<8x128xf32, #tpu.memory_space<vmem>>, vector<8x128xf32>
    tpu.vector_store %arg6[%c0_150, %c0_151], %324 {strides = array<i32>} : memref<8x128xf32, #tpu.memory_space<vmem>>, vector<8x128xf32>,
    %c0_152 = arith.constant 0 : index
    %c0_153 = arith.constant 0 : index
    %326 = vector.load %arg7[%c0_152, %c0_153] : memref<8x128xf32, #tpu.memory_space<vmem>>, vector<8x128xf32>
    tpu.vector_store %arg7[%c0_152, %c0_153], %322 {strides = array<i32>} : memref<8x128xf32, #tpu.memory_space<vmem>>, vector<8x128xf32>,
    %327 = arith.index_cast %c7_i32 : i32 to index
    %c0_154 = arith.constant 0 : index
    %c0_155 = arith.constant 0 : index
    %328 = vector.load %arg4[%327, %c0_154, %c0_155] : memref<8x8x128xf32, #tpu.memory_space<vmem>>, vector<1x8x128xf32>
    %329 = vector.shape_cast %328 : vector<1x8x128xf32> to vector<8x128xf32>
    %330 = vector.shape_cast %324 : vector<8x128xf32> to vector<1x8x128xf32>
    tpu.vector_store %arg4[%327, %c0_154, %c0_155], %330 {strides = array<i32>} : memref<8x8x128xf32, #tpu.memory_space<vmem>>, vector<1x8x128xf32>,
    %c8_i32_156 = arith.constant 8 : i32
    return
  }
}

</mosaic_0001>

<llo_original>
// kernel: tpu_custom_call.1
$region0: #{tpu_custom_call.1}
  #allocation0 [shape = 'u32[]', space=smem, size = 0x4, offset = 0x4, fixed_abs, tag = 'smem constant byte address 0x4 - core index']
  #allocation1 [shape = 'u32[144,128]{1,0:T(1,128)}', space=vmem, size = 0x12000, scoped, tag = 'internal scratch']
  #allocation2 [shape = 'f32[64,512]{1,0:T(8,128)}', space=vmem, size = 0x20000, scoped, tag = 'scratch operand']
  #allocation3 [shape = 'f32[8,128]{1,0:T(8,128)}', space=vmem, size = 0x1000, scoped, tag = 'scratch operand']
  #allocation4 [shape = 'f32[8,128]{1,0:T(8,128)}', space=vmem, size = 0x1000, scoped, tag = 'scratch operand']
  %s0 = inlined_call_operand.hbm [shape: f32[64,128], index: 0, kind: input, shape index: {}]
  %s1 = inlined_call_operand.hbm [shape: f32[128,512], index: 1, kind: input, shape index: {}]
  %s2 = inlined_call_operand.hbm [shape: f32[128,512], index: 2, kind: input, shape index: {}]
  %s3 = inlined_call_operand.vmem [shape: f32[1,512], index: 3, kind: input, shape index: {}]
  %s4 = inlined_call_operand.hbm [shape: f32[8,8,128], index: 4, kind: output, shape index: {}]
  %s5 = sld [smem:[#allocation0]]
  $region38: #{tpu_custom_call.1} parent=0
    _
  %s7 = ssub.s32 1, %s5
  %s8 = scalar_select 0, %s7, %s5
  $region1: #{tpu_custom_call.1} parent=0
    #allocation5 [shape = 'u8[32768]{0}', space=vmem, size = 0x8000, scoped, tag = 'input window, operand 0, single buffered']
    #allocation6 [shape = 's32[1]{0}', space=sflag, size = 0x4, scoped, tag = 'scoped memory for tpu_custom_call.1']
    #allocation7 [shape = 's32[1]{0}', space=sflag, size = 0x4, scoped, tag = 'scoped memory for tpu_custom_call.1']
    #allocation8 [shape = 'u8[262144]{0}', space=vmem, size = 0x40000, scoped, tag = 'input window, operand 1, single buffered']
    #allocation9 [shape = 's32[1]{0}', space=sflag, size = 0x4, scoped, tag = 'scoped memory for tpu_custom_call.1']
    #allocation10 [shape = 'u8[262144]{0}', space=vmem, size = 0x40000, scoped, tag = 'input window, operand 2, single buffered']
    #allocation11 [shape = 'u8[32768]{0}', space=vmem, size = 0x8000, scoped, tag = 'output window, operand 0, single buffered']
    %9 = vsyncpa [#allocation6], 0
    %10 = vsyncpa [#allocation9], 0
    %11 = vsyncpa [#allocation7], 0
    // Predicated region
    $region2: #{tpu_custom_call.1} parent=1 // pred_check
      _
    $region3: #{tpu_custom_call.1} parent=1 // pred_check_branch
      %13 = sbr.rel (0) target = $region5
    $region4: #{tpu_custom_call.1} parent=1 // pred_region
      %s15 = ssub.s32 1024, 1024
      %16 = vsyncadd [#allocation6], %s15
      %s17 = sshll.u32 [#allocation5], 4
      %s18 = int_to_ptr.vmem [resolvable:$true] %s17
      %23 = dma.hbm_to_vmem [thread:$0]  %s0, 1024, %s18, [#allocation6], 128, 128, 8
    $region5: #{tpu_custom_call.1} parent=1 // pred_fallthru
      _
    // Predicated region
    $region6: #{tpu_custom_call.1} parent=1 // pred_check
      _
    $region7: #{tpu_custom_call.1} parent=1 // pred_check_branch
      %25 = sbr.rel (0) target = $region9
    $region8: #{tpu_custom_call.1} parent=1 // pred_region
      %s27 = ssub.s32 8192, 8192
      %28 = vsyncadd [#allocation9], %s27
      %s29 = sshll.u32 [#allocation8], 4
      %s30 = int_to_ptr.vmem [resolvable:$true] %s29
      %35 = dma.hbm_to_vmem [thread:$0]  %s1, 8192, %s30, [#allocation9], 512, 512, 32
    $region9: #{tpu_custom_call.1} parent=1 // pred_fallthru
      _
    // Predicated region
    $region10: #{tpu_custom_call.1} parent=1 // pred_check
      _
    $region11: #{tpu_custom_call.1} parent=1 // pred_check_branch
      %37 = sbr.rel (0) target = $region13
    $region12: #{tpu_custom_call.1} parent=1 // pred_region
      %s39 = ssub.s32 8192, 8192
      %40 = vsyncadd [#allocation9], %s39
      %s41 = sshll.u32 [#allocation10], 4
      %s42 = int_to_ptr.vmem [resolvable:$true] %s41
      %47 = dma.hbm_to_vmem [thread:$0]  %s2, 8192, %s42, [#allocation9], 512, 512, 32
    $region13: #{tpu_custom_call.1} parent=1 // pred_fallthru
      _
    // Predicated region
    $region14: #{tpu_custom_call.1} parent=1 // pred_check
      _
    $region15: #{tpu_custom_call.1} parent=1 // pred_check_branch
      %49 = sbr.rel (0) target = $region17
    $region16: #{tpu_custom_call.1} parent=1 // pred_region
      _
    $region17: #{tpu_custom_call.1} parent=1 // pred_fallthru
      _
    // Predicated region
    $region18: #{tpu_custom_call.1} parent=1 // pred_check
      _
    $region19: #{tpu_custom_call.1} parent=1 // pred_check_branch
      %51 = sbr.rel (0) target = $region21
    $region20: #{tpu_custom_call.1} parent=1 // pred_region
      %52 = dma.done [#allocation6], 1024
    $region21: #{tpu_custom_call.1} parent=1 // pred_fallthru
      _
    // Predicated region
    $region22: #{tpu_custom_call.1} parent=1 // pred_check
      _
    $region23: #{tpu_custom_call.1} parent=1 // pred_check_branch
      %54 = sbr.rel (0) target = $region25
    $region24: #{tpu_custom_call.1} parent=1 // pred_region
      %55 = dma.done [#allocation9], 8192
    $region25: #{tpu_custom_call.1} parent=1 // pred_fallthru
      _
    // Predicated region
    $region26: #{tpu_custom_call.1} parent=1 // pred_check
      _
    $region27: #{tpu_custom_call.1} parent=1 // pred_check_branch
      %57 = sbr.rel (0) target = $region29
    $region28: #{tpu_custom_call.1} parent=1 // pred_region
      %58 = dma.done [#allocation9], 8192
    $region29: #{tpu_custom_call.1} parent=1 // pred_fallthru
      _
    %v59 = vld [vmem:[#allocation5] sm:$0xff]
    %v60 = vld [vmem:[#allocation5 + $0x8] sm:$0xff]
    %v61 = vld [vmem:[#allocation5 + $0x10] sm:$0xff]
    %v62 = vld [vmem:[#allocation5 + $0x18] sm:$0xff]
    %v63 = vld [vmem:[#allocation5 + $0x20] sm:$0xff]
    %v64 = vld [vmem:[#allocation5 + $0x28] sm:$0xff]
    %v65 = vld [vmem:[#allocation5 + $0x30] sm:$0xff]
    %v66 = vld [vmem:[#allocation5 + $0x38] sm:$0xff]
    %v67 = vld [vmem:[#allocation8] sm:$0xff]
    %v68 = vld [vmem:[#allocation8 + $0x8] sm:$0xff]
    %v69 = vld [vmem:[#allocation8 + $0x10] sm:$0xff]
    %v70 = vld [vmem:[#allocation8 + $0x18] sm:$0xff]
    %v71 = vld [vmem:[#allocation8 + $0x20] sm:$0xff]
    %v72 = vld [vmem:[#allocation8 + $0x28] sm:$0xff]
    %v73 = vld [vmem:[#allocation8 + $0x30] sm:$0xff]
    %v74 = vld [vmem:[#allocation8 + $0x38] sm:$0xff]
    %v75 = vld [vmem:[#allocation8 + $0x40] sm:$0xff]
    %v76 = vld [vmem:[#allocation8 + $0x48] sm:$0xff]
    %v77 = vld [vmem:[#allocation8 + $0x50] sm:$0xff]
    %v78 = vld [vmem:[#allocation8 + $0x58] sm:$0xff]
    %v79 = vld [vmem:[#allocation8 + $0x60] sm:$0xff]
    %v80 = vld [vmem:[#allocation8 + $0x68] sm:$0xff]
    %v81 = vld [vmem:[#allocation8 + $0x70] sm:$0xff]
    %v82 = vld [vmem:[#allocation8 + $0x78] sm:$0xff]
    %v83 = vld [vmem:[#allocation8 + $0x80] sm:$0xff]
    %v84 = vld [vmem:[#allocation8 + $0x88] sm:$0xff]
    %v85 = vld [vmem:[#allocation8 + $0x90] sm:$0xff]
    %v86 = vld [vmem:[#allocation8 + $0x98] sm:$0xff]
    %v87 = vld [vmem:[#allocation8 + $0xa0] sm:$0xff]
    %v88 = vld [vmem:[#allocation8 + $0xa8] sm:$0xff]
    %v89 = vld [vmem:[#allocation8 + $0xb0] sm:$0xff]
    %v90 = vld [vmem:[#allocation8 + $0xb8] sm:$0xff]
    %v91 = vld [vmem:[#allocation8 + $0xc0] sm:$0xff]
    %v92 = vld [vmem:[#allocation8 + $0xc8] sm:$0xff]
    %v93 = vld [vmem:[#allocation8 + $0xd0] sm:$0xff]
    %v94 = vld [vmem:[#allocation8 + $0xd8] sm:$0xff]
    %v95 = vld [vmem:[#allocation8 + $0xe0] sm:$0xff]
    %v96 = vld [vmem:[#allocation8 + $0xe8] sm:$0xff]
    %v97 = vld [vmem:[#allocation8 + $0xf0] sm:$0xff]
    %v98 = vld [vmem:[#allocation8 + $0xf8] sm:$0xff]
    %v99 = vld [vmem:[#allocation8 + $0x100] sm:$0xff]
    %v100 = vld [vmem:[#allocation8 + $0x108] sm:$0xff]
    %v101 = vld [vmem:[#allocation8 + $0x110] sm:$0xff]
    %v102 = vld [vmem:[#allocation8 + $0x118] sm:$0xff]
    %v103 = vld [vmem:[#allocation8 + $0x120] sm:$0xff]
    %v104 = vld [vmem:[#allocation8 + $0x128] sm:$0xff]
    %v105 = vld [vmem:[#allocation8 + $0x130] sm:$0xff]
    %v106 = vld [vmem:[#allocation8 + $0x138] sm:$0xff]
    %v107 = vld [vmem:[#allocation8 + $0x140] sm:$0xff]
    %v108 = vld [vmem:[#allocation8 + $0x148] sm:$0xff]
    %v109 = vld [vmem:[#allocation8 + $0x150] sm:$0xff]
    %v110 = vld [vmem:[#allocation8 + $0x158] sm:$0xff]
    %v111 = vld [vmem:[#allocation8 + $0x160] sm:$0xff]
    %v112 = vld [vmem:[#allocation8 + $0x168] sm:$0xff]
    %v113 = vld [vmem:[#allocation8 + $0x170] sm:$0xff]
    %v114 = vld [vmem:[#allocation8 + $0x178] sm:$0xff]
    %v115 = vld [vmem:[#allocation8 + $0x180] sm:$0xff]
    %v116 = vld [vmem:[#allocation8 + $0x188] sm:$0xff]
    %v117 = vld [vmem:[#allocation8 + $0x190] sm:$0xff]
    %v118 = vld [vmem:[#allocation8 + $0x198] sm:$0xff]
    %v119 = vld [vmem:[#allocation8 + $0x1a0] sm:$0xff]
    %v120 = vld [vmem:[#allocation8 + $0x1a8] sm:$0xff]
    %v121 = vld [vmem:[#allocation8 + $0x1b0] sm:$0xff]
    %v122 = vld [vmem:[#allocation8 + $0x1b8] sm:$0xff]
    %v123 = vld [vmem:[#allocation8 + $0x1c0] sm:$0xff]
    %v124 = vld [vmem:[#allocation8 + $0x1c8] sm:$0xff]
    %v125 = vld [vmem:[#allocation8 + $0x1d0] sm:$0xff]
    %v126 = vld [vmem:[#allocation8 + $0x1d8] sm:$0xff]
    %v127 = vld [vmem:[#allocation8 + $0x1e0] sm:$0xff]
    %v128 = vld [vmem:[#allocation8 + $0x1e8] sm:$0xff]
    %v129 = vld [vmem:[#allocation8 + $0x1f0] sm:$0xff]
    %v130 = vld [vmem:[#allocation8 + $0x1f8] sm:$0xff]
    %v131 = vld [vmem:[%s3] sm:$0xf]
    %v133 = vlaneseq
    %v134 = vshrl.u32 %v133, 7
    %v135 = vsub.s32 0, %v134
    %v136 = vrot.slane %v131, %v135
    %v137 = vlaneseq
    %v138 = vshrl.u32 %v137, 7
    %v139 = vsub.s32 1, %v138
    %v140 = vrot.slane %v131, %v139
    %v141 = vlaneseq
    %v142 = vshrl.u32 %v141, 7
    %v143 = vsub.s32 2, %v142
    %v144 = vrot.slane %v131, %v143
    %v145 = vlaneseq
    %v146 = vshrl.u32 %v145, 7
    %v147 = vsub.s32 3, %v146
    %v148 = vrot.slane %v131, %v147
    %153 = vmatprep.subr.mxu0 %v68
    %154 = vmatpush1.msra.mxu0 %v67
    %155 = vmatprep.subr.mxu0 %v72
    %156 = vmatpush1.msra.mxu0 %v71
    %157 = vmatprep.subr.mxu0 %v76
    %158 = vmatpush1.msra.mxu0 %v75
    %159 = vmatprep.subr.mxu0 %v80
    %160 = vmatpush1.msra.mxu0 %v79
    %161 = vmatprep.subr.mxu0 %v84
    %162 = vmatpush1.msra.mxu0 %v83
    %163 = vmatprep.subr.mxu0 %v88
    %164 = vmatpush1.msra.mxu0 %v87
    %165 = vmatprep.subr.mxu0 %v92
    %166 = vmatpush1.msra.mxu0 %v91
    %167 = vmatprep.subr.mxu0 %v96
    %168 = vmatpush1.msra.mxu0 %v95
    %169 = vmatprep.subr.mxu0 %v100
    %170 = vmatpush1.msra.mxu0 %v99
    %171 = vmatprep.subr.mxu0 %v104
    %172 = vmatpush1.msra.mxu0 %v103
    %173 = vmatprep.subr.mxu0 %v108
    %174 = vmatpush1.msra.mxu0 %v107
    %175 = vmatprep.subr.mxu0 %v112
    %176 = vmatpush1.msra.mxu0 %v111
    %177 = vmatprep.subr.mxu0 %v116
    %178 = vmatpush1.msra.mxu0 %v115
    %179 = vmatprep.subr.mxu0 %v120
    %180 = vmatpush1.msra.mxu0 %v119
    %181 = vmatprep.subr.mxu0 %v124
    %182 = vmatpush1.msra.mxu0 %v123
    %183 = vmatprep.subr.mxu0 %v128
    %184 = vmatpush1.msra.mxu0 %v127
    %185 = vmatprep.subr.mxu0 0.0
    %186 = vmatpush1.msra.mxu0 0.0
    %187 = vmatprep.subr.mxu0 0.0
    %188 = vmatpush1.msra.mxu0 0.0
    %189 = vmatprep.subr.mxu0 0.0
    %190 = vmatpush1.msra.mxu0 0.0
    %191 = vmatprep.subr.mxu0 0.0
    %192 = vmatpush1.msra.mxu0 0.0
    %193 = vmatprep.subr.mxu0 0.0
    %194 = vmatpush1.msra.mxu0 0.0
    %195 = vmatprep.subr.mxu0 0.0
    %196 = vmatpush1.msra.mxu0 0.0
    %197 = vmatprep.subr.mxu0 0.0
    %198 = vmatpush1.msra.mxu0 0.0
    %199 = vmatprep.subr.mxu0 0.0
    %200 = vmatpush1.msra.mxu0 0.0
    %201 = vmatprep.subr.mxu0 0.0
    %202 = vmatpush1.msra.mxu0 0.0
    %203 = vmatprep.subr.mxu0 0.0
    %204 = vmatpush1.msra.mxu0 0.0
    %205 = vmatprep.subr.mxu0 0.0
    %206 = vmatpush1.msra.mxu0 0.0
    %207 = vmatprep.subr.mxu0 0.0
    %208 = vmatpush1.msra.mxu0 0.0
    %209 = vmatprep.subr.mxu0 0.0
    %210 = vmatpush1.msra.mxu0 0.0
    %211 = vmatprep.subr.mxu0 0.0
    %212 = vmatpush1.msra.mxu0 0.0
    %213 = vmatprep.subr.mxu0 0.0
    %214 = vmatpush1.msra.mxu0 0.0
    %215 = vmatprep.subr.mxu0 0.0
    %216 = vmatpush1.msra.mxu0 0.0
    %217 = vmatprep.mubr.f32.mxu0 0.0
    %218 = vmatmul.mubr.f32.gmra.mrb[0].mxu0 %v59
    %v219 = vpop.f32.mrb[0].mxu0
    %v220 = vadd.f32 %v136, %v219
    %v221 = vpop.f32.mrb[0].mxu0
    %v222 = vadd.f32 %v140, %v221
    %223 = vmatprep.mubr.f32.mxu0 0.0
    %224 = vmatmul.mubr.f32.gmra.mrb[0].mxu0 %v60
    %v225 = vpop.f32.mrb[0].mxu0
    %v226 = vadd.f32 %v136, %v225
    %v227 = vpop.f32.mrb[0].mxu0
    %v228 = vadd.f32 %v140, %v227
    %229 = vmatprep.mubr.f32.mxu0 0.0
    %230 = vmatmul.mubr.f32.gmra.mrb[0].mxu0 %v61
    %v231 = vpop.f32.mrb[0].mxu0
    %v232 = vadd.f32 %v136, %v231
    %v233 = vpop.f32.mrb[0].mxu0
    %v234 = vadd.f32 %v140, %v233
    %235 = vmatprep.mubr.f32.mxu0 0.0
    %236 = vmatmul.mubr.f32.gmra.mrb[0].mxu0 %v62
    %v237 = vpop.f32.mrb[0].mxu0
    %v238 = vadd.f32 %v136, %v237
    %v239 = vpop.f32.mrb[0].mxu0
    %v240 = vadd.f32 %v140, %v239
    %241 = vmatprep.mubr.f32.mxu0 0.0
    %242 = vmatmul.mubr.f32.gmra.mrb[0].mxu0 %v63
    %v243 = vpop.f32.mrb[0].mxu0
    %v244 = vadd.f32 %v136, %v243
    %v245 = vpop.f32.mrb[0].mxu0
    %v246 = vadd.f32 %v140, %v245
    %247 = vmatprep.mubr.f32.mxu0 0.0
    %248 = vmatmul.mubr.f32.gmra.mrb[0].mxu0 %v64
    %v249 = vpop.f32.mrb[0].mxu0
    %v250 = vadd.f32 %v136, %v249
    %v251 = vpop.f32.mrb[0].mxu0
    %v252 = vadd.f32 %v140, %v251
    %253 = vmatprep.mubr.f32.mxu0 0.0
    %254 = vmatmul.mubr.f32.gmra.mrb[0].mxu0 %v65
    %v255 = vpop.f32.mrb[0].mxu0
    %v256 = vadd.f32 %v136, %v255
    %v257 = vpop.f32.mrb[0].mxu0
    %v258 = vadd.f32 %v140, %v257
    %259 = vmatprep.mubr.f32.mxu0 0.0
    %260 = vmatmul.mubr.f32.gmra.mrb[0].mxu0 %v66
    %v261 = vpop.f32.mrb[0].mxu0
    %v262 = vadd.f32 %v136, %v261
    %v263 = vpop.f32.mrb[0].mxu0
    %v264 = vadd.f32 %v140, %v263
    %265 = vdwg.mxu0
    %266 = vmatprep.subr.mxu0 %v70
    %267 = vmatpush1.msra.mxu0 %v69
    %268 = vmatprep.subr.mxu0 %v74
    %269 = vmatpush1.msra.mxu0 %v73
    %270 = vmatprep.subr.mxu0 %v78
    %271 = vmatpush1.msra.mxu0 %v77
    %272 = vmatprep.subr.mxu0 %v82
    %273 = vmatpush1.msra.mxu0 %v81
    %274 = vmatprep.subr.mxu0 %v86
    %275 = vmatpush1.msra.mxu0 %v85
    %276 = vmatprep.subr.mxu0 %v90
    %277 = vmatpush1.msra.mxu0 %v89
    %278 = vmatprep.subr.mxu0 %v94
    %279 = vmatpush1.msra.mxu0 %v93
    %280 = vmatprep.subr.mxu0 %v98
    %281 = vmatpush1.msra.mxu0 %v97
    %282 = vmatprep.subr.mxu0 %v102
    %283 = vmatpush1.msra.mxu0 %v101
    %284 = vmatprep.subr.mxu0 %v106
    %285 = vmatpush1.msra.mxu0 %v105
    %286 = vmatprep.subr.mxu0 %v110
    %287 = vmatpush1.msra.mxu0 %v109
    %288 = vmatprep.subr.mxu0 %v114
    %289 = vmatpush1.msra.mxu0 %v113
    %290 = vmatprep.subr.mxu0 %v118
    %291 = vmatpush1.msra.mxu0 %v117
    %292 = vmatprep.subr.mxu0 %v122
    %293 = vmatpush1.msra.mxu0 %v121
    %294 = vmatprep.subr.mxu0 %v126
    %295 = vmatpush1.msra.mxu0 %v125
    %296 = vmatprep.subr.mxu0 %v130
    %297 = vmatpush1.msra.mxu0 %v129
    %298 = vmatprep.subr.mxu0 0.0
    %299 = vmatpush1.msra.mxu0 0.0
    %300 = vmatprep.subr.mxu0 0.0
    %301 = vmatpush1.msra.mxu0 0.0
    %302 = vmatprep.subr.mxu0 0.0
    %303 = vmatpush1.msra.mxu0 0.0
    %304 = vmatprep.subr.mxu0 0.0
    %305 = vmatpush1.msra.mxu0 0.0
    %306 = vmatprep.subr.mxu0 0.0
    %307 = vmatpush1.msra.mxu0 0.0
    %308 = vmatprep.subr.mxu0 0.0
    %309 = vmatpush1.msra.mxu0 0.0
    %310 = vmatprep.subr.mxu0 0.0
    %311 = vmatpush1.msra.mxu0 0.0
    %312 = vmatprep.subr.mxu0 0.0
    %313 = vmatpush1.msra.mxu0 0.0
    %314 = vmatprep.subr.mxu0 0.0
    %315 = vmatpush1.msra.mxu0 0.0
    %316 = vmatprep.subr.mxu0 0.0
    %317 = vmatpush1.msra.mxu0 0.0
    %318 = vmatprep.subr.mxu0 0.0
    %319 = vmatpush1.msra.mxu0 0.0
    %320 = vmatprep.subr.mxu0 0.0
    %321 = vmatpush1.msra.mxu0 0.0
    %322 = vmatprep.subr.mxu0 0.0
    %323 = vmatpush1.msra.mxu0 0.0
    %324 = vmatprep.subr.mxu0 0.0
    %325 = vmatpush1.msra.mxu0 0.0
    %326 = vmatprep.subr.mxu0 0.0
    %327 = vmatpush1.msra.mxu0 0.0
    %328 = vmatprep.subr.mxu0 0.0
    %329 = vmatpush1.msra.mxu0 0.0
    %330 = vmatprep.mubr.f32.mxu0 0.0
    %331 = vmatmul.mubr.f32.gmra.mrb[0].mxu0 %v59
    %v332 = vpop.f32.mrb[0].mxu0
    %v333 = vadd.f32 %v144, %v332
    %v334 = vpop.f32.mrb[0].mxu0
    %v335 = vadd.f32 %v148, %v334
    %336 = vmatprep.mubr.f32.mxu0 0.0
    %337 = vmatmul.mubr.f32.gmra.mrb[0].mxu0 %v60
    %v338 = vpop.f32.mrb[0].mxu0
    %v339 = vadd.f32 %v144, %v338
    %v340 = vpop.f32.mrb[0].mxu0
    %v341 = vadd.f32 %v148, %v340
    %342 = vmatprep.mubr.f32.mxu0 0.0
    %343 = vmatmul.mubr.f32.gmra.mrb[0].mxu0 %v61
    %v344 = vpop.f32.mrb[0].mxu0
    %v345 = vadd.f32 %v144, %v344
    %v346 = vpop.f32.mrb[0].mxu0
    %v347 = vadd.f32 %v148, %v346
    %348 = vmatprep.mubr.f32.mxu0 0.0
    %349 = vmatmul.mubr.f32.gmra.mrb[0].mxu0 %v62
    %v350 = vpop.f32.mrb[0].mxu0
    %v351 = vadd.f32 %v144, %v350
    %v352 = vpop.f32.mrb[0].mxu0
    %v353 = vadd.f32 %v148, %v352
    %354 = vmatprep.mubr.f32.mxu0 0.0
    %355 = vmatmul.mubr.f32.gmra.mrb[0].mxu0 %v63
    %v356 = vpop.f32.mrb[0].mxu0
    %v357 = vadd.f32 %v144, %v356
    %v358 = vpop.f32.mrb[0].mxu0
    %v359 = vadd.f32 %v148, %v358
    %360 = vmatprep.mubr.f32.mxu0 0.0
    %361 = vmatmul.mubr.f32.gmra.mrb[0].mxu0 %v64
    %v362 = vpop.f32.mrb[0].mxu0
    %v363 = vadd.f32 %v144, %v362
    %v364 = vpop.f32.mrb[0].mxu0
    %v365 = vadd.f32 %v148, %v364
    %366 = vmatprep.mubr.f32.mxu0 0.0
    %367 = vmatmul.mubr.f32.gmra.mrb[0].mxu0 %v65
    %v368 = vpop.f32.mrb[0].mxu0
    %v369 = vadd.f32 %v144, %v368
    %v370 = vpop.f32.mrb[0].mxu0
    %v371 = vadd.f32 %v148, %v370
    %372 = vmatprep.mubr.f32.mxu0 0.0
    %373 = vmatmul.mubr.f32.gmra.mrb[0].mxu0 %v66
    %v374 = vpop.f32.mrb[0].mxu0
    %v375 = vadd.f32 %v144, %v374
    %v376 = vpop.f32.mrb[0].mxu0
    %v377 = vadd.f32 %v148, %v376
    %378 = vdwg.mxu0
    %379 = vst [vmem:[#allocation2] sm:$0xff] %v220
    %380 = vst [vmem:[#allocation2 + $0x8] sm:$0xff] %v222
    %381 = vst [vmem:[#allocation2 + $0x10] sm:$0xff] %v333
    %382 = vst [vmem:[#allocation2 + $0x18] sm:$0xff] %v335
    %383 = vst [vmem:[#allocation2 + $0x20] sm:$0xff] %v226
    %384 = vst [vmem:[#allocation2 + $0x28] sm:$0xff] %v228
    %385 = vst [vmem:[#allocation2 + $0x30] sm:$0xff] %v339
    %386 = vst [vmem:[#allocation2 + $0x38] sm:$0xff] %v341
    %387 = vst [vmem:[#allocation2 + $0x40] sm:$0xff] %v232
    %388 = vst [vmem:[#allocation2 + $0x48] sm:$0xff] %v234
    %389 = vst [vmem:[#allocation2 + $0x50] sm:$0xff] %v345
    %390 = vst [vmem:[#allocation2 + $0x58] sm:$0xff] %v347
    %391 = vst [vmem:[#allocation2 + $0x60] sm:$0xff] %v238
    %392 = vst [vmem:[#allocation2 + $0x68] sm:$0xff] %v240
    %393 = vst [vmem:[#allocation2 + $0x70] sm:$0xff] %v351
    %394 = vst [vmem:[#allocation2 + $0x78] sm:$0xff] %v353
    %395 = vst [vmem:[#allocation2 + $0x80] sm:$0xff] %v244
    %396 = vst [vmem:[#allocation2 + $0x88] sm:$0xff] %v246
    %397 = vst [vmem:[#allocation2 + $0x90] sm:$0xff] %v357
    %398 = vst [vmem:[#allocation2 + $0x98] sm:$0xff] %v359
    %399 = vst [vmem:[#allocation2 + $0xa0] sm:$0xff] %v250
    %400 = vst [vmem:[#allocation2 + $0xa8] sm:$0xff] %v252
    %401 = vst [vmem:[#allocation2 + $0xb0] sm:$0xff] %v363
    %402 = vst [vmem:[#allocation2 + $0xb8] sm:$0xff] %v365
    %403 = vst [vmem:[#allocation2 + $0xc0] sm:$0xff] %v256
    %404 = vst [vmem:[#allocation2 + $0xc8] sm:$0xff] %v258
    %405 = vst [vmem:[#allocation2 + $0xd0] sm:$0xff] %v369
    %406 = vst [vmem:[#allocation2 + $0xd8] sm:$0xff] %v371
    %407 = vst [vmem:[#allocation2 + $0xe0] sm:$0xff] %v262
    %408 = vst [vmem:[#allocation2 + $0xe8] sm:$0xff] %v264
    %409 = vst [vmem:[#allocation2 + $0xf0] sm:$0xff] %v375
    %410 = vst [vmem:[#allocation2 + $0xf8] sm:$0xff] %v377
    %411 = vst [vmem:[#allocation3] sm:$0xff] 0.0
    %412 = vst [vmem:[#allocation4] sm:$0xff] 0.0
    %s413 = smul.u32 0, 4
    %s414 = smul.addr %s413, 8
    %s415 = scalar_lea.vmem [#allocation2], %s414
    %v416 = vld [vmem:[%s415] sm:$0xff]
    %v417 = vld [vmem:[%s415 + $0x8] sm:$0xff]
    %v418 = vld [vmem:[%s415 + $0x10] sm:$0xff]
    %v419 = vld [vmem:[%s415 + $0x18] sm:$0xff]
    %v420 = vld [vmem:[#allocation3] sm:$0xff]
    %v421 = vld [vmem:[#allocation10] sm:$0xff]
    %v422 = vld [vmem:[#allocation10 + $0x8] sm:$0xff]
    %v423 = vld [vmem:[#allocation10 + $0x10] sm:$0xff]
    %v424 = vld [vmem:[#allocation10 + $0x18] sm:$0xff]
    %v425 = vld [vmem:[#allocation10 + $0x20] sm:$0xff]
    %v426 = vld [vmem:[#allocation10 + $0x28] sm:$0xff]
    %v427 = vld [vmem:[#allocation10 + $0x30] sm:$0xff]
    %v428 = vld [vmem:[#allocation10 + $0x38] sm:$0xff]
    %v429 = vld [vmem:[#allocation10 + $0x40] sm:$0xff]
    %v430 = vld [vmem:[#allocation10 + $0x48] sm:$0xff]
    %v431 = vld [vmem:[#allocation10 + $0x50] sm:$0xff]
    %v432 = vld [vmem:[#allocation10 + $0x58] sm:$0xff]
    %v433 = vld [vmem:[#allocation10 + $0x60] sm:$0xff]
    %v434 = vld [vmem:[#allocation10 + $0x68] sm:$0xff]
    %v435 = vld [vmem:[#allocation10 + $0x70] sm:$0xff]
    %v436 = vld [vmem:[#allocation10 + $0x78] sm:$0xff]
    %v437 = vld [vmem:[#allocation10 + $0x80] sm:$0xff]
    %v438 = vld [vmem:[#allocation10 + $0x88] sm:$0xff]
    %v439 = vld [vmem:[#allocation10 + $0x90] sm:$0xff]
    %v440 = vld [vmem:[#allocation10 + $0x98] sm:$0xff]
    %v441 = vld [vmem:[#allocation10 + $0xa0] sm:$0xff]
    %v442 = vld [vmem:[#allocation10 + $0xa8] sm:$0xff]
    %v443 = vld [vmem:[#allocation10 + $0xb0] sm:$0xff]
    %v444 = vld [vmem:[#allocation10 + $0xb8] sm:$0xff]
    %v445 = vld [vmem:[#allocation10 + $0xc0] sm:$0xff]
    %v446 = vld [vmem:[#allocation10 + $0xc8] sm:$0xff]
    %v447 = vld [vmem:[#allocation10 + $0xd0] sm:$0xff]
    %v448 = vld [vmem:[#allocation10 + $0xd8] sm:$0xff]
    %v449 = vld [vmem:[#allocation10 + $0xe0] sm:$0xff]
    %v450 = vld [vmem:[#allocation10 + $0xe8] sm:$0xff]
    %v451 = vld [vmem:[#allocation10 + $0xf0] sm:$0xff]
    %v452 = vld [vmem:[#allocation10 + $0xf8] sm:$0xff]
    %v453 = vld [vmem:[#allocation10 + $0x100] sm:$0xff]
    %v454 = vld [vmem:[#allocation10 + $0x108] sm:$0xff]
    %v455 = vld [vmem:[#allocation10 + $0x110] sm:$0xff]
    %v456 = vld [vmem:[#allocation10 + $0x118] sm:$0xff]
    %v457 = vld [vmem:[#allocation10 + $0x120] sm:$0xff]
    %v458 = vld [vmem:[#allocation10 + $0x128] sm:$0xff]
    %v459 = vld [vmem:[#allocation10 + $0x130] sm:$0xff]
    %v460 = vld [vmem:[#allocation10 + $0x138] sm:$0xff]
    %v461 = vld [vmem:[#allocation10 + $0x140] sm:$0xff]
    %v462 = vld [vmem:[#allocation10 + $0x148] sm:$0xff]
    %v463 = vld [vmem:[#allocation10 + $0x150] sm:$0xff]
    %v464 = vld [vmem:[#allocation10 + $0x158] sm:$0xff]
    %v465 = vld [vmem:[#allocation10 + $0x160] sm:$0xff]
    %v466 = vld [vmem:[#allocation10 + $0x168] sm:$0xff]
    %v467 = vld [vmem:[#allocation10 + $0x170] sm:$0xff]
    %v468 = vld [vmem:[#allocation10 + $0x178] sm:$0xff]
    %v469 = vld [vmem:[#allocation10 + $0x180] sm:$0xff]
    %v470 = vld [vmem:[#allocation10 + $0x188] sm:$0xff]
    %v471 = vld [vmem:[#allocation10 + $0x190] sm:$0xff]
    %v472 = vld [vmem:[#allocation10 + $0x198] sm:$0xff]
    %v473 = vld [vmem:[#allocation10 + $0x1a0] sm:$0xff]
    %v474 = vld [vmem:[#allocation10 + $0x1a8] sm:$0xff]
    %v475 = vld [vmem:[#allocation10 + $0x1b0] sm:$0xff]
    %v476 = vld [vmem:[#allocation10 + $0x1b8] sm:$0xff]
    %v477 = vld [vmem:[#allocation10 + $0x1c0] sm:$0xff]
    %v478 = vld [vmem:[#allocation10 + $0x1c8] sm:$0xff]
    %v479 = vld [vmem:[#allocation10 + $0x1d0] sm:$0xff]
    %v480 = vld [vmem:[#allocation10 + $0x1d8] sm:$0xff]
    %v481 = vld [vmem:[#allocation10 + $0x1e0] sm:$0xff]
    %v482 = vld [vmem:[#allocation10 + $0x1e8] sm:$0xff]
    %v483 = vld [vmem:[#allocation10 + $0x1f0] sm:$0xff]
    %v484 = vld [vmem:[#allocation10 + $0x1f8] sm:$0xff]
    %485 = vmatprep.subr.mxu0 %v422
    %486 = vmatpush1.msra.mxu0 %v421
    %487 = vmatprep.subr.mxu0 %v426
    %488 = vmatpush1.msra.mxu0 %v425
    %489 = vmatprep.subr.mxu0 %v430
    %490 = vmatpush1.msra.mxu0 %v429
    %491 = vmatprep.subr.mxu0 %v434
    %492 = vmatpush1.msra.mxu0 %v433
    %493 = vmatprep.subr.mxu0 %v438
    %494 = vmatpush1.msra.mxu0 %v437
    %495 = vmatprep.subr.mxu0 %v442
    %496 = vmatpush1.msra.mxu0 %v441
    %497 = vmatprep.subr.mxu0 %v446
    %498 = vmatpush1.msra.mxu0 %v445
    %499 = vmatprep.subr.mxu0 %v450
    %500 = vmatpush1.msra.mxu0 %v449
    %501 = vmatprep.subr.mxu0 %v454
    %502 = vmatpush1.msra.mxu0 %v453
    %503 = vmatprep.subr.mxu0 %v458
    %504 = vmatpush1.msra.mxu0 %v457
    %505 = vmatprep.subr.mxu0 %v462
    %506 = vmatpush1.msra.mxu0 %v461
    %507 = vmatprep.subr.mxu0 %v466
    %508 = vmatpush1.msra.mxu0 %v465
    %509 = vmatprep.subr.mxu0 %v470
    %510 = vmatpush1.msra.mxu0 %v469
    %511 = vmatprep.subr.mxu0 %v474
    %512 = vmatpush1.msra.mxu0 %v473
    %513 = vmatprep.subr.mxu0 %v478
    %514 = vmatpush1.msra.mxu0 %v477
    %515 = vmatprep.subr.mxu0 %v482
    %516 = vmatpush1.msra.mxu0 %v481
    %517 = vmatprep.subr.mxu0 0.0
    %518 = vmatpush1.msra.mxu0 0.0
    %519 = vmatprep.subr.mxu0 0.0
    %520 = vmatpush1.msra.mxu0 0.0
    %521 = vmatprep.subr.mxu0 0.0
    %522 = vmatpush1.msra.mxu0 0.0
    %523 = vmatprep.subr.mxu0 0.0
    %524 = vmatpush1.msra.mxu0 0.0
    %525 = vmatprep.subr.mxu0 0.0
    %526 = vmatpush1.msra.mxu0 0.0
    %527 = vmatprep.subr.mxu0 0.0
    %528 = vmatpush1.msra.mxu0 0.0
    %529 = vmatprep.subr.mxu0 0.0
    %530 = vmatpush1.msra.mxu0 0.0
    %531 = vmatprep.subr.mxu0 0.0
    %532 = vmatpush1.msra.mxu0 0.0
    %533 = vmatprep.subr.mxu0 0.0
    %534 = vmatpush1.msra.mxu0 0.0
    %535 = vmatprep.subr.mxu0 0.0
    %536 = vmatpush1.msra.mxu0 0.0
    %537 = vmatprep.subr.mxu0 0.0
    %538 = vmatpush1.msra.mxu0 0.0
    %539 = vmatprep.subr.mxu0 0.0
    %540 = vmatpush1.msra.mxu0 0.0
    %541 = vmatprep.subr.mxu0 0.0
    %542 = vmatpush1.msra.mxu0 0.0
    %543 = vmatprep.subr.mxu0 0.0
    %544 = vmatpush1.msra.mxu0 0.0
    %545 = vmatprep.subr.mxu0 0.0
    %546 = vmatpush1.msra.mxu0 0.0
    %547 = vmatprep.subr.mxu0 0.0
    %548 = vmatpush1.msra.mxu0 0.0
    %549 = vmatprep.mubr.f32.mxu0 0.0
    %550 = vmatmul.mubr.f32.gmra.mrb[0].mxu0 %v420
    %v551 = vpop.f32.mrb[0].mxu0
    %v552 = vadd.f32 0.0, %v551
    %v553 = vpop.f32.mrb[0].mxu0
    %v554 = vadd.f32 0.0, %v553
    %555 = vdwg.mxu0
    %556 = vmatprep.subr.mxu0 %v424
    %557 = vmatpush1.msra.mxu0 %v423
    %558 = vmatprep.subr.mxu0 %v428
    %559 = vmatpush1.msra.mxu0 %v427
    %560 = vmatprep.subr.mxu0 %v432
    %561 = vmatpush1.msra.mxu0 %v431
    %562 = vmatprep.subr.mxu0 %v436
    %563 = vmatpush1.msra.mxu0 %v435
    %564 = vmatprep.subr.mxu0 %v440
    %565 = vmatpush1.msra.mxu0 %v439
    %566 = vmatprep.subr.mxu0 %v444
    %567 = vmatpush1.msra.mxu0 %v443
    %568 = vmatprep.subr.mxu0 %v448
    %569 = vmatpush1.msra.mxu0 %v447
    %570 = vmatprep.subr.mxu0 %v452
    %571 = vmatpush1.msra.mxu0 %v451
    %572 = vmatprep.subr.mxu0 %v456
    %573 = vmatpush1.msra.mxu0 %v455
    %574 = vmatprep.subr.mxu0 %v460
    %575 = vmatpush1.msra.mxu0 %v459
    %576 = vmatprep.subr.mxu0 %v464
    %577 = vmatpush1.msra.mxu0 %v463
    %578 = vmatprep.subr.mxu0 %v468
    %579 = vmatpush1.msra.mxu0 %v467
    %580 = vmatprep.subr.mxu0 %v472
    %581 = vmatpush1.msra.mxu0 %v471
    %582 = vmatprep.subr.mxu0 %v476
    %583 = vmatpush1.msra.mxu0 %v475
    %584 = vmatprep.subr.mxu0 %v480
    %585 = vmatpush1.msra.mxu0 %v479
    %586 = vmatprep.subr.mxu0 %v484
    %587 = vmatpush1.msra.mxu0 %v483
    %588 = vmatprep.subr.mxu0 0.0
    %589 = vmatpush1.msra.mxu0 0.0
    %590 = vmatprep.subr.mxu0 0.0
    %591 = vmatpush1.msra.mxu0 0.0
    %592 = vmatprep.subr.mxu0 0.0
    %593 = vmatpush1.msra.mxu0 0.0
    %594 = vmatprep.subr.mxu0 0.0
    %595 = vmatpush1.msra.mxu0 0.0
    %596 = vmatprep.subr.mxu0 0.0
    %597 = vmatpush1.msra.mxu0 0.0
    %598 = vmatprep.subr.mxu0 0.0
    %599 = vmatpush1.msra.mxu0 0.0
    %600 = vmatprep.subr.mxu0 0.0
    %601 = vmatpush1.msra.mxu0 0.0
    %602 = vmatprep.subr.mxu0 0.0
    %603 = vmatpush1.msra.mxu0 0.0
    %604 = vmatprep.subr.mxu0 0.0
    %605 = vmatpush1.msra.mxu0 0.0
    %606 = vmatprep.subr.mxu0 0.0
    %607 = vmatpush1.msra.mxu0 0.0
    %608 = vmatprep.subr.mxu0 0.0
    %609 = vmatpush1.msra.mxu0 0.0
    %610 = vmatprep.subr.mxu0 0.0
    %611 = vmatpush1.msra.mxu0 0.0
    %612 = vmatprep.subr.mxu0 0.0
    %613 = vmatpush1.msra.mxu0 0.0
    %614 = vmatprep.subr.mxu0 0.0
    %615 = vmatpush1.msra.mxu0 0.0
    %616 = vmatprep.subr.mxu0 0.0
    %617 = vmatpush1.msra.mxu0 0.0
    %618 = vmatprep.subr.mxu0 0.0
    %619 = vmatpush1.msra.mxu0 0.0
    %620 = vmatprep.mubr.f32.mxu0 0.0
    %621 = vmatmul.mubr.f32.gmra.mrb[0].mxu0 %v420
    %v622 = vpop.f32.mrb[0].mxu0
    %v623 = vadd.f32 0.0, %v622
    %v624 = vpop.f32.mrb[0].mxu0
    %v625 = vadd.f32 0.0, %v624
    %626 = vdwg.mxu0
    %v627 = vadd.f32 %v416, %v552
    %v628 = vadd.f32 %v417, %v554
    %v629 = vadd.f32 %v418, %v623
    %v630 = vadd.f32 %v419, %v625
    %v631 = vxor.u32 %v627, 2147483648
    %v632 = vmul.f32 %v631, 1.442695
    %v633 = vpow.pop %v632
    %v634 = vadd.f32 %v633, 1.0
    %v635 = vrcp.pop %v634
    %v636 = vmul.f32 1.0, %v635
    %v637 = vxor.u32 %v628, 2147483648
    %v638 = vmul.f32 %v637, 1.442695
    %v639 = vpow.pop %v638
    %v640 = vadd.f32 %v639, 1.0
    %v641 = vrcp.pop %v640
    %v642 = vmul.f32 1.0, %v641
    %v643 = vtanh.pop %v629
    %v644 = vxor.u32 %v630, 2147483648
    %v645 = vmul.f32 %v644, 1.442695
    %v646 = vpow.pop %v645
    %v647 = vadd.f32 %v646, 1.0
    %v648 = vrcp.pop %v647
    %v649 = vmul.f32 1.0, %v648
    %v650 = vld [vmem:[#allocation4] sm:$0xff]
    %v651 = vmul.f32 %v642, %v650
    %v652 = vmul.f32 %v636, %v643
    %v653 = vadd.f32 %v651, %v652
    %v654 = vtanh.pop %v653
    %v655 = vmul.f32 %v649, %v654
    %656 = vst [vmem:[#allocation3] sm:$0xff] %v655
    %657 = vst [vmem:[#allocation4] sm:$0xff] %v653
    %658 = vst [vmem:[#allocation11] sm:$0xff] %v655
    %s659 = smul.u32 1, 4
    %s660 = smul.addr %s659, 8
    %s661 = scalar_lea.vmem [#allocation2], %s660
    %v662 = vld [vmem:[%s661] sm:$0xff]
    %v663 = vld [vmem:[%s661 + $0x8] sm:$0xff]
    %v664 = vld [vmem:[%s661 + $0x10] sm:$0xff]
    %v665 = vld [vmem:[%s661 + $0x18] sm:$0xff]
    %v666 = vld [vmem:[#allocation3] sm:$0xff]
    %v667 = vld [vmem:[#allocation10] sm:$0xff]
    %v668 = vld [vmem:[#allocation10 + $0x8] sm:$0xff]
    %v669 = vld [vmem:[#allocation10 + $0x10] sm:$0xff]
    %v670 = vld [vmem:[#allocation10 + $0x18] sm:$0xff]
    %v671 = vld [vmem:[#allocation10 + $0x20] sm:$0xff]
    %v672 = vld [vmem:[#allocation10 + $0x28] sm:$0xff]
    %v673 = vld [vmem:[#allocation10 + $0x30] sm:$0xff]
    %v674 = vld [vmem:[#allocation10 + $0x38] sm:$0xff]
    %v675 = vld [vmem:[#allocation10 + $0x40] sm:$0xff]
    %v676 = vld [vmem:[#allocation10 + $0x48] sm:$0xff]
    %v677 = vld [vmem:[#allocation10 + $0x50] sm:$0xff]
    %v678 = vld [vmem:[#allocation10 + $0x58] sm:$0xff]
    %v679 = vld [vmem:[#allocation10 + $0x60] sm:$0xff]
    %v680 = vld [vmem:[#allocation10 + $0x68] sm:$0xff]
    %v681 = vld [vmem:[#allocation10 + $0x70] sm:$0xff]
    %v682 = vld [vmem:[#allocation10 + $0x78] sm:$0xff]
    %v683 = vld [vmem:[#allocation10 + $0x80] sm:$0xff]
    %v684 = vld [vmem:[#allocation10 + $0x88] sm:$0xff]
    %v685 = vld [vmem:[#allocation10 + $0x90] sm:$0xff]
    %v686 = vld [vmem:[#allocation10 + $0x98] sm:$0xff]
    %v687 = vld [vmem:[#allocation10 + $0xa0] sm:$0xff]
    %v688 = vld [vmem:[#allocation10 + $0xa8] sm:$0xff]
    %v689 = vld [vmem:[#allocation10 + $0xb0] sm:$0xff]
    %v690 = vld [vmem:[#allocation10 + $0xb8] sm:$0xff]
    %v691 = vld [vmem:[#allocation10 + $0xc0] sm:$0xff]
    %v692 = vld [vmem:[#allocation10 + $0xc8] sm:$0xff]
    %v693 = vld [vmem:[#allocation10 + $0xd0] sm:$0xff]
    %v694 = vld [vmem:[#allocation10 + $0xd8] sm:$0xff]
    %v695 = vld [vmem:[#allocation10 + $0xe0] sm:$0xff]
    %v696 = vld [vmem:[#allocation10 + $0xe8] sm:$0xff]
    %v697 = vld [vmem:[#allocation10 + $0xf0] sm:$0xff]
    %v698 = vld [vmem:[#allocation10 + $0xf8] sm:$0xff]
    %v699 = vld [vmem:[#allocation10 + $0x100] sm:$0xff]
    %v700 = vld [vmem:[#allocation10 + $0x108] sm:$0xff]
    %v701 = vld [vmem:[#allocation10 + $0x110] sm:$0xff]
    %v702 = vld [vmem:[#allocation10 + $0x118] sm:$0xff]
    %v703 = vld [vmem:[#allocation10 + $0x120] sm:$0xff]
    %v704 = vld [vmem:[#allocation10 + $0x128] sm:$0xff]
    %v705 = vld [vmem:[#allocation10 + $0x130] sm:$0xff]
    %v706 = vld [vmem:[#allocation10 + $0x138] sm:$0xff]
    %v707 = vld [vmem:[#allocation10 + $0x140] sm:$0xff]
    %v708 = vld [vmem:[#allocation10 + $0x148] sm:$0xff]
    %v709 = vld [vmem:[#allocation10 + $0x150] sm:$0xff]
    %v710 = vld [vmem:[#allocation10 + $0x158] sm:$0xff]
    %v711 = vld [vmem:[#allocation10 + $0x160] sm:$0xff]
    %v712 = vld [vmem:[#allocation10 + $0x168] sm:$0xff]
    %v713 = vld [vmem:[#allocation10 + $0x170] sm:$0xff]
    %v714 = vld [vmem:[#allocation10 + $0x178] sm:$0xff]
    %v715 = vld [vmem:[#allocation10 + $0x180] sm:$0xff]
    %v716 = vld [vmem:[#allocation10 + $0x188] sm:$0xff]
    %v717 = vld [vmem:[#allocation10 + $0x190] sm:$0xff]
    %v718 = vld [vmem:[#allocation10 + $0x198] sm:$0xff]
    %v719 = vld [vmem:[#allocation10 + $0x1a0] sm:$0xff]
    %v720 = vld [vmem:[#allocation10 + $0x1a8] sm:$0xff]
    %v721 = vld [vmem:[#allocation10 + $0x1b0] sm:$0xff]
    %v722 = vld [vmem:[#allocation10 + $0x1b8] sm:$0xff]
    %v723 = vld [vmem:[#allocation10 + $0x1c0] sm:$0xff]
    %v724 = vld [vmem:[#allocation10 + $0x1c8] sm:$0xff]
    %v725 = vld [vmem:[#allocation10 + $0x1d0] sm:$0xff]
    %v726 = vld [vmem:[#allocation10 + $0x1d8] sm:$0xff]
    %v727 = vld [vmem:[#allocation10 + $0x1e0] sm:$0xff]
    %v728 = vld [vmem:[#allocation10 + $0x1e8] sm:$0xff]
    %v729 = vld [vmem:[#allocation10 + $0x1f0] sm:$0xff]
    %v730 = vld [vmem:[#allocation10 + $0x1f8] sm:$0xff]
    %731 = vmatprep.subr.mxu0 %v668
    %732 = vmatpush1.msra.mxu0 %v667
    %733 = vmatprep.subr.mxu0 %v672
    %734 = vmatpush1.msra.mxu0 %v671
    %735 = vmatprep.subr.mxu0 %v676
    %736 = vmatpush1.msra.mxu0 %v675
    %737 = vmatprep.subr.mxu0 %v680
    %738 = vmatpush1.msra.mxu0 %v679
    %739 = vmatprep.subr.mxu0 %v684
    %740 = vmatpush1.msra.mxu0 %v683
    %741 = vmatprep.subr.mxu0 %v688
    %742 = vmatpush1.msra.mxu0 %v687
    %743 = vmatprep.subr.mxu0 %v692
    %744 = vmatpush1.msra.mxu0 %v691
    %745 = vmatprep.subr.mxu0 %v696
    %746 = vmatpush1.msra.mxu0 %v695
    %747 = vmatprep.subr.mxu0 %v700
    %748 = vmatpush1.msra.mxu0 %v699
    %749 = vmatprep.subr.mxu0 %v704
    %750 = vmatpush1.msra.mxu0 %v703
    %751 = vmatprep.subr.mxu0 %v708
    %752 = vmatpush1.msra.mxu0 %v707
    %753 = vmatprep.subr.mxu0 %v712
    %754 = vmatpush1.msra.mxu0 %v711
    %755 = vmatprep.subr.mxu0 %v716
    %756 = vmatpush1.msra.mxu0 %v715
    %757 = vmatprep.subr.mxu0 %v720
    %758 = vmatpush1.msra.mxu0 %v719
    %759 = vmatprep.subr.mxu0 %v724
    %760 = vmatpush1.msra.mxu0 %v723
    %761 = vmatprep.subr.mxu0 %v728
    %762 = vmatpush1.msra.mxu0 %v727
    %763 = vmatprep.subr.mxu0 0.0
    %764 = vmatpush1.msra.mxu0 0.0
    %765 = vmatprep.subr.mxu0 0.0
    %766 = vmatpush1.msra.mxu0 0.0
    %767 = vmatprep.subr.mxu0 0.0
    %768 = vmatpush1.msra.mxu0 0.0
    %769 = vmatprep.subr.mxu0 0.0
    %770 = vmatpush1.msra.mxu0 0.0
    %771 = vmatprep.subr.mxu0 0.0
    %772 = vmatpush1.msra.mxu0 0.0
    %773 = vmatprep.subr.mxu0 0.0
    %774 = vmatpush1.msra.mxu0 0.0
    %775 = vmatprep.subr.mxu0 0.0
    %776 = vmatpush1.msra.mxu0 0.0
    %777 = vmatprep.subr.mxu0 0.0
    %778 = vmatpush1.msra.mxu0 0.0
    %779 = vmatprep.subr.mxu0 0.0
    %780 = vmatpush1.msra.mxu0 0.0
    %781 = vmatprep.subr.mxu0 0.0
    %782 = vmatpush1.msra.mxu0 0.0
    %783 = vmatprep.subr.mxu0 0.0
    %784 = vmatpush1.msra.mxu0 0.0
    %785 = vmatprep.subr.mxu0 0.0
    %786 = vmatpush1.msra.mxu0 0.0
    %787 = vmatprep.subr.mxu0 0.0
    %788 = vmatpush1.msra.mxu0 0.0
    %789 = vmatprep.subr.mxu0 0.0
    %790 = vmatpush1.msra.mxu0 0.0
    %791 = vmatprep.subr.mxu0 0.0
    %792 = vmatpush1.msra.mxu0 0.0
    %793 = vmatprep.subr.mxu0 0.0
    %794 = vmatpush1.msra.mxu0 0.0
    %795 = vmatprep.mubr.f32.mxu0 0.0
    %796 = vmatmul.mubr.f32.gmra.mrb[0].mxu0 %v666
    %v797 = vpop.f32.mrb[0].mxu0
    %v798 = vadd.f32 0.0, %v797
    %v799 = vpop.f32.mrb[0].mxu0
    %v800 = vadd.f32 0.0, %v799
    %801 = vdwg.mxu0
    %802 = vmatprep.subr.mxu0 %v670
    %803 = vmatpush1.msra.mxu0 %v669
    %804 = vmatprep.subr.mxu0 %v674
    %805 = vmatpush1.msra.mxu0 %v673
    %806 = vmatprep.subr.mxu0 %v678
    %807 = vmatpush1.msra.mxu0 %v677
    %808 = vmatprep.subr.mxu0 %v682
    %809 = vmatpush1.msra.mxu0 %v681
    %810 = vmatprep.subr.mxu0 %v686
    %811 = vmatpush1.msra.mxu0 %v685
    %812 = vmatprep.subr.mxu0 %v690
    %813 = vmatpush1.msra.mxu0 %v689
    %814 = vmatprep.subr.mxu0 %v694
    %815 = vmatpush1.msra.mxu0 %v693
    %816 = vmatprep.subr.mxu0 %v698
    %817 = vmatpush1.msra.mxu0 %v697
    %818 = vmatprep.subr.mxu0 %v702
    %819 = vmatpush1.msra.mxu0 %v701
    %820 = vmatprep.subr.mxu0 %v706
    %821 = vmatpush1.msra.mxu0 %v705
    %822 = vmatprep.subr.mxu0 %v710
    %823 = vmatpush1.msra.mxu0 %v709
    %824 = vmatprep.subr.mxu0 %v714
    %825 = vmatpush1.msra.mxu0 %v713
    %826 = vmatprep.subr.mxu0 %v718
    %827 = vmatpush1.msra.mxu0 %v717
    %828 = vmatprep.subr.mxu0 %v722
    %829 = vmatpush1.msra.mxu0 %v721
    %830 = vmatprep.subr.mxu0 %v726
    %831 = vmatpush1.msra.mxu0 %v725
    %832 = vmatprep.subr.mxu0 %v730
    %833 = vmatpush1.msra.mxu0 %v729
    %834 = vmatprep.subr.mxu0 0.0
    %835 = vmatpush1.msra.mxu0 0.0
    %836 = vmatprep.subr.mxu0 0.0
    %837 = vmatpush1.msra.mxu0 0.0
    %838 = vmatprep.subr.mxu0 0.0
    %839 = vmatpush1.msra.mxu0 0.0
    %840 = vmatprep.subr.mxu0 0.0
    %841 = vmatpush1.msra.mxu0 0.0
    %842 = vmatprep.subr.mxu0 0.0
    %843 = vmatpush1.msra.mxu0 0.0
    %844 = vmatprep.subr.mxu0 0.0
    %845 = vmatpush1.msra.mxu0 0.0
    %846 = vmatprep.subr.mxu0 0.0
    %847 = vmatpush1.msra.mxu0 0.0
    %848 = vmatprep.subr.mxu0 0.0
    %849 = vmatpush1.msra.mxu0 0.0
    %850 = vmatprep.subr.mxu0 0.0
    %851 = vmatpush1.msra.mxu0 0.0
    %852 = vmatprep.subr.mxu0 0.0
    %853 = vmatpush1.msra.mxu0 0.0
    %854 = vmatprep.subr.mxu0 0.0
    %855 = vmatpush1.msra.mxu0 0.0
    %856 = vmatprep.subr.mxu0 0.0
    %857 = vmatpush1.msra.mxu0 0.0
    %858 = vmatprep.subr.mxu0 0.0
    %859 = vmatpush1.msra.mxu0 0.0
    %860 = vmatprep.subr.mxu0 0.0
    %861 = vmatpush1.msra.mxu0 0.0
    %862 = vmatprep.subr.mxu0 0.0
    %863 = vmatpush1.msra.mxu0 0.0
    %864 = vmatprep.subr.mxu0 0.0
    %865 = vmatpush1.msra.mxu0 0.0
    %866 = vmatprep.mubr.f32.mxu0 0.0
    %867 = vmatmul.mubr.f32.gmra.mrb[0].mxu0 %v666
    %v868 = vpop.f32.mrb[0].mxu0
    %v869 = vadd.f32 0.0, %v868
    %v870 = vpop.f32.mrb[0].mxu0
    %v871 = vadd.f32 0.0, %v870
    %872 = vdwg.mxu0
    %v873 = vadd.f32 %v662, %v798
    %v874 = vadd.f32 %v663, %v800
    %v875 = vadd.f32 %v664, %v869
    %v876 = vadd.f32 %v665, %v871
    %v877 = vxor.u32 %v873, 2147483648
    %v878 = vmul.f32 %v877, 1.442695
    %v879 = vpow.pop %v878
    %v880 = vadd.f32 %v879, 1.0
    %v881 = vrcp.pop %v880
    %v882 = vmul.f32 1.0, %v881
    %v883 = vxor.u32 %v874, 2147483648
    %v884 = vmul.f32 %v883, 1.442695
    %v885 = vpow.pop %v884
    %v886 = vadd.f32 %v885, 1.0
    %v887 = vrcp.pop %v886
    %v888 = vmul.f32 1.0, %v887
    %v889 = vtanh.pop %v875
    %v890 = vxor.u32 %v876, 2147483648
    %v891 = vmul.f32 %v890, 1.442695
    %v892 = vpow.pop %v891
    %v893 = vadd.f32 %v892, 1.0
    %v894 = vrcp.pop %v893
    %v895 = vmul.f32 1.0, %v894
    %v896 = vld [vmem:[#allocation4] sm:$0xff]
    %v897 = vmul.f32 %v888, %v896
    %v898 = vmul.f32 %v882, %v889
    %v899 = vadd.f32 %v897, %v898
    %v900 = vtanh.pop %v899
    %v901 = vmul.f32 %v895, %v900
    %902 = vst [vmem:[#allocation3] sm:$0xff] %v901
    %903 = vst [vmem:[#allocation4] sm:$0xff] %v899
    %s904 = scalar_lea.vmem [#allocation11], 8
    %905 = vst [vmem:[%s904] sm:$0xff] %v901
    %s906 = smul.u32 2, 4
    %s907 = smul.addr %s906, 8
    %s908 = scalar_lea.vmem [#allocation2], %s907
    %v909 = vld [vmem:[%s908] sm:$0xff]
    %v910 = vld [vmem:[%s908 + $0x8] sm:$0xff]
    %v911 = vld [vmem:[%s908 + $0x10] sm:$0xff]
    %v912 = vld [vmem:[%s908 + $0x18] sm:$0xff]
    %v913 = vld [vmem:[#allocation3] sm:$0xff]
    %v914 = vld [vmem:[#allocation10] sm:$0xff]
    %v915 = vld [vmem:[#allocation10 + $0x8] sm:$0xff]
    %v916 = vld [vmem:[#allocation10 + $0x10] sm:$0xff]
    %v917 = vld [vmem:[#allocation10 + $0x18] sm:$0xff]
    %v918 = vld [vmem:[#allocation10 + $0x20] sm:$0xff]
    %v919 = vld [vmem:[#allocation10 + $0x28] sm:$0xff]
    %v920 = vld [vmem:[#allocation10 + $0x30] sm:$0xff]
    %v921 = vld [vmem:[#allocation10 + $0x38] sm:$0xff]
    %v922 = vld [vmem:[#allocation10 + $0x40] sm:$0xff]
    %v923 = vld [vmem:[#allocation10 + $0x48] sm:$0xff]
    %v924 = vld [vmem:[#allocation10 + $0x50] sm:$0xff]
    %v925 = vld [vmem:[#allocation10 + $0x58] sm:$0xff]
    %v926 = vld [vmem:[#allocation10 + $0x60] sm:$0xff]
    %v927 = vld [vmem:[#allocation10 + $0x68] sm:$0xff]
    %v928 = vld [vmem:[#allocation10 + $0x70] sm:$0xff]
    %v929 = vld [vmem:[#allocation10 + $0x78] sm:$0xff]
    %v930 = vld [vmem:[#allocation10 + $0x80] sm:$0xff]
    %v931 = vld [vmem:[#allocation10 + $0x88] sm:$0xff]
    %v932 = vld [vmem:[#allocation10 + $0x90] sm:$0xff]
    %v933 = vld [vmem:[#allocation10 + $0x98] sm:$0xff]
    %v934 = vld [vmem:[#allocation10 + $0xa0] sm:$0xff]
    %v935 = vld [vmem:[#allocation10 + $0xa8] sm:$0xff]
    %v936 = vld [vmem:[#allocation10 + $0xb0] sm:$0xff]
    %v937 = vld [vmem:[#allocation10 + $0xb8] sm:$0xff]
    %v938 = vld [vmem:[#allocation10 + $0xc0] sm:$0xff]
    %v939 = vld [vmem:[#allocation10 + $0xc8] sm:$0xff]
    %v940 = vld [vmem:[#allocation10 + $0xd0] sm:$0xff]
    %v941 = vld [vmem:[#allocation10 + $0xd8] sm:$0xff]
    %v942 = vld [vmem:[#allocation10 + $0xe0] sm:$0xff]
    %v943 = vld [vmem:[#allocation10 + $0xe8] sm:$0xff]
    %v944 = vld [vmem:[#allocation10 + $0xf0] sm:$0xff]
    %v945 = vld [vmem:[#allocation10 + $0xf8] sm:$0xff]
    %v946 = vld [vmem:[#allocation10 + $0x100] sm:$0xff]
    %v947 = vld [vmem:[#allocation10 + $0x108] sm:$0xff]
    %v948 = vld [vmem:[#allocation10 + $0x110] sm:$0xff]
    %v949 = vld [vmem:[#allocation10 + $0x118] sm:$0xff]
    %v950 = vld [vmem:[#allocation10 + $0x120] sm:$0xff]
    %v951 = vld [vmem:[#allocation10 + $0x128] sm:$0xff]
    %v952 = vld [vmem:[#allocation10 + $0x130] sm:$0xff]
    %v953 = vld [vmem:[#allocation10 + $0x138] sm:$0xff]
    %v954 = vld [vmem:[#allocation10 + $0x140] sm:$0xff]
    %v955 = vld [vmem:[#allocation10 + $0x148] sm:$0xff]
    %v956 = vld [vmem:[#allocation10 + $0x150] sm:$0xff]
    %v957 = vld [vmem:[#allocation10 + $0x158] sm:$0xff]
    %v958 = vld [vmem:[#allocation10 + $0x160] sm:$0xff]
    %v959 = vld [vmem:[#allocation10 + $0x168] sm:$0xff]
    %v960 = vld [vmem:[#allocation10 + $0x170] sm:$0xff]
    %v961 = vld [vmem:[#allocation10 + $0x178] sm:$0xff]
    %v962 = vld [vmem:[#allocation10 + $0x180] sm:$0xff]
    %v963 = vld [vmem:[#allocation10 + $0x188] sm:$0xff]
    %v964 = vld [vmem:[#allocation10 + $0x190] sm:$0xff]
    %v965 = vld [vmem:[#allocation10 + $0x198] sm:$0xff]
    %v966 = vld [vmem:[#allocation10 + $0x1a0] sm:$0xff]
    %v967 = vld [vmem:[#allocation10 + $0x1a8] sm:$0xff]
    %v968 = vld [vmem:[#allocation10 + $0x1b0] sm:$0xff]
    %v969 = vld [vmem:[#allocation10 + $0x1b8] sm:$0xff]
    %v970 = vld [vmem:[#allocation10 + $0x1c0] sm:$0xff]
    %v971 = vld [vmem:[#allocation10 + $0x1c8] sm:$0xff]
    %v972 = vld [vmem:[#allocation10 + $0x1d0] sm:$0xff]
    %v973 = vld [vmem:[#allocation10 + $0x1d8] sm:$0xff]
    %v974 = vld [vmem:[#allocation10 + $0x1e0] sm:$0xff]
    %v975 = vld [vmem:[#allocation10 + $0x1e8] sm:$0xff]
    %v976 = vld [vmem:[#allocation10 + $0x1f0] sm:$0xff]
    %v977 = vld [vmem:[#allocation10 + $0x1f8] sm:$0xff]
    %978 = vmatprep.subr.mxu0 %v915
    %979 = vmatpush1.msra.mxu0 %v914
    %980 = vmatprep.subr.mxu0 %v919
    %981 = vmatpush1.msra.mxu0 %v918
    %982 = vmatprep.subr.mxu0 %v923
    %983 = vmatpush1.msra.mxu0 %v922
    %984 = vmatprep.subr.mxu0 %v927
    %985 = vmatpush1.msra.mxu0 %v926
    %986 = vmatprep.subr.mxu0 %v931
    %987 = vmatpush1.msra.mxu0 %v930
    %988 = vmatprep.subr.mxu0 %v935
    %989 = vmatpush1.msra.mxu0 %v934
    %990 = vmatprep.subr.mxu0 %v939
    %991 = vmatpush1.msra.mxu0 %v938
    %992 = vmatprep.subr.mxu0 %v943
    %993 = vmatpush1.msra.mxu0 %v942
    %994 = vmatprep.subr.mxu0 %v947
    %995 = vmatpush1.msra.mxu0 %v946
    %996 = vmatprep.subr.mxu0 %v951
    %997 = vmatpush1.msra.mxu0 %v950
    %998 = vmatprep.subr.mxu0 %v955
    %999 = vmatpush1.msra.mxu0 %v954
    %1000 = vmatprep.subr.mxu0 %v959
    %1001 = vmatpush1.msra.mxu0 %v958
    %1002 = vmatprep.subr.mxu0 %v963
    %1003 = vmatpush1.msra.mxu0 %v962
    %1004 = vmatprep.subr.mxu0 %v967
    %1005 = vmatpush1.msra.mxu0 %v966
    %1006 = vmatprep.subr.mxu0 %v971
    %1007 = vmatpush1.msra.mxu0 %v970
    %1008 = vmatprep.subr.mxu0 %v975
    %1009 = vmatpush1.msra.mxu0 %v974
    %1010 = vmatprep.subr.mxu0 0.0
    %1011 = vmatpush1.msra.mxu0 0.0
    %1012 = vmatprep.subr.mxu0 0.0
    %1013 = vmatpush1.msra.mxu0 0.0
    %1014 = vmatprep.subr.mxu0 0.0
    %1015 = vmatpush1.msra.mxu0 0.0
    %1016 = vmatprep.subr.mxu0 0.0
    %1017 = vmatpush1.msra.mxu0 0.0
    %1018 = vmatprep.subr.mxu0 0.0
    %1019 = vmatpush1.msra.mxu0 0.0
    %1020 = vmatprep.subr.mxu0 0.0
    %1021 = vmatpush1.msra.mxu0 0.0
    %1022 = vmatprep.subr.mxu0 0.0
    %1023 = vmatpush1.msra.mxu0 0.0
    %1024 = vmatprep.subr.mxu0 0.0
    %1025 = vmatpush1.msra.mxu0 0.0
    %1026 = vmatprep.subr.mxu0 0.0
    %1027 = vmatpush1.msra.mxu0 0.0
    %1028 = vmatprep.subr.mxu0 0.0
    %1029 = vmatpush1.msra.mxu0 0.0
    %1030 = vmatprep.subr.mxu0 0.0
    %1031 = vmatpush1.msra.mxu0 0.0
    %1032 = vmatprep.subr.mxu0 0.0
    %1033 = vmatpush1.msra.mxu0 0.0
    %1034 = vmatprep.subr.mxu0 0.0
    %1035 = vmatpush1.msra.mxu0 0.0
    %1036 = vmatprep.subr.mxu0 0.0
    %1037 = vmatpush1.msra.mxu0 0.0
    %1038 = vmatprep.subr.mxu0 0.0
    %1039 = vmatpush1.msra.mxu0 0.0
    %1040 = vmatprep.subr.mxu0 0.0
    %1041 = vmatpush1.msra.mxu0 0.0
    %1042 = vmatprep.mubr.f32.mxu0 0.0
    %1043 = vmatmul.mubr.f32.gmra.mrb[0].mxu0 %v913
    %v1044 = vpop.f32.mrb[0].mxu0
    %v1045 = vadd.f32 0.0, %v1044
    %v1046 = vpop.f32.mrb[0].mxu0
    %v1047 = vadd.f32 0.0, %v1046
    %1048 = vdwg.mxu0
    %1049 = vmatprep.subr.mxu0 %v917
    %1050 = vmatpush1.msra.mxu0 %v916
    %1051 = vmatprep.subr.mxu0 %v921
    %1052 = vmatpush1.msra.mxu0 %v920
    %1053 = vmatprep.subr.mxu0 %v925
    %1054 = vmatpush1.msra.mxu0 %v924
    %1055 = vmatprep.subr.mxu0 %v929
    %1056 = vmatpush1.msra.mxu0 %v928
    %1057 = vmatprep.subr.mxu0 %v933
    %1058 = vmatpush1.msra.mxu0 %v932
    %1059 = vmatprep.subr.mxu0 %v937
    %1060 = vmatpush1.msra.mxu0 %v936
    %1061 = vmatprep.subr.mxu0 %v941
    %1062 = vmatpush1.msra.mxu0 %v940
    %1063 = vmatprep.subr.mxu0 %v945
    %1064 = vmatpush1.msra.mxu0 %v944
    %1065 = vmatprep.subr.mxu0 %v949
    %1066 = vmatpush1.msra.mxu0 %v948
    %1067 = vmatprep.subr.mxu0 %v953
    %1068 = vmatpush1.msra.mxu0 %v952
    %1069 = vmatprep.subr.mxu0 %v957
    %1070 = vmatpush1.msra.mxu0 %v956
    %1071 = vmatprep.subr.mxu0 %v961
    %1072 = vmatpush1.msra.mxu0 %v960
    %1073 = vmatprep.subr.mxu0 %v965
    %1074 = vmatpush1.msra.mxu0 %v964
    %1075 = vmatprep.subr.mxu0 %v969
    %1076 = vmatpush1.msra.mxu0 %v968
    %1077 = vmatprep.subr.mxu0 %v973
    %1078 = vmatpush1.msra.mxu0 %v972
    %1079 = vmatprep.subr.mxu0 %v977
    %1080 = vmatpush1.msra.mxu0 %v976
    %1081 = vmatprep.subr.mxu0 0.0
    %1082 = vmatpush1.msra.mxu0 0.0
    %1083 = vmatprep.subr.mxu0 0.0
    %1084 = vmatpush1.msra.mxu0 0.0
    %1085 = vmatprep.subr.mxu0 0.0
    %1086 = vmatpush1.msra.mxu0 0.0
    %1087 = vmatprep.subr.mxu0 0.0
    %1088 = vmatpush1.msra.mxu0 0.0
    %1089 = vmatprep.subr.mxu0 0.0
    %1090 = vmatpush1.msra.mxu0 0.0
    %1091 = vmatprep.subr.mxu0 0.0
    %1092 = vmatpush1.msra.mxu0 0.0
    %1093 = vmatprep.subr.mxu0 0.0
    %1094 = vmatpush1.msra.mxu0 0.0
    %1095 = vmatprep.subr.mxu0 0.0
    %1096 = vmatpush1.msra.mxu0 0.0
    %1097 = vmatprep.subr.mxu0 0.0
    %1098 = vmatpush1.msra.mxu0 0.0
    %1099 = vmatprep.subr.mxu0 0.0
    %1100 = vmatpush1.msra.mxu0 0.0
    %1101 = vmatprep.subr.mxu0 0.0
    %1102 = vmatpush1.msra.mxu0 0.0
    %1103 = vmatprep.subr.mxu0 0.0
    %1104 = vmatpush1.msra.mxu0 0.0
    %1105 = vmatprep.subr.mxu0 0.0
    %1106 = vmatpush1.msra.mxu0 0.0
    %1107 = vmatprep.subr.mxu0 0.0
    %1108 = vmatpush1.msra.mxu0 0.0
    %1109 = vmatprep.subr.mxu0 0.0
    %1110 = vmatpush1.msra.mxu0 0.0
    %1111 = vmatprep.subr.mxu0 0.0
    %1112 = vmatpush1.msra.mxu0 0.0
    %1113 = vmatprep.mubr.f32.mxu0 0.0
    %1114 = vmatmul.mubr.f32.gmra.mrb[0].mxu0 %v913
    %v1115 = vpop.f32.mrb[0].mxu0
    %v1116 = vadd.f32 0.0, %v1115
    %v1117 = vpop.f32.mrb[0].mxu0
    %v1118 = vadd.f32 0.0, %v1117
    %1119 = vdwg.mxu0
    %v1120 = vadd.f32 %v909, %v1045
    %v1121 = vadd.f32 %v910, %v1047
    %v1122 = vadd.f32 %v911, %v1116
    %v1123 = vadd.f32 %v912, %v1118
    %v1124 = vxor.u32 %v1120, 2147483648
    %v1125 = vmul.f32 %v1124, 1.442695
    %v1126 = vpow.pop %v1125
    %v1127 = vadd.f32 %v1126, 1.0
    %v1128 = vrcp.pop %v1127
    %v1129 = vmul.f32 1.0, %v1128
    %v1130 = vxor.u32 %v1121, 2147483648
    %v1131 = vmul.f32 %v1130, 1.442695
    %v1132 = vpow.pop %v1131
    %v1133 = vadd.f32 %v1132, 1.0
    %v1134 = vrcp.pop %v1133
    %v1135 = vmul.f32 1.0, %v1134
    %v1136 = vtanh.pop %v1122
    %v1137 = vxor.u32 %v1123, 2147483648
    %v1138 = vmul.f32 %v1137, 1.442695
    %v1139 = vpow.pop %v1138
    %v1140 = vadd.f32 %v1139, 1.0
    %v1141 = vrcp.pop %v1140
    %v1142 = vmul.f32 1.0, %v1141
    %v1143 = vld [vmem:[#allocation4] sm:$0xff]
    %v1144 = vmul.f32 %v1135, %v1143
    %v1145 = vmul.f32 %v1129, %v1136
    %v1146 = vadd.f32 %v1144, %v1145
    %v1147 = vtanh.pop %v1146
    %v1148 = vmul.f32 %v1142, %v1147
    %1149 = vst [vmem:[#allocation3] sm:$0xff] %v1148
    %1150 = vst [vmem:[#allocation4] sm:$0xff] %v1146
    %s1151 = scalar_lea.vmem [#allocation11], 16
    %1152 = vst [vmem:[%s1151] sm:$0xff] %v1148
    %s1153 = smul.u32 3, 4
    %s1154 = smul.addr %s1153, 8
    %s1155 = scalar_lea.vmem [#allocation2], %s1154
    %v1156 = vld [vmem:[%s1155] sm:$0xff]
    %v1157 = vld [vmem:[%s1155 + $0x8] sm:$0xff]
    %v1158 = vld [vmem:[%s1155 + $0x10] sm:$0xff]
    %v1159 = vld [vmem:[%s1155 + $0x18] sm:$0xff]
    %v1160 = vld [vmem:[#allocation3] sm:$0xff]
    %v1161 = vld [vmem:[#allocation10] sm:$0xff]
    %v1162 = vld [vmem:[#allocation10 + $0x8] sm:$0xff]
    %v1163 = vld [vmem:[#allocation10 + $0x10] sm:$0xff]
    %v1164 = vld [vmem:[#allocation10 + $0x18] sm:$0xff]
    %v1165 = vld [vmem:[#allocation10 + $0x20] sm:$0xff]
    %v1166 = vld [vmem:[#allocation10 + $0x28] sm:$0xff]
    %v1167 = vld [vmem:[#allocation10 + $0x30] sm:$0xff]
    %v1168 = vld [vmem:[#allocation10 + $0x38] sm:$0xff]
    %v1169 = vld [vmem:[#allocation10 + $0x40] sm:$0xff]
    %v1170 = vld [vmem:[#allocation10 + $0x48] sm:$0xff]
    %v1171 = vld [vmem:[#allocation10 + $0x50] sm:$0xff]
    %v1172 = vld [vmem:[#allocation10 + $0x58] sm:$0xff]
    %v1173 = vld [vmem:[#allocation10 + $0x60] sm:$0xff]
    %v1174 = vld [vmem:[#allocation10 + $0x68] sm:$0xff]
    %v1175 = vld [vmem:[#allocation10 + $0x70] sm:$0xff]
    %v1176 = vld [vmem:[#allocation10 + $0x78] sm:$0xff]
    %v1177 = vld [vmem:[#allocation10 + $0x80] sm:$0xff]
    %v1178 = vld [vmem:[#allocation10 + $0x88] sm:$0xff]
    %v1179 = vld [vmem:[#allocation10 + $0x90] sm:$0xff]
    %v1180 = vld [vmem:[#allocation10 + $0x98] sm:$0xff]
    %v1181 = vld [vmem:[#allocation10 + $0xa0] sm:$0xff]
    %v1182 = vld [vmem:[#allocation10 + $0xa8] sm:$0xff]
    %v1183 = vld [vmem:[#allocation10 + $0xb0] sm:$0xff]
    %v1184 = vld [vmem:[#allocation10 + $0xb8] sm:$0xff]
    %v1185 = vld [vmem:[#allocation10 + $0xc0] sm:$0xff]
    %v1186 = vld [vmem:[#allocation10 + $0xc8] sm:$0xff]
    %v1187 = vld [vmem:[#allocation10 + $0xd0] sm:$0xff]
    %v1188 = vld [vmem:[#allocation10 + $0xd8] sm:$0xff]
    %v1189 = vld [vmem:[#allocation10 + $0xe0] sm:$0xff]
    %v1190 = vld [vmem:[#allocation10 + $0xe8] sm:$0xff]
    %v1191 = vld [vmem:[#allocation10 + $0xf0] sm:$0xff]
    %v1192 = vld [vmem:[#allocation10 + $0xf8] sm:$0xff]
    %v1193 = vld [vmem:[#allocation10 + $0x100] sm:$0xff]
    %v1194 = vld [vmem:[#allocation10 + $0x108] sm:$0xff]
    %v1195 = vld [vmem:[#allocation10 + $0x110] sm:$0xff]
    %v1196 = vld [vmem:[#allocation10 + $0x118] sm:$0xff]
    %v1197 = vld [vmem:[#allocation10 + $0x120] sm:$0xff]
    %v1198 = vld [vmem:[#allocation10 + $0x128] sm:$0xff]
    %v1199 = vld [vmem:[#allocation10 + $0x130] sm:$0xff]
    %v1200 = vld [vmem:[#allocation10 + $0x138] sm:$0xff]
    %v1201 = vld [vmem:[#allocation10 + $0x140] sm:$0xff]
    %v1202 = vld [vmem:[#allocation10 + $0x148] sm:$0xff]
    %v1203 = vld [vmem:[#allocation10 + $0x150] sm:$0xff]
    %v1204 = vld [vmem:[#allocation10 + $0x158] sm:$0xff]
    %v1205 = vld [vmem:[#allocation10 + $0x160] sm:$0xff]
    %v1206 = vld [vmem:[#allocation10 + $0x168] sm:$0xff]
    %v1207 = vld [vmem:[#allocation10 + $0x170] sm:$0xff]
    %v1208 = vld [vmem:[#allocation10 + $0x178] sm:$0xff]
    %v1209 = vld [vmem:[#allocation10 + $0x180] sm:$0xff]
    %v1210 = vld [vmem:[#allocation10 + $0x188] sm:$0xff]
    %v1211 = vld [vmem:[#allocation10 + $0x190] sm:$0xff]
    %v1212 = vld [vmem:[#allocation10 + $0x198] sm:$0xff]
    %v1213 = vld [vmem:[#allocation10 + $0x1a0] sm:$0xff]
    %v1214 = vld [vmem:[#allocation10 + $0x1a8] sm:$0xff]
    %v1215 = vld [vmem:[#allocation10 + $0x1b0] sm:$0xff]
    %v1216 = vld [vmem:[#allocation10 + $0x1b8] sm:$0xff]
    %v1217 = vld [vmem:[#allocation10 + $0x1c0] sm:$0xff]
    %v1218 = vld [vmem:[#allocation10 + $0x1c8] sm:$0xff]
    %v1219 = vld [vmem:[#allocation10 + $0x1d0] sm:$0xff]
    %v1220 = vld [vmem:[#allocation10 + $0x1d8] sm:$0xff]
    %v1221 = vld [vmem:[#allocation10 + $0x1e0] sm:$0xff]
    %v1222 = vld [vmem:[#allocation10 + $0x1e8] sm:$0xff]
    %v1223 = vld [vmem:[#allocation10 + $0x1f0] sm:$0xff]
    %v1224 = vld [vmem:[#allocation10 + $0x1f8] sm:$0xff]
    %1225 = vmatprep.subr.mxu0 %v1162
    %1226 = vmatpush1.msra.mxu0 %v1161
    %1227 = vmatprep.subr.mxu0 %v1166
    %1228 = vmatpush1.msra.mxu0 %v1165
    %1229 = vmatprep.subr.mxu0 %v1170
    %1230 = vmatpush1.msra.mxu0 %v1169
    %1231 = vmatprep.subr.mxu0 %v1174
    %1232 = vmatpush1.msra.mxu0 %v1173
    %1233 = vmatprep.subr.mxu0 %v1178
    %1234 = vmatpush1.msra.mxu0 %v1177
    %1235 = vmatprep.subr.mxu0 %v1182
    %1236 = vmatpush1.msra.mxu0 %v1181
    %1237 = vmatprep.subr.mxu0 %v1186
    %1238 = vmatpush1.msra.mxu0 %v1185
    %1239 = vmatprep.subr.mxu0 %v1190
    %1240 = vmatpush1.msra.mxu0 %v1189
    %1241 = vmatprep.subr.mxu0 %v1194
    %1242 = vmatpush1.msra.mxu0 %v1193
    %1243 = vmatprep.subr.mxu0 %v1198
    %1244 = vmatpush1.msra.mxu0 %v1197
    %1245 = vmatprep.subr.mxu0 %v1202
    %1246 = vmatpush1.msra.mxu0 %v1201
    %1247 = vmatprep.subr.mxu0 %v1206
    %1248 = vmatpush1.msra.mxu0 %v1205
    %1249 = vmatprep.subr.mxu0 %v1210
    %1250 = vmatpush1.msra.mxu0 %v1209
    %1251 = vmatprep.subr.mxu0 %v1214
    %1252 = vmatpush1.msra.mxu0 %v1213
    %1253 = vmatprep.subr.mxu0 %v1218
    %1254 = vmatpush1.msra.mxu0 %v1217
    %1255 = vmatprep.subr.mxu0 %v1222
    %1256 = vmatpush1.msra.mxu0 %v1221
    %1257 = vmatprep.subr.mxu0 0.0
    %1258 = vmatpush1.msra.mxu0 0.0
    %1259 = vmatprep.subr.mxu0 0.0
    %1260 = vmatpush1.msra.mxu0 0.0
    %1261 = vmatprep.subr.mxu0 0.0
    %1262 = vmatpush1.msra.mxu0 0.0
    %1263 = vmatprep.subr.mxu0 0.0
    %1264 = vmatpush1.msra.mxu0 0.0
    %1265 = vmatprep.subr.mxu0 0.0
    %1266 = vmatpush1.msra.mxu0 0.0
    %1267 = vmatprep.subr.mxu0 0.0
    %1268 = vmatpush1.msra.mxu0 0.0
    %1269 = vmatprep.subr.mxu0 0.0
    %1270 = vmatpush1.msra.mxu0 0.0
    %1271 = vmatprep.subr.mxu0 0.0
    %1272 = vmatpush1.msra.mxu0 0.0
    %1273 = vmatprep.subr.mxu0 0.0
    %1274 = vmatpush1.msra.mxu0 0.0
    %1275 = vmatprep.subr.mxu0 0.0
    %1276 = vmatpush1.msra.mxu0 0.0
    %1277 = vmatprep.subr.mxu0 0.0
    %1278 = vmatpush1.msra.mxu0 0.0
    %1279 = vmatprep.subr.mxu0 0.0
    %1280 = vmatpush1.msra.mxu0 0.0
    %1281 = vmatprep.subr.mxu0 0.0
    %1282 = vmatpush1.msra.mxu0 0.0
    %1283 = vmatprep.subr.mxu0 0.0
    %1284 = vmatpush1.msra.mxu0 0.0
    %1285 = vmatprep.subr.mxu0 0.0
    %1286 = vmatpush1.msra.mxu0 0.0
    %1287 = vmatprep.subr.mxu0 0.0
    %1288 = vmatpush1.msra.mxu0 0.0
    %1289 = vmatprep.mubr.f32.mxu0 0.0
    %1290 = vmatmul.mubr.f32.gmra.mrb[0].mxu0 %v1160
    %v1291 = vpop.f32.mrb[0].mxu0
    %v1292 = vadd.f32 0.0, %v1291
    %v1293 = vpop.f32.mrb[0].mxu0
    %v1294 = vadd.f32 0.0, %v1293
    %1295 = vdwg.mxu0
    %1296 = vmatprep.subr.mxu0 %v1164
    %1297 = vmatpush1.msra.mxu0 %v1163
    %1298 = vmatprep.subr.mxu0 %v1168
    %1299 = vmatpush1.msra.mxu0 %v1167
    %1300 = vmatprep.subr.mxu0 %v1172
    %1301 = vmatpush1.msra.mxu0 %v1171
    %1302 = vmatprep.subr.mxu0 %v1176
    %1303 = vmatpush1.msra.mxu0 %v1175
    %1304 = vmatprep.subr.mxu0 %v1180
    %1305 = vmatpush1.msra.mxu0 %v1179
    %1306 = vmatprep.subr.mxu0 %v1184
    %1307 = vmatpush1.msra.mxu0 %v1183
    %1308 = vmatprep.subr.mxu0 %v1188
    %1309 = vmatpush1.msra.mxu0 %v1187
    %1310 = vmatprep.subr.mxu0 %v1192
    %1311 = vmatpush1.msra.mxu0 %v1191
    %1312 = vmatprep.subr.mxu0 %v1196
    %1313 = vmatpush1.msra.mxu0 %v1195
    %1314 = vmatprep.subr.mxu0 %v1200
    %1315 = vmatpush1.msra.mxu0 %v1199
    %1316 = vmatprep.subr.mxu0 %v1204
    %1317 = vmatpush1.msra.mxu0 %v1203
    %1318 = vmatprep.subr.mxu0 %v1208
    %1319 = vmatpush1.msra.mxu0 %v1207
    %1320 = vmatprep.subr.mxu0 %v1212
    %1321 = vmatpush1.msra.mxu0 %v1211
    %1322 = vmatprep.subr.mxu0 %v1216
    %1323 = vmatpush1.msra.mxu0 %v1215
    %1324 = vmatprep.subr.mxu0 %v1220
    %1325 = vmatpush1.msra.mxu0 %v1219
    %1326 = vmatprep.subr.mxu0 %v1224
    %1327 = vmatpush1.msra.mxu0 %v1223
    %1328 = vmatprep.subr.mxu0 0.0
    %1329 = vmatpush1.msra.mxu0 0.0
    %1330 = vmatprep.subr.mxu0 0.0
    %1331 = vmatpush1.msra.mxu0 0.0
    %1332 = vmatprep.subr.mxu0 0.0
    %1333 = vmatpush1.msra.mxu0 0.0
    %1334 = vmatprep.subr.mxu0 0.0
    %1335 = vmatpush1.msra.mxu0 0.0
    %1336 = vmatprep.subr.mxu0 0.0
    %1337 = vmatpush1.msra.mxu0 0.0
    %1338 = vmatprep.subr.mxu0 0.0
    %1339 = vmatpush1.msra.mxu0 0.0
    %1340 = vmatprep.subr.mxu0 0.0
    %1341 = vmatpush1.msra.mxu0 0.0
    %1342 = vmatprep.subr.mxu0 0.0
    %1343 = vmatpush1.msra.mxu0 0.0
    %1344 = vmatprep.subr.mxu0 0.0
    %1345 = vmatpush1.msra.mxu0 0.0
    %1346 = vmatprep.subr.mxu0 0.0
    %1347 = vmatpush1.msra.mxu0 0.0
    %1348 = vmatprep.subr.mxu0 0.0
    %1349 = vmatpush1.msra.mxu0 0.0
    %1350 = vmatprep.subr.mxu0 0.0
    %1351 = vmatpush1.msra.mxu0 0.0
    %1352 = vmatprep.subr.mxu0 0.0
    %1353 = vmatpush1.msra.mxu0 0.0
    %1354 = vmatprep.subr.mxu0 0.0
    %1355 = vmatpush1.msra.mxu0 0.0
    %1356 = vmatprep.subr.mxu0 0.0
    %1357 = vmatpush1.msra.mxu0 0.0
    %1358 = vmatprep.subr.mxu0 0.0
    %1359 = vmatpush1.msra.mxu0 0.0
    %1360 = vmatprep.mubr.f32.mxu0 0.0
    %1361 = vmatmul.mubr.f32.gmra.mrb[0].mxu0 %v1160
    %v1362 = vpop.f32.mrb[0].mxu0
    %v1363 = vadd.f32 0.0, %v1362
    %v1364 = vpop.f32.mrb[0].mxu0
    %v1365 = vadd.f32 0.0, %v1364
    %1366 = vdwg.mxu0
    %v1367 = vadd.f32 %v1156, %v1292
    %v1368 = vadd.f32 %v1157, %v1294
    %v1369 = vadd.f32 %v1158, %v1363
    %v1370 = vadd.f32 %v1159, %v1365
    %v1371 = vxor.u32 %v1367, 2147483648
    %v1372 = vmul.f32 %v1371, 1.442695
    %v1373 = vpow.pop %v1372
    %v1374 = vadd.f32 %v1373, 1.0
    %v1375 = vrcp.pop %v1374
    %v1376 = vmul.f32 1.0, %v1375
    %v1377 = vxor.u32 %v1368, 2147483648
    %v1378 = vmul.f32 %v1377, 1.442695
    %v1379 = vpow.pop %v1378
    %v1380 = vadd.f32 %v1379, 1.0
    %v1381 = vrcp.pop %v1380
    %v1382 = vmul.f32 1.0, %v1381
    %v1383 = vtanh.pop %v1369
    %v1384 = vxor.u32 %v1370, 2147483648
    %v1385 = vmul.f32 %v1384, 1.442695
    %v1386 = vpow.pop %v1385
    %v1387 = vadd.f32 %v1386, 1.0
    %v1388 = vrcp.pop %v1387
    %v1389 = vmul.f32 1.0, %v1388
    %v1390 = vld [vmem:[#allocation4] sm:$0xff]
    %v1391 = vmul.f32 %v1382, %v1390
    %v1392 = vmul.f32 %v1376, %v1383
    %v1393 = vadd.f32 %v1391, %v1392
    %v1394 = vtanh.pop %v1393
    %v1395 = vmul.f32 %v1389, %v1394
    %1396 = vst [vmem:[#allocation3] sm:$0xff] %v1395
    %1397 = vst [vmem:[#allocation4] sm:$0xff] %v1393
    %s1398 = scalar_lea.vmem [#allocation11], 24
    %1399 = vst [vmem:[%s1398] sm:$0xff] %v1395
    %s1400 = smul.u32 4, 4
    %s1401 = smul.addr %s1400, 8
    %s1402 = scalar_lea.vmem [#allocation2], %s1401
    %v1403 = vld [vmem:[%s1402] sm:$0xff]
    %v1404 = vld [vmem:[%s1402 + $0x8] sm:$0xff]
    %v1405 = vld [vmem:[%s1402 + $0x10] sm:$0xff]
    %v1406 = vld [vmem:[%s1402 + $0x18] sm:$0xff]
    %v1407 = vld [vmem:[#allocation3] sm:$0xff]
    %v1408 = vld [vmem:[#allocation10] sm:$0xff]
    %v1409 = vld [vmem:[#allocation10 + $0x8] sm:$0xff]
    %v1410 = vld [vmem:[#allocation10 + $0x10] sm:$0xff]
    %v1411 = vld [vmem:[#allocation10 + $0x18] sm:$0xff]
    %v1412 = vld [vmem:[#allocation10 + $0x20] sm:$0xff]
    %v1413 = vld [vmem:[#allocation10 + $0x28] sm:$0xff]
    %v1414 = vld [vmem:[#allocation10 + $0x30] sm:$0xff]
    %v1415 = vld [vmem:[#allocation10 + $0x38] sm:$0xff]
    %v1416 = vld [vmem:[#allocation10 + $0x40] sm:$0xff]
    %v1417 = vld [vmem:[#allocation10 + $0x48] sm:$0xff]
    %v1418 = vld [vmem:[#allocation10 + $0x50] sm:$0xff]
    %v1419 = vld [vmem:[#allocation10 + $0x58] sm:$0xff]
    %v1420 = vld [vmem:[#allocation10 + $0x60] sm:$0xff]
    %v1421 = vld [vmem:[#allocation10 + $0x68] sm:$0xff]
    %v1422 = vld [vmem:[#allocation10 + $0x70] sm:$0xff]
    %v1423 = vld [vmem:[#allocation10 + $0x78] sm:$0xff]
    %v1424 = vld [vmem:[#allocation10 + $0x80] sm:$0xff]
    %v1425 = vld [vmem:[#allocation10 + $0x88] sm:$0xff]
    %v1426 = vld [vmem:[#allocation10 + $0x90] sm:$0xff]
    %v1427 = vld [vmem:[#allocation10 + $0x98] sm:$0xff]
    %v1428 = vld [vmem:[#allocation10 + $0xa0] sm:$0xff]
    %v1429 = vld [vmem:[#allocation10 + $0xa8] sm:$0xff]
    %v1430 = vld [vmem:[#allocation10 + $0xb0] sm:$0xff]
    %v1431 = vld [vmem:[#allocation10 + $0xb8] sm:$0xff]
    %v1432 = vld [vmem:[#allocation10 + $0xc0] sm:$0xff]
    %v1433 = vld [vmem:[#allocation10 + $0xc8] sm:$0xff]
    %v1434 = vld [vmem:[#allocation10 + $0xd0] sm:$0xff]
    %v1435 = vld [vmem:[#allocation10 + $0xd8] sm:$0xff]
    %v1436 = vld [vmem:[#allocation10 + $0xe0] sm:$0xff]
    %v1437 = vld [vmem:[#allocation10 + $0xe8] sm:$0xff]
    %v1438 = vld [vmem:[#allocation10 + $0xf0] sm:$0xff]
    %v1439 = vld [vmem:[#allocation10 + $0xf8] sm:$0xff]
    %v1440 = vld [vmem:[#allocation10 + $0x100] sm:$0xff]
    %v1441 = vld [vmem:[#allocation10 + $0x108] sm:$0xff]
    %v1442 = vld [vmem:[#allocation10 + $0x110] sm:$0xff]
    %v1443 = vld [vmem:[#allocation10 + $0x118] sm:$0xff]
    %v1444 = vld [vmem:[#allocation10 + $0x120] sm:$0xff]
    %v1445 = vld [vmem:[#allocation10 + $0x128] sm:$0xff]
    %v1446 = vld [vmem:[#allocation10 + $0x130] sm:$0xff]
    %v1447 = vld [vmem:[#allocation10 + $0x138] sm:$0xff]
    %v1448 = vld [vmem:[#allocation10 + $0x140] sm:$0xff]
    %v1449 = vld [vmem:[#allocation10 + $0x148] sm:$0xff]
    %v1450 = vld [vmem:[#allocation10 + $0x150] sm:$0xff]
    %v1451 = vld [vmem:[#allocation10 + $0x158] sm:$0xff]
    %v1452 = vld [vmem:[#allocation10 + $0x160] sm:$0xff]
    %v1453 = vld [vmem:[#allocation10 + $0x168] sm:$0xff]
    %v1454 = vld [vmem:[#allocation10 + $0x170] sm:$0xff]
    %v1455 = vld [vmem:[#allocation10 + $0x178] sm:$0xff]
    %v1456 = vld [vmem:[#allocation10 + $0x180] sm:$0xff]
    %v1457 = vld [vmem:[#allocation10 + $0x188] sm:$0xff]
    %v1458 = vld [vmem:[#allocation10 + $0x190] sm:$0xff]
    %v1459 = vld [vmem:[#allocation10 + $0x198] sm:$0xff]
    %v1460 = vld [vmem:[#allocation10 + $0x1a0] sm:$0xff]
    %v1461 = vld [vmem:[#allocation10 + $0x1a8] sm:$0xff]
    %v1462 = vld [vmem:[#allocation10 + $0x1b0] sm:$0xff]
    %v1463 = vld [vmem:[#allocation10 + $0x1b8] sm:$0xff]
    %v1464 = vld [vmem:[#allocation10 + $0x1c0] sm:$0xff]
    %v1465 = vld [vmem:[#allocation10 + $0x1c8] sm:$0xff]
    %v1466 = vld [vmem:[#allocation10 + $0x1d0] sm:$0xff]
    %v1467 = vld [vmem:[#allocation10 + $0x1d8] sm:$0xff]
    %v1468 = vld [vmem:[#allocation10 + $0x1e0] sm:$0xff]
    %v1469 = vld [vmem:[#allocation10 + $0x1e8] sm:$0xff]
    %v1470 = vld [vmem:[#allocation10 + $0x1f0] sm:$0xff]
    %v1471 = vld [vmem:[#allocation10 + $0x1f8] sm:$0xff]
    %1472 = vmatprep.subr.mxu0 %v1409
    %1473 = vmatpush1.msra.mxu0 %v1408
    %1474 = vmatprep.subr.mxu0 %v1413
    %1475 = vmatpush1.msra.mxu0 %v1412
    %1476 = vmatprep.subr.mxu0 %v1417
    %1477 = vmatpush1.msra.mxu0 %v1416
    %1478 = vmatprep.subr.mxu0 %v1421
    %1479 = vmatpush1.msra.mxu0 %v1420
    %1480 = vmatprep.subr.mxu0 %v1425
    %1481 = vmatpush1.msra.mxu0 %v1424
    %1482 = vmatprep.subr.mxu0 %v1429
    %1483 = vmatpush1.msra.mxu0 %v1428
    %1484 = vmatprep.subr.mxu0 %v1433
    %1485 = vmatpush1.msra.mxu0 %v1432
    %1486 = vmatprep.subr.mxu0 %v1437
    %1487 = vmatpush1.msra.mxu0 %v1436
    %1488 = vmatprep.subr.mxu0 %v1441
    %1489 = vmatpush1.msra.mxu0 %v1440
    %1490 = vmatprep.subr.mxu0 %v1445
    %1491 = vmatpush1.msra.mxu0 %v1444
    %1492 = vmatprep.subr.mxu0 %v1449
    %1493 = vmatpush1.msra.mxu0 %v1448
    %1494 = vmatprep.subr.mxu0 %v1453
    %1495 = vmatpush1.msra.mxu0 %v1452
    %1496 = vmatprep.subr.mxu0 %v1457
    %1497 = vmatpush1.msra.mxu0 %v1456
    %1498 = vmatprep.subr.mxu0 %v1461
    %1499 = vmatpush1.msra.mxu0 %v1460
    %1500 = vmatprep.subr.mxu0 %v1465
    %1501 = vmatpush1.msra.mxu0 %v1464
    %1502 = vmatprep.subr.mxu0 %v1469
    %1503 = vmatpush1.msra.mxu0 %v1468
    %1504 = vmatprep.subr.mxu0 0.0
    %1505 = vmatpush1.msra.mxu0 0.0
    %1506 = vmatprep.subr.mxu0 0.0
    %1507 = vmatpush1.msra.mxu0 0.0
    %1508 = vmatprep.subr.mxu0 0.0
    %1509 = vmatpush1.msra.mxu0 0.0
    %1510 = vmatprep.subr.mxu0 0.0
    %1511 = vmatpush1.msra.mxu0 0.0
    %1512 = vmatprep.subr.mxu0 0.0
    %1513 = vmatpush1.msra.mxu0 0.0
    %1514 = vmatprep.subr.mxu0 0.0
    %1515 = vmatpush1.msra.mxu0 0.0
    %1516 = vmatprep.subr.mxu0 0.0
    %1517 = vmatpush1.msra.mxu0 0.0
    %1518 = vmatprep.subr.mxu0 0.0
    %1519 = vmatpush1.msra.mxu0 0.0
    %1520 = vmatprep.subr.mxu0 0.0
    %1521 = vmatpush1.msra.mxu0 0.0
    %1522 = vmatprep.subr.mxu0 0.0
    %1523 = vmatpush1.msra.mxu0 0.0
    %1524 = vmatprep.subr.mxu0 0.0
    %1525 = vmatpush1.msra.mxu0 0.0
    %1526 = vmatprep.subr.mxu0 0.0
    %1527 = vmatpush1.msra.mxu0 0.0
    %1528 = vmatprep.subr.mxu0 0.0
    %1529 = vmatpush1.msra.mxu0 0.0
    %1530 = vmatprep.subr.mxu0 0.0
    %1531 = vmatpush1.msra.mxu0 0.0
    %1532 = vmatprep.subr.mxu0 0.0
    %1533 = vmatpush1.msra.mxu0 0.0
    %1534 = vmatprep.subr.mxu0 0.0
    %1535 = vmatpush1.msra.mxu0 0.0
    %1536 = vmatprep.mubr.f32.mxu0 0.0
    %1537 = vmatmul.mubr.f32.gmra.mrb[0].mxu0 %v1407
    %v1538 = vpop.f32.mrb[0].mxu0
    %v1539 = vadd.f32 0.0, %v1538
    %v1540 = vpop.f32.mrb[0].mxu0
    %v1541 = vadd.f32 0.0, %v1540
    %1542 = vdwg.mxu0
    %1543 = vmatprep.subr.mxu0 %v1411
    %1544 = vmatpush1.msra.mxu0 %v1410
    %1545 = vmatprep.subr.mxu0 %v1415
    %1546 = vmatpush1.msra.mxu0 %v1414
    %1547 = vmatprep.subr.mxu0 %v1419
    %1548 = vmatpush1.msra.mxu0 %v1418
    %1549 = vmatprep.subr.mxu0 %v1423
    %1550 = vmatpush1.msra.mxu0 %v1422
    %1551 = vmatprep.subr.mxu0 %v1427
    %1552 = vmatpush1.msra.mxu0 %v1426
    %1553 = vmatprep.subr.mxu0 %v1431
    %1554 = vmatpush1.msra.mxu0 %v1430
    %1555 = vmatprep.subr.mxu0 %v1435
    %1556 = vmatpush1.msra.mxu0 %v1434
    %1557 = vmatprep.subr.mxu0 %v1439
    %1558 = vmatpush1.msra.mxu0 %v1438
    %1559 = vmatprep.subr.mxu0 %v1443
    %1560 = vmatpush1.msra.mxu0 %v1442
    %1561 = vmatprep.subr.mxu0 %v1447
    %1562 = vmatpush1.msra.mxu0 %v1446
    %1563 = vmatprep.subr.mxu0 %v1451
    %1564 = vmatpush1.msra.mxu0 %v1450
    %1565 = vmatprep.subr.mxu0 %v1455
    %1566 = vmatpush1.msra.mxu0 %v1454
    %1567 = vmatprep.subr.mxu0 %v1459
    %1568 = vmatpush1.msra.mxu0 %v1458
    %1569 = vmatprep.subr.mxu0 %v1463
    %1570 = vmatpush1.msra.mxu0 %v1462
    %1571 = vmatprep.subr.mxu0 %v1467
    %1572 = vmatpush1.msra.mxu0 %v1466
    %1573 = vmatprep.subr.mxu0 %v1471
    %1574 = vmatpush1.msra.mxu0 %v1470
    %1575 = vmatprep.subr.mxu0 0.0
    %1576 = vmatpush1.msra.mxu0 0.0
    %1577 = vmatprep.subr.mxu0 0.0
    %1578 = vmatpush1.msra.mxu0 0.0
    %1579 = vmatprep.subr.mxu0 0.0
    %1580 = vmatpush1.msra.mxu0 0.0
    %1581 = vmatprep.subr.mxu0 0.0
    %1582 = vmatpush1.msra.mxu0 0.0
    %1583 = vmatprep.subr.mxu0 0.0
    %1584 = vmatpush1.msra.mxu0 0.0
    %1585 = vmatprep.subr.mxu0 0.0
    %1586 = vmatpush1.msra.mxu0 0.0
    %1587 = vmatprep.subr.mxu0 0.0
    %1588 = vmatpush1.msra.mxu0 0.0
    %1589 = vmatprep.subr.mxu0 0.0
    %1590 = vmatpush1.msra.mxu0 0.0
    %1591 = vmatprep.subr.mxu0 0.0
    %1592 = vmatpush1.msra.mxu0 0.0
    %1593 = vmatprep.subr.mxu0 0.0
    %1594 = vmatpush1.msra.mxu0 0.0
    %1595 = vmatprep.subr.mxu0 0.0
    %1596 = vmatpush1.msra.mxu0 0.0
    %1597 = vmatprep.subr.mxu0 0.0
    %1598 = vmatpush1.msra.mxu0 0.0
    %1599 = vmatprep.subr.mxu0 0.0
    %1600 = vmatpush1.msra.mxu0 0.0
    %1601 = vmatprep.subr.mxu0 0.0
    %1602 = vmatpush1.msra.mxu0 0.0
    %1603 = vmatprep.subr.mxu0 0.0
    %1604 = vmatpush1.msra.mxu0 0.0
    %1605 = vmatprep.subr.mxu0 0.0
    %1606 = vmatpush1.msra.mxu0 0.0
    %1607 = vmatprep.mubr.f32.mxu0 0.0
    %1608 = vmatmul.mubr.f32.gmra.mrb[0].mxu0 %v1407
    %v1609 = vpop.f32.mrb[0].mxu0
    %v1610 = vadd.f32 0.0, %v1609
    %v1611 = vpop.f32.mrb[0].mxu0
    %v1612 = vadd.f32 0.0, %v1611
    %1613 = vdwg.mxu0
    %v1614 = vadd.f32 %v1403, %v1539
    %v1615 = vadd.f32 %v1404, %v1541
    %v1616 = vadd.f32 %v1405, %v1610
    %v1617 = vadd.f32 %v1406, %v1612
    %v1618 = vxor.u32 %v1614, 2147483648
    %v1619 = vmul.f32 %v1618, 1.442695
    %v1620 = vpow.pop %v1619
    %v1621 = vadd.f32 %v1620, 1.0
    %v1622 = vrcp.pop %v1621
    %v1623 = vmul.f32 1.0, %v1622
    %v1624 = vxor.u32 %v1615, 2147483648
    %v1625 = vmul.f32 %v1624, 1.442695
    %v1626 = vpow.pop %v1625
    %v1627 = vadd.f32 %v1626, 1.0
    %v1628 = vrcp.pop %v1627
    %v1629 = vmul.f32 1.0, %v1628
    %v1630 = vtanh.pop %v1616
    %v1631 = vxor.u32 %v1617, 2147483648
    %v1632 = vmul.f32 %v1631, 1.442695
    %v1633 = vpow.pop %v1632
    %v1634 = vadd.f32 %v1633, 1.0
    %v1635 = vrcp.pop %v1634
    %v1636 = vmul.f32 1.0, %v1635
    %v1637 = vld [vmem:[#allocation4] sm:$0xff]
    %v1638 = vmul.f32 %v1629, %v1637
    %v1639 = vmul.f32 %v1623, %v1630
    %v1640 = vadd.f32 %v1638, %v1639
    %v1641 = vtanh.pop %v1640
    %v1642 = vmul.f32 %v1636, %v1641
    %1643 = vst [vmem:[#allocation3] sm:$0xff] %v1642
    %1644 = vst [vmem:[#allocation4] sm:$0xff] %v1640
    %s1645 = scalar_lea.vmem [#allocation11], 32
    %1646 = vst [vmem:[%s1645] sm:$0xff] %v1642
    %s1647 = smul.u32 5, 4
    %s1648 = smul.addr %s1647, 8
    %s1649 = scalar_lea.vmem [#allocation2], %s1648
    %v1650 = vld [vmem:[%s1649] sm:$0xff]
    %v1651 = vld [vmem:[%s1649 + $0x8] sm:$0xff]
    %v1652 = vld [vmem:[%s1649 + $0x10] sm:$0xff]
    %v1653 = vld [vmem:[%s1649 + $0x18] sm:$0xff]
    %v1654 = vld [vmem:[#allocation3] sm:$0xff]
    %v1655 = vld [vmem:[#allocation10] sm:$0xff]
    %v1656 = vld [vmem:[#allocation10 + $0x8] sm:$0xff]
    %v1657 = vld [vmem:[#allocation10 + $0x10] sm:$0xff]
    %v1658 = vld [vmem:[#allocation10 + $0x18] sm:$0xff]
    %v1659 = vld [vmem:[#allocation10 + $0x20] sm:$0xff]
    %v1660 = vld [vmem:[#allocation10 + $0x28] sm:$0xff]
    %v1661 = vld [vmem:[#allocation10 + $0x30] sm:$0xff]
    %v1662 = vld [vmem:[#allocation10 + $0x38] sm:$0xff]
    %v1663 = vld [vmem:[#allocation10 + $0x40] sm:$0xff]
    %v1664 = vld [vmem:[#allocation10 + $0x48] sm:$0xff]
    %v1665 = vld [vmem:[#allocation10 + $0x50] sm:$0xff]
    %v1666 = vld [vmem:[#allocation10 + $0x58] sm:$0xff]
    %v1667 = vld [vmem:[#allocation10 + $0x60] sm:$0xff]
    %v1668 = vld [vmem:[#allocation10 + $0x68] sm:$0xff]
    %v1669 = vld [vmem:[#allocation10 + $0x70] sm:$0xff]
    %v1670 = vld [vmem:[#allocation10 + $0x78] sm:$0xff]
    %v1671 = vld [vmem:[#allocation10 + $0x80] sm:$0xff]
    %v1672 = vld [vmem:[#allocation10 + $0x88] sm:$0xff]
    %v1673 = vld [vmem:[#allocation10 + $0x90] sm:$0xff]
    %v1674 = vld [vmem:[#allocation10 + $0x98] sm:$0xff]
    %v1675 = vld [vmem:[#allocation10 + $0xa0] sm:$0xff]
    %v1676 = vld [vmem:[#allocation10 + $0xa8] sm:$0xff]
    %v1677 = vld [vmem:[#allocation10 + $0xb0] sm:$0xff]
    %v1678 = vld [vmem:[#allocation10 + $0xb8] sm:$0xff]
    %v1679 = vld [vmem:[#allocation10 + $0xc0] sm:$0xff]
    %v1680 = vld [vmem:[#allocation10 + $0xc8] sm:$0xff]
    %v1681 = vld [vmem:[#allocation10 + $0xd0] sm:$0xff]
    %v1682 = vld [vmem:[#allocation10 + $0xd8] sm:$0xff]
    %v1683 = vld [vmem:[#allocation10 + $0xe0] sm:$0xff]
    %v1684 = vld [vmem:[#allocation10 + $0xe8] sm:$0xff]
    %v1685 = vld [vmem:[#allocation10 + $0xf0] sm:$0xff]
    %v1686 = vld [vmem:[#allocation10 + $0xf8] sm:$0xff]
    %v1687 = vld [vmem:[#allocation10 + $0x100] sm:$0xff]
    %v1688 = vld [vmem:[#allocation10 + $0x108] sm:$0xff]
    %v1689 = vld [vmem:[#allocation10 + $0x110] sm:$0xff]
    %v1690 = vld [vmem:[#allocation10 + $0x118] sm:$0xff]
    %v1691 = vld [vmem:[#allocation10 + $0x120] sm:$0xff]
    %v1692 = vld [vmem:[#allocation10 + $0x128] sm:$0xff]
    %v1693 = vld [vmem:[#allocation10 + $0x130] sm:$0xff]
    %v1694 = vld [vmem:[#allocation10 + $0x138] sm:$0xff]
    %v1695 = vld [vmem:[#allocation10 + $0x140] sm:$0xff]
    %v1696 = vld [vmem:[#allocation10 + $0x148] sm:$0xff]
    %v1697 = vld [vmem:[#allocation10 + $0x150] sm:$0xff]
    %v1698 = vld [vmem:[#allocation10 + $0x158] sm:$0xff]
    %v1699 = vld [vmem:[#allocation10 + $0x160] sm:$0xff]
    %v1700 = vld [vmem:[#allocation10 + $0x168] sm:$0xff]
    %v1701 = vld [vmem:[#allocation10 + $0x170] sm:$0xff]
    %v1702 = vld [vmem:[#allocation10 + $0x178] sm:$0xff]
    %v1703 = vld [vmem:[#allocation10 + $0x180] sm:$0xff]
    %v1704 = vld [vmem:[#allocation10 + $0x188] sm:$0xff]
    %v1705 = vld [vmem:[#allocation10 + $0x190] sm:$0xff]
    %v1706 = vld [vmem:[#allocation10 + $0x198] sm:$0xff]
    %v1707 = vld [vmem:[#allocation10 + $0x1a0] sm:$0xff]
    %v1708 = vld [vmem:[#allocation10 + $0x1a8] sm:$0xff]
    %v1709 = vld [vmem:[#allocation10 + $0x1b0] sm:$0xff]
    %v1710 = vld [vmem:[#allocation10 + $0x1b8] sm:$0xff]
    %v1711 = vld [vmem:[#allocation10 + $0x1c0] sm:$0xff]
    %v1712 = vld [vmem:[#allocation10 + $0x1c8] sm:$0xff]
    %v1713 = vld [vmem:[#allocation10 + $0x1d0] sm:$0xff]
    %v1714 = vld [vmem:[#allocation10 + $0x1d8] sm:$0xff]
    %v1715 = vld [vmem:[#allocation10 + $0x1e0] sm:$0xff]
    %v1716 = vld [vmem:[#allocation10 + $0x1e8] sm:$0xff]
    %v1717 = vld [vmem:[#allocation10 + $0x1f0] sm:$0xff]
    %v1718 = vld [vmem:[#allocation10 + $0x1f8] sm:$0xff]
    %1719 = vmatprep.subr.mxu0 %v1656
    %1720 = vmatpush1.msra.mxu0 %v1655
    %1721 = vmatprep.subr.mxu0 %v1660
    %1722 = vmatpush1.msra.mxu0 %v1659
    %1723 = vmatprep.subr.mxu0 %v1664
    %1724 = vmatpush1.msra.mxu0 %v1663
    %1725 = vmatprep.subr.mxu0 %v1668
    %1726 = vmatpush1.msra.mxu0 %v1667
    %1727 = vmatprep.subr.mxu0 %v1672
    %1728 = vmatpush1.msra.mxu0 %v1671
    %1729 = vmatprep.subr.mxu0 %v1676
    %1730 = vmatpush1.msra.mxu0 %v1675
    %1731 = vmatprep.subr.mxu0 %v1680
    %1732 = vmatpush1.msra.mxu0 %v1679
    %1733 = vmatprep.subr.mxu0 %v1684
    %1734 = vmatpush1.msra.mxu0 %v1683
    %1735 = vmatprep.subr.mxu0 %v1688
    %1736 = vmatpush1.msra.mxu0 %v1687
    %1737 = vmatprep.subr.mxu0 %v1692
    %1738 = vmatpush1.msra.mxu0 %v1691
    %1739 = vmatprep.subr.mxu0 %v1696
    %1740 = vmatpush1.msra.mxu0 %v1695
    %1741 = vmatprep.subr.mxu0 %v1700
    %1742 = vmatpush1.msra.mxu0 %v1699
    %1743 = vmatprep.subr.mxu0 %v1704
    %1744 = vmatpush1.msra.mxu0 %v1703
    %1745 = vmatprep.subr.mxu0 %v1708
    %1746 = vmatpush1.msra.mxu0 %v1707
    %1747 = vmatprep.subr.mxu0 %v1712
    %1748 = vmatpush1.msra.mxu0 %v1711
    %1749 = vmatprep.subr.mxu0 %v1716
    %1750 = vmatpush1.msra.mxu0 %v1715
    %1751 = vmatprep.subr.mxu0 0.0
    %1752 = vmatpush1.msra.mxu0 0.0
    %1753 = vmatprep.subr.mxu0 0.0
    %1754 = vmatpush1.msra.mxu0 0.0
    %1755 = vmatprep.subr.mxu0 0.0
    %1756 = vmatpush1.msra.mxu0 0.0
    %1757 = vmatprep.subr.mxu0 0.0
    %1758 = vmatpush1.msra.mxu0 0.0
    %1759 = vmatprep.subr.mxu0 0.0
    %1760 = vmatpush1.msra.mxu0 0.0
    %1761 = vmatprep.subr.mxu0 0.0
    %1762 = vmatpush1.msra.mxu0 0.0
    %1763 = vmatprep.subr.mxu0 0.0
    %1764 = vmatpush1.msra.mxu0 0.0
    %1765 = vmatprep.subr.mxu0 0.0
    %1766 = vmatpush1.msra.mxu0 0.0
    %1767 = vmatprep.subr.mxu0 0.0
    %1768 = vmatpush1.msra.mxu0 0.0
    %1769 = vmatprep.subr.mxu0 0.0
    %1770 = vmatpush1.msra.mxu0 0.0
    %1771 = vmatprep.subr.mxu0 0.0
    %1772 = vmatpush1.msra.mxu0 0.0
    %1773 = vmatprep.subr.mxu0 0.0
    %1774 = vmatpush1.msra.mxu0 0.0
    %1775 = vmatprep.subr.mxu0 0.0
    %1776 = vmatpush1.msra.mxu0 0.0
    %1777 = vmatprep.subr.mxu0 0.0
    %1778 = vmatpush1.msra.mxu0 0.0
    %1779 = vmatprep.subr.mxu0 0.0
    %1780 = vmatpush1.msra.mxu0 0.0
    %1781 = vmatprep.subr.mxu0 0.0
    %1782 = vmatpush1.msra.mxu0 0.0
    %1783 = vmatprep.mubr.f32.mxu0 0.0
    %1784 = vmatmul.mubr.f32.gmra.mrb[0].mxu0 %v1654
    %v1785 = vpop.f32.mrb[0].mxu0
    %v1786 = vadd.f32 0.0, %v1785
    %v1787 = vpop.f32.mrb[0].mxu0
    %v1788 = vadd.f32 0.0, %v1787
    %1789 = vdwg.mxu0
    %1790 = vmatprep.subr.mxu0 %v1658
    %1791 = vmatpush1.msra.mxu0 %v1657
    %1792 = vmatprep.subr.mxu0 %v1662
    %1793 = vmatpush1.msra.mxu0 %v1661
    %1794 = vmatprep.subr.mxu0 %v1666
    %1795 = vmatpush1.msra.mxu0 %v1665
    %1796 = vmatprep.subr.mxu0 %v1670
    %1797 = vmatpush1.msra.mxu0 %v1669
    %1798 = vmatprep.subr.mxu0 %v1674
    %1799 = vmatpush1.msra.mxu0 %v1673
    %1800 = vmatprep.subr.mxu0 %v1678
    %1801 = vmatpush1.msra.mxu0 %v1677
    %1802 = vmatprep.subr.mxu0 %v1682
    %1803 = vmatpush1.msra.mxu0 %v1681
    %1804 = vmatprep.subr.mxu0 %v1686
    %1805 = vmatpush1.msra.mxu0 %v1685
    %1806 = vmatprep.subr.mxu0 %v1690
    %1807 = vmatpush1.msra.mxu0 %v1689
    %1808 = vmatprep.subr.mxu0 %v1694
    %1809 = vmatpush1.msra.mxu0 %v1693
    %1810 = vmatprep.subr.mxu0 %v1698
    %1811 = vmatpush1.msra.mxu0 %v1697
    %1812 = vmatprep.subr.mxu0 %v1702
    %1813 = vmatpush1.msra.mxu0 %v1701
    %1814 = vmatprep.subr.mxu0 %v1706
    %1815 = vmatpush1.msra.mxu0 %v1705
    %1816 = vmatprep.subr.mxu0 %v1710
    %1817 = vmatpush1.msra.mxu0 %v1709
    %1818 = vmatprep.subr.mxu0 %v1714
    %1819 = vmatpush1.msra.mxu0 %v1713
    %1820 = vmatprep.subr.mxu0 %v1718
    %1821 = vmatpush1.msra.mxu0 %v1717
    %1822 = vmatprep.subr.mxu0 0.0
    %1823 = vmatpush1.msra.mxu0 0.0
    %1824 = vmatprep.subr.mxu0 0.0
    %1825 = vmatpush1.msra.mxu0 0.0
    %1826 = vmatprep.subr.mxu0 0.0
    %1827 = vmatpush1.msra.mxu0 0.0
    %1828 = vmatprep.subr.mxu0 0.0
    %1829 = vmatpush1.msra.mxu0 0.0
    %1830 = vmatprep.subr.mxu0 0.0
    %1831 = vmatpush1.msra.mxu0 0.0
    %1832 = vmatprep.subr.mxu0 0.0
    %1833 = vmatpush1.msra.mxu0 0.0
    %1834 = vmatprep.subr.mxu0 0.0
    %1835 = vmatpush1.msra.mxu0 0.0
    %1836 = vmatprep.subr.mxu0 0.0
    %1837 = vmatpush1.msra.mxu0 0.0
    %1838 = vmatprep.subr.mxu0 0.0
    %1839 = vmatpush1.msra.mxu0 0.0
    %1840 = vmatprep.subr.mxu0 0.0
    %1841 = vmatpush1.msra.mxu0 0.0
    %1842 = vmatprep.subr.mxu0 0.0
    %1843 = vmatpush1.msra.mxu0 0.0
    %1844 = vmatprep.subr.mxu0 0.0
    %1845 = vmatpush1.msra.mxu0 0.0
    %1846 = vmatprep.subr.mxu0 0.0
    %1847 = vmatpush1.msra.mxu0 0.0
    %1848 = vmatprep.subr.mxu0 0.0
    %1849 = vmatpush1.msra.mxu0 0.0
    %1850 = vmatprep.subr.mxu0 0.0
    %1851 = vmatpush1.msra.mxu0 0.0
    %1852 = vmatprep.subr.mxu0 0.0
    %1853 = vmatpush1.msra.mxu0 0.0
    %1854 = vmatprep.mubr.f32.mxu0 0.0
    %1855 = vmatmul.mubr.f32.gmra.mrb[0].mxu0 %v1654
    %v1856 = vpop.f32.mrb[0].mxu0
    %v1857 = vadd.f32 0.0, %v1856
    %v1858 = vpop.f32.mrb[0].mxu0
    %v1859 = vadd.f32 0.0, %v1858
    %1860 = vdwg.mxu0
    %v1861 = vadd.f32 %v1650, %v1786
    %v1862 = vadd.f32 %v1651, %v1788
    %v1863 = vadd.f32 %v1652, %v1857
    %v1864 = vadd.f32 %v1653, %v1859
    %v1865 = vxor.u32 %v1861, 2147483648
    %v1866 = vmul.f32 %v1865, 1.442695
    %v1867 = vpow.pop %v1866
    %v1868 = vadd.f32 %v1867, 1.0
    %v1869 = vrcp.pop %v1868
    %v1870 = vmul.f32 1.0, %v1869
    %v1871 = vxor.u32 %v1862, 2147483648
    %v1872 = vmul.f32 %v1871, 1.442695
    %v1873 = vpow.pop %v1872
    %v1874 = vadd.f32 %v1873, 1.0
    %v1875 = vrcp.pop %v1874
    %v1876 = vmul.f32 1.0, %v1875
    %v1877 = vtanh.pop %v1863
    %v1878 = vxor.u32 %v1864, 2147483648
    %v1879 = vmul.f32 %v1878, 1.442695
    %v1880 = vpow.pop %v1879
    %v1881 = vadd.f32 %v1880, 1.0
    %v1882 = vrcp.pop %v1881
    %v1883 = vmul.f32 1.0, %v1882
    %v1884 = vld [vmem:[#allocation4] sm:$0xff]
    %v1885 = vmul.f32 %v1876, %v1884
    %v1886 = vmul.f32 %v1870, %v1877
    %v1887 = vadd.f32 %v1885, %v1886
    %v1888 = vtanh.pop %v1887
    %v1889 = vmul.f32 %v1883, %v1888
    %1890 = vst [vmem:[#allocation3] sm:$0xff] %v1889
    %1891 = vst [vmem:[#allocation4] sm:$0xff] %v1887
    %s1892 = scalar_lea.vmem [#allocation11], 40
    %1893 = vst [vmem:[%s1892] sm:$0xff] %v1889
    %s1894 = smul.u32 6, 4
    %s1895 = smul.addr %s1894, 8
    %s1896 = scalar_lea.vmem [#allocation2], %s1895
    %v1897 = vld [vmem:[%s1896] sm:$0xff]
    %v1898 = vld [vmem:[%s1896 + $0x8] sm:$0xff]
    %v1899 = vld [vmem:[%s1896 + $0x10] sm:$0xff]
    %v1900 = vld [vmem:[%s1896 + $0x18] sm:$0xff]
    %v1901 = vld [vmem:[#allocation3] sm:$0xff]
    %v1902 = vld [vmem:[#allocation10] sm:$0xff]
    %v1903 = vld [vmem:[#allocation10 + $0x8] sm:$0xff]
    %v1904 = vld [vmem:[#allocation10 + $0x10] sm:$0xff]
    %v1905 = vld [vmem:[#allocation10 + $0x18] sm:$0xff]
    %v1906 = vld [vmem:[#allocation10 + $0x20] sm:$0xff]
    %v1907 = vld [vmem:[#allocation10 + $0x28] sm:$0xff]
    %v1908 = vld [vmem:[#allocation10 + $0x30] sm:$0xff]
    %v1909 = vld [vmem:[#allocation10 + $0x38] sm:$0xff]
    %v1910 = vld [vmem:[#allocation10 + $0x40] sm:$0xff]
    %v1911 = vld [vmem:[#allocation10 + $0x48] sm:$0xff]
    %v1912 = vld [vmem:[#allocation10 + $0x50] sm:$0xff]
    %v1913 = vld [vmem:[#allocation10 + $0x58] sm:$0xff]
    %v1914 = vld [vmem:[#allocation10 + $0x60] sm:$0xff]
    %v1915 = vld [vmem:[#allocation10 + $0x68] sm:$0xff]
    %v1916 = vld [vmem:[#allocation10 + $0x70] sm:$0xff]
    %v1917 = vld [vmem:[#allocation10 + $0x78] sm:$0xff]
    %v1918 = vld [vmem:[#allocation10 + $0x80] sm:$0xff]
    %v1919 = vld [vmem:[#allocation10 + $0x88] sm:$0xff]
    %v1920 = vld [vmem:[#allocation10 + $0x90] sm:$0xff]
    %v1921 = vld [vmem:[#allocation10 + $0x98] sm:$0xff]
    %v1922 = vld [vmem:[#allocation10 + $0xa0] sm:$0xff]
    %v1923 = vld [vmem:[#allocation10 + $0xa8] sm:$0xff]
    %v1924 = vld [vmem:[#allocation10 + $0xb0] sm:$0xff]
    %v1925 = vld [vmem:[#allocation10 + $0xb8] sm:$0xff]
    %v1926 = vld [vmem:[#allocation10 + $0xc0] sm:$0xff]
    %v1927 = vld [vmem:[#allocation10 + $0xc8] sm:$0xff]
    %v1928 = vld [vmem:[#allocation10 + $0xd0] sm:$0xff]
    %v1929 = vld [vmem:[#allocation10 + $0xd8] sm:$0xff]
    %v1930 = vld [vmem:[#allocation10 + $0xe0] sm:$0xff]
    %v1931 = vld [vmem:[#allocation10 + $0xe8] sm:$0xff]
    %v1932 = vld [vmem:[#allocation10 + $0xf0] sm:$0xff]
    %v1933 = vld [vmem:[#allocation10 + $0xf8] sm:$0xff]
    %v1934 = vld [vmem:[#allocation10 + $0x100] sm:$0xff]
    %v1935 = vld [vmem:[#allocation10 + $0x108] sm:$0xff]
    %v1936 = vld [vmem:[#allocation10 + $0x110] sm:$0xff]
    %v1937 = vld [vmem:[#allocation10 + $0x118] sm:$0xff]
    %v1938 = vld [vmem:[#allocation10 + $0x120] sm:$0xff]
    %v1939 = vld [vmem:[#allocation10 + $0x128] sm:$0xff]
    %v1940 = vld [vmem:[#allocation10 + $0x130] sm:$0xff]
    %v1941 = vld [vmem:[#allocation10 + $0x138] sm:$0xff]
    %v1942 = vld [vmem:[#allocation10 + $0x140] sm:$0xff]
    %v1943 = vld [vmem:[#allocation10 + $0x148] sm:$0xff]
    %v1944 = vld [vmem:[#allocation10 + $0x150] sm:$0xff]
    %v1945 = vld [vmem:[#allocation10 + $0x158] sm:$0xff]
    %v1946 = vld [vmem:[#allocation10 + $0x160] sm:$0xff]
    %v1947 = vld [vmem:[#allocation10 + $0x168] sm:$0xff]
    %v1948 = vld [vmem:[#allocation10 + $0x170] sm:$0xff]
    %v1949 = vld [vmem:[#allocation10 + $0x178] sm:$0xff]
    %v1950 = vld [vmem:[#allocation10 + $0x180] sm:$0xff]
    %v1951 = vld [vmem:[#allocation10 + $0x188] sm:$0xff]
    %v1952 = vld [vmem:[#allocation10 + $0x190] sm:$0xff]
    %v1953 = vld [vmem:[#allocation10 + $0x198] sm:$0xff]
    %v1954 = vld [vmem:[#allocation10 + $0x1a0] sm:$0xff]
    %v1955 = vld [vmem:[#allocation10 + $0x1a8] sm:$0xff]
    %v1956 = vld [vmem:[#allocation10 + $0x1b0] sm:$0xff]
    %v1957 = vld [vmem:[#allocation10 + $0x1b8] sm:$0xff]
    %v1958 = vld [vmem:[#allocation10 + $0x1c0] sm:$0xff]
    %v1959 = vld [vmem:[#allocation10 + $0x1c8] sm:$0xff]
    %v1960 = vld [vmem:[#allocation10 + $0x1d0] sm:$0xff]
    %v1961 = vld [vmem:[#allocation10 + $0x1d8] sm:$0xff]
    %v1962 = vld [vmem:[#allocation10 + $0x1e0] sm:$0xff]
    %v1963 = vld [vmem:[#allocation10 + $0x1e8] sm:$0xff]
    %v1964 = vld [vmem:[#allocation10 + $0x1f0] sm:$0xff]
    %v1965 = vld [vmem:[#allocation10 + $0x1f8] sm:$0xff]
    %1966 = vmatprep.subr.mxu0 %v1903
    %1967 = vmatpush1.msra.mxu0 %v1902
    %1968 = vmatprep.subr.mxu0 %v1907
    %1969 = vmatpush1.msra.mxu0 %v1906
    %1970 = vmatprep.subr.mxu0 %v1911
    %1971 = vmatpush1.msra.mxu0 %v1910
    %1972 = vmatprep.subr.mxu0 %v1915
    %1973 = vmatpush1.msra.mxu0 %v1914
    %1974 = vmatprep.subr.mxu0 %v1919
    %1975 = vmatpush1.msra.mxu0 %v1918
    %1976 = vmatprep.subr.mxu0 %v1923
    %1977 = vmatpush1.msra.mxu0 %v1922
    %1978 = vmatprep.subr.mxu0 %v1927
    %1979 = vmatpush1.msra.mxu0 %v1926
    %1980 = vmatprep.subr.mxu0 %v1931
    %1981 = vmatpush1.msra.mxu0 %v1930
    %1982 = vmatprep.subr.mxu0 %v1935
    %1983 = vmatpush1.msra.mxu0 %v1934
    %1984 = vmatprep.subr.mxu0 %v1939
    %1985 = vmatpush1.msra.mxu0 %v1938
    %1986 = vmatprep.subr.mxu0 %v1943
    %1987 = vmatpush1.msra.mxu0 %v1942
    %1988 = vmatprep.subr.mxu0 %v1947
    %1989 = vmatpush1.msra.mxu0 %v1946
    %1990 = vmatprep.subr.mxu0 %v1951
    %1991 = vmatpush1.msra.mxu0 %v1950
    %1992 = vmatprep.subr.mxu0 %v1955
    %1993 = vmatpush1.msra.mxu0 %v1954
    %1994 = vmatprep.subr.mxu0 %v1959
    %1995 = vmatpush1.msra.mxu0 %v1958
    %1996 = vmatprep.subr.mxu0 %v1963
    %1997 = vmatpush1.msra.mxu0 %v1962
    %1998 = vmatprep.subr.mxu0 0.0
    %1999 = vmatpush1.msra.mxu0 0.0
    %2000 = vmatprep.subr.mxu0 0.0
    %2001 = vmatpush1.msra.mxu0 0.0
    %2002 = vmatprep.subr.mxu0 0.0
    %2003 = vmatpush1.msra.mxu0 0.0
    %2004 = vmatprep.subr.mxu0 0.0
    %2005 = vmatpush1.msra.mxu0 0.0
    %2006 = vmatprep.subr.mxu0 0.0
    %2007 = vmatpush1.msra.mxu0 0.0
    %2008 = vmatprep.subr.mxu0 0.0
    %2009 = vmatpush1.msra.mxu0 0.0
    %2010 = vmatprep.subr.mxu0 0.0
    %2011 = vmatpush1.msra.mxu0 0.0
    %2012 = vmatprep.subr.mxu0 0.0
    %2013 = vmatpush1.msra.mxu0 0.0
    %2014 = vmatprep.subr.mxu0 0.0
    %2015 = vmatpush1.msra.mxu0 0.0
    %2016 = vmatprep.subr.mxu0 0.0
    %2017 = vmatpush1.msra.mxu0 0.0
    %2018 = vmatprep.subr.mxu0 0.0
    %2019 = vmatpush1.msra.mxu0 0.0
    %2020 = vmatprep.subr.mxu0 0.0
    %2021 = vmatpush1.msra.mxu0 0.0
    %2022 = vmatprep.subr.mxu0 0.0
    %2023 = vmatpush1.msra.mxu0 0.0
    %2024 = vmatprep.subr.mxu0 0.0
    %2025 = vmatpush1.msra.mxu0 0.0
    %2026 = vmatprep.subr.mxu0 0.0
    %2027 = vmatpush1.msra.mxu0 0.0
    %2028 = vmatprep.subr.mxu0 0.0
    %2029 = vmatpush1.msra.mxu0 0.0
    %2030 = vmatprep.mubr.f32.mxu0 0.0
    %2031 = vmatmul.mubr.f32.gmra.mrb[0].mxu0 %v1901
    %v2032 = vpop.f32.mrb[0].mxu0
    %v2033 = vadd.f32 0.0, %v2032
    %v2034 = vpop.f32.mrb[0].mxu0
    %v2035 = vadd.f32 0.0, %v2034
    %2036 = vdwg.mxu0
    %2037 = vmatprep.subr.mxu0 %v1905
    %2038 = vmatpush1.msra.mxu0 %v1904
    %2039 = vmatprep.subr.mxu0 %v1909
    %2040 = vmatpush1.msra.mxu0 %v1908
    %2041 = vmatprep.subr.mxu0 %v1913
    %2042 = vmatpush1.msra.mxu0 %v1912
    %2043 = vmatprep.subr.mxu0 %v1917
    %2044 = vmatpush1.msra.mxu0 %v1916
    %2045 = vmatprep.subr.mxu0 %v1921
    %2046 = vmatpush1.msra.mxu0 %v1920
    %2047 = vmatprep.subr.mxu0 %v1925
    %2048 = vmatpush1.msra.mxu0 %v1924
    %2049 = vmatprep.subr.mxu0 %v1929
    %2050 = vmatpush1.msra.mxu0 %v1928
    %2051 = vmatprep.subr.mxu0 %v1933
    %2052 = vmatpush1.msra.mxu0 %v1932
    %2053 = vmatprep.subr.mxu0 %v1937
    %2054 = vmatpush1.msra.mxu0 %v1936
    %2055 = vmatprep.subr.mxu0 %v1941
    %2056 = vmatpush1.msra.mxu0 %v1940
    %2057 = vmatprep.subr.mxu0 %v1945
    %2058 = vmatpush1.msra.mxu0 %v1944
    %2059 = vmatprep.subr.mxu0 %v1949
    %2060 = vmatpush1.msra.mxu0 %v1948
    %2061 = vmatprep.subr.mxu0 %v1953
    %2062 = vmatpush1.msra.mxu0 %v1952
    %2063 = vmatprep.subr.mxu0 %v1957
    %2064 = vmatpush1.msra.mxu0 %v1956
    %2065 = vmatprep.subr.mxu0 %v1961
    %2066 = vmatpush1.msra.mxu0 %v1960
    %2067 = vmatprep.subr.mxu0 %v1965
    %2068 = vmatpush1.msra.mxu0 %v1964
    %2069 = vmatprep.subr.mxu0 0.0
    %2070 = vmatpush1.msra.mxu0 0.0
    %2071 = vmatprep.subr.mxu0 0.0
    %2072 = vmatpush1.msra.mxu0 0.0
    %2073 = vmatprep.subr.mxu0 0.0
    %2074 = vmatpush1.msra.mxu0 0.0
    %2075 = vmatprep.subr.mxu0 0.0
    %2076 = vmatpush1.msra.mxu0 0.0
    %2077 = vmatprep.subr.mxu0 0.0
    %2078 = vmatpush1.msra.mxu0 0.0
    %2079 = vmatprep.subr.mxu0 0.0
    %2080 = vmatpush1.msra.mxu0 0.0
    %2081 = vmatprep.subr.mxu0 0.0
    %2082 = vmatpush1.msra.mxu0 0.0
    %2083 = vmatprep.subr.mxu0 0.0
    %2084 = vmatpush1.msra.mxu0 0.0
    %2085 = vmatprep.subr.mxu0 0.0
    %2086 = vmatpush1.msra.mxu0 0.0
    %2087 = vmatprep.subr.mxu0 0.0
    %2088 = vmatpush1.msra.mxu0 0.0
    %2089 = vmatprep.subr.mxu0 0.0
    %2090 = vmatpush1.msra.mxu0 0.0
    %2091 = vmatprep.subr.mxu0 0.0
    %2092 = vmatpush1.msra.mxu0 0.0
    %2093 = vmatprep.subr.mxu0 0.0
    %2094 = vmatpush1.msra.mxu0 0.0
    %2095 = vmatprep.subr.mxu0 0.0
    %2096 = vmatpush1.msra.mxu0 0.0
    %2097 = vmatprep.subr.mxu0 0.0
    %2098 = vmatpush1.msra.mxu0 0.0
    %2099 = vmatprep.subr.mxu0 0.0
    %2100 = vmatpush1.msra.mxu0 0.0
    %2101 = vmatprep.mubr.f32.mxu0 0.0
    %2102 = vmatmul.mubr.f32.gmra.mrb[0].mxu0 %v1901
    %v2103 = vpop.f32.mrb[0].mxu0
    %v2104 = vadd.f32 0.0, %v2103
    %v2105 = vpop.f32.mrb[0].mxu0
    %v2106 = vadd.f32 0.0, %v2105
    %2107 = vdwg.mxu0
    %v2108 = vadd.f32 %v1897, %v2033
    %v2109 = vadd.f32 %v1898, %v2035
    %v2110 = vadd.f32 %v1899, %v2104
    %v2111 = vadd.f32 %v1900, %v2106
    %v2112 = vxor.u32 %v2108, 2147483648
    %v2113 = vmul.f32 %v2112, 1.442695
    %v2114 = vpow.pop %v2113
    %v2115 = vadd.f32 %v2114, 1.0
    %v2116 = vrcp.pop %v2115
    %v2117 = vmul.f32 1.0, %v2116
    %v2118 = vxor.u32 %v2109, 2147483648
    %v2119 = vmul.f32 %v2118, 1.442695
    %v2120 = vpow.pop %v2119
    %v2121 = vadd.f32 %v2120, 1.0
    %v2122 = vrcp.pop %v2121
    %v2123 = vmul.f32 1.0, %v2122
    %v2124 = vtanh.pop %v2110
    %v2125 = vxor.u32 %v2111, 2147483648
    %v2126 = vmul.f32 %v2125, 1.442695
    %v2127 = vpow.pop %v2126
    %v2128 = vadd.f32 %v2127, 1.0
    %v2129 = vrcp.pop %v2128
    %v2130 = vmul.f32 1.0, %v2129
    %v2131 = vld [vmem:[#allocation4] sm:$0xff]
    %v2132 = vmul.f32 %v2123, %v2131
    %v2133 = vmul.f32 %v2117, %v2124
    %v2134 = vadd.f32 %v2132, %v2133
    %v2135 = vtanh.pop %v2134
    %v2136 = vmul.f32 %v2130, %v2135
    %2137 = vst [vmem:[#allocation3] sm:$0xff] %v2136
    %2138 = vst [vmem:[#allocation4] sm:$0xff] %v2134
    %s2139 = scalar_lea.vmem [#allocation11], 48
    %2140 = vst [vmem:[%s2139] sm:$0xff] %v2136
    %s2141 = smul.u32 7, 4
    %s2142 = smul.addr %s2141, 8
    %s2143 = scalar_lea.vmem [#allocation2], %s2142
    %v2144 = vld [vmem:[%s2143] sm:$0xff]
    %v2145 = vld [vmem:[%s2143 + $0x8] sm:$0xff]
    %v2146 = vld [vmem:[%s2143 + $0x10] sm:$0xff]
    %v2147 = vld [vmem:[%s2143 + $0x18] sm:$0xff]
    %v2148 = vld [vmem:[#allocation3] sm:$0xff]
    %v2149 = vld [vmem:[#allocation10] sm:$0xff]
    %v2150 = vld [vmem:[#allocation10 + $0x8] sm:$0xff]
    %v2151 = vld [vmem:[#allocation10 + $0x10] sm:$0xff]
    %v2152 = vld [vmem:[#allocation10 + $0x18] sm:$0xff]
    %v2153 = vld [vmem:[#allocation10 + $0x20] sm:$0xff]
    %v2154 = vld [vmem:[#allocation10 + $0x28] sm:$0xff]
    %v2155 = vld [vmem:[#allocation10 + $0x30] sm:$0xff]
    %v2156 = vld [vmem:[#allocation10 + $0x38] sm:$0xff]
    %v2157 = vld [vmem:[#allocation10 + $0x40] sm:$0xff]
    %v2158 = vld [vmem:[#allocation10 + $0x48] sm:$0xff]
    %v2159 = vld [vmem:[#allocation10 + $0x50] sm:$0xff]
    %v2160 = vld [vmem:[#allocation10 + $0x58] sm:$0xff]
    %v2161 = vld [vmem:[#allocation10 + $0x60] sm:$0xff]
    %v2162 = vld [vmem:[#allocation10 + $0x68] sm:$0xff]
    %v2163 = vld [vmem:[#allocation10 + $0x70] sm:$0xff]
    %v2164 = vld [vmem:[#allocation10 + $0x78] sm:$0xff]
    %v2165 = vld [vmem:[#allocation10 + $0x80] sm:$0xff]
    %v2166 = vld [vmem:[#allocation10 + $0x88] sm:$0xff]
    %v2167 = vld [vmem:[#allocation10 + $0x90] sm:$0xff]
    %v2168 = vld [vmem:[#allocation10 + $0x98] sm:$0xff]
    %v2169 = vld [vmem:[#allocation10 + $0xa0] sm:$0xff]
    %v2170 = vld [vmem:[#allocation10 + $0xa8] sm:$0xff]
    %v2171 = vld [vmem:[#allocation10 + $0xb0] sm:$0xff]
    %v2172 = vld [vmem:[#allocation10 + $0xb8] sm:$0xff]
    %v2173 = vld [vmem:[#allocation10 + $0xc0] sm:$0xff]
    %v2174 = vld [vmem:[#allocation10 + $0xc8] sm:$0xff]
    %v2175 = vld [vmem:[#allocation10 + $0xd0] sm:$0xff]
    %v2176 = vld [vmem:[#allocation10 + $0xd8] sm:$0xff]
    %v2177 = vld [vmem:[#allocation10 + $0xe0] sm:$0xff]
    %v2178 = vld [vmem:[#allocation10 + $0xe8] sm:$0xff]
    %v2179 = vld [vmem:[#allocation10 + $0xf0] sm:$0xff]
    %v2180 = vld [vmem:[#allocation10 + $0xf8] sm:$0xff]
    %v2181 = vld [vmem:[#allocation10 + $0x100] sm:$0xff]
    %v2182 = vld [vmem:[#allocation10 + $0x108] sm:$0xff]
    %v2183 = vld [vmem:[#allocation10 + $0x110] sm:$0xff]
    %v2184 = vld [vmem:[#allocation10 + $0x118] sm:$0xff]
    %v2185 = vld [vmem:[#allocation10 + $0x120] sm:$0xff]
    %v2186 = vld [vmem:[#allocation10 + $0x128] sm:$0xff]
    %v2187 = vld [vmem:[#allocation10 + $0x130] sm:$0xff]
    %v2188 = vld [vmem:[#allocation10 + $0x138] sm:$0xff]
    %v2189 = vld [vmem:[#allocation10 + $0x140] sm:$0xff]
    %v2190 = vld [vmem:[#allocation10 + $0x148] sm:$0xff]
    %v2191 = vld [vmem:[#allocation10 + $0x150] sm:$0xff]
    %v2192 = vld [vmem:[#allocation10 + $0x158] sm:$0xff]
    %v2193 = vld [vmem:[#allocation10 + $0x160] sm:$0xff]
    %v2194 = vld [vmem:[#allocation10 + $0x168] sm:$0xff]
    %v2195 = vld [vmem:[#allocation10 + $0x170] sm:$0xff]
    %v2196 = vld [vmem:[#allocation10 + $0x178] sm:$0xff]
    %v2197 = vld [vmem:[#allocation10 + $0x180] sm:$0xff]
    %v2198 = vld [vmem:[#allocation10 + $0x188] sm:$0xff]
    %v2199 = vld [vmem:[#allocation10 + $0x190] sm:$0xff]
    %v2200 = vld [vmem:[#allocation10 + $0x198] sm:$0xff]
    %v2201 = vld [vmem:[#allocation10 + $0x1a0] sm:$0xff]
    %v2202 = vld [vmem:[#allocation10 + $0x1a8] sm:$0xff]
    %v2203 = vld [vmem:[#allocation10 + $0x1b0] sm:$0xff]
    %v2204 = vld [vmem:[#allocation10 + $0x1b8] sm:$0xff]
    %v2205 = vld [vmem:[#allocation10 + $0x1c0] sm:$0xff]
    %v2206 = vld [vmem:[#allocation10 + $0x1c8] sm:$0xff]
    %v2207 = vld [vmem:[#allocation10 + $0x1d0] sm:$0xff]
    %v2208 = vld [vmem:[#allocation10 + $0x1d8] sm:$0xff]
    %v2209 = vld [vmem:[#allocation10 + $0x1e0] sm:$0xff]
    %v2210 = vld [vmem:[#allocation10 + $0x1e8] sm:$0xff]
    %v2211 = vld [vmem:[#allocation10 + $0x1f0] sm:$0xff]
    %v2212 = vld [vmem:[#allocation10 + $0x1f8] sm:$0xff]
    %2213 = vmatprep.subr.mxu0 %v2150
    %2214 = vmatpush1.msra.mxu0 %v2149
    %2215 = vmatprep.subr.mxu0 %v2154
    %2216 = vmatpush1.msra.mxu0 %v2153
    %2217 = vmatprep.subr.mxu0 %v2158
    %2218 = vmatpush1.msra.mxu0 %v2157
    %2219 = vmatprep.subr.mxu0 %v2162
    %2220 = vmatpush1.msra.mxu0 %v2161
    %2221 = vmatprep.subr.mxu0 %v2166
    %2222 = vmatpush1.msra.mxu0 %v2165
    %2223 = vmatprep.subr.mxu0 %v2170
    %2224 = vmatpush1.msra.mxu0 %v2169
    %2225 = vmatprep.subr.mxu0 %v2174
    %2226 = vmatpush1.msra.mxu0 %v2173
    %2227 = vmatprep.subr.mxu0 %v2178
    %2228 = vmatpush1.msra.mxu0 %v2177
    %2229 = vmatprep.subr.mxu0 %v2182
    %2230 = vmatpush1.msra.mxu0 %v2181
    %2231 = vmatprep.subr.mxu0 %v2186
    %2232 = vmatpush1.msra.mxu0 %v2185
    %2233 = vmatprep.subr.mxu0 %v2190
    %2234 = vmatpush1.msra.mxu0 %v2189
    %2235 = vmatprep.subr.mxu0 %v2194
    %2236 = vmatpush1.msra.mxu0 %v2193
    %2237 = vmatprep.subr.mxu0 %v2198
    %2238 = vmatpush1.msra.mxu0 %v2197
    %2239 = vmatprep.subr.mxu0 %v2202
    %2240 = vmatpush1.msra.mxu0 %v2201
    %2241 = vmatprep.subr.mxu0 %v2206
    %2242 = vmatpush1.msra.mxu0 %v2205
    %2243 = vmatprep.subr.mxu0 %v2210
    %2244 = vmatpush1.msra.mxu0 %v2209
    %2245 = vmatprep.subr.mxu0 0.0
    %2246 = vmatpush1.msra.mxu0 0.0
    %2247 = vmatprep.subr.mxu0 0.0
    %2248 = vmatpush1.msra.mxu0 0.0
    %2249 = vmatprep.subr.mxu0 0.0
    %2250 = vmatpush1.msra.mxu0 0.0
    %2251 = vmatprep.subr.mxu0 0.0
    %2252 = vmatpush1.msra.mxu0 0.0
    %2253 = vmatprep.subr.mxu0 0.0
    %2254 = vmatpush1.msra.mxu0 0.0
    %2255 = vmatprep.subr.mxu0 0.0
    %2256 = vmatpush1.msra.mxu0 0.0
    %2257 = vmatprep.subr.mxu0 0.0
    %2258 = vmatpush1.msra.mxu0 0.0
    %2259 = vmatprep.subr.mxu0 0.0
    %2260 = vmatpush1.msra.mxu0 0.0
    %2261 = vmatprep.subr.mxu0 0.0
    %2262 = vmatpush1.msra.mxu0 0.0
    %2263 = vmatprep.subr.mxu0 0.0
    %2264 = vmatpush1.msra.mxu0 0.0
    %2265 = vmatprep.subr.mxu0 0.0
    %2266 = vmatpush1.msra.mxu0 0.0
    %2267 = vmatprep.subr.mxu0 0.0
    %2268 = vmatpush1.msra.mxu0 0.0
    %2269 = vmatprep.subr.mxu0 0.0
    %2270 = vmatpush1.msra.mxu0 0.0
    %2271 = vmatprep.subr.mxu0 0.0
    %2272 = vmatpush1.msra.mxu0 0.0
    %2273 = vmatprep.subr.mxu0 0.0
    %2274 = vmatpush1.msra.mxu0 0.0
    %2275 = vmatprep.subr.mxu0 0.0
    %2276 = vmatpush1.msra.mxu0 0.0
    %2277 = vmatprep.mubr.f32.mxu0 0.0
    %2278 = vmatmul.mubr.f32.gmra.mrb[0].mxu0 %v2148
    %v2279 = vpop.f32.mrb[0].mxu0
    %v2280 = vadd.f32 0.0, %v2279
    %v2281 = vpop.f32.mrb[0].mxu0
    %v2282 = vadd.f32 0.0, %v2281
    %2283 = vdwg.mxu0
    %2284 = vmatprep.subr.mxu0 %v2152
    %2285 = vmatpush1.msra.mxu0 %v2151
    %2286 = vmatprep.subr.mxu0 %v2156
    %2287 = vmatpush1.msra.mxu0 %v2155
    %2288 = vmatprep.subr.mxu0 %v2160
    %2289 = vmatpush1.msra.mxu0 %v2159
    %2290 = vmatprep.subr.mxu0 %v2164
    %2291 = vmatpush1.msra.mxu0 %v2163
    %2292 = vmatprep.subr.mxu0 %v2168
    %2293 = vmatpush1.msra.mxu0 %v2167
    %2294 = vmatprep.subr.mxu0 %v2172
    %2295 = vmatpush1.msra.mxu0 %v2171
    %2296 = vmatprep.subr.mxu0 %v2176
    %2297 = vmatpush1.msra.mxu0 %v2175
    %2298 = vmatprep.subr.mxu0 %v2180
    %2299 = vmatpush1.msra.mxu0 %v2179
    %2300 = vmatprep.subr.mxu0 %v2184
    %2301 = vmatpush1.msra.mxu0 %v2183
    %2302 = vmatprep.subr.mxu0 %v2188
    %2303 = vmatpush1.msra.mxu0 %v2187
    %2304 = vmatprep.subr.mxu0 %v2192
    %2305 = vmatpush1.msra.mxu0 %v2191
    %2306 = vmatprep.subr.mxu0 %v2196
    %2307 = vmatpush1.msra.mxu0 %v2195
    %2308 = vmatprep.subr.mxu0 %v2200
    %2309 = vmatpush1.msra.mxu0 %v2199
    %2310 = vmatprep.subr.mxu0 %v2204
    %2311 = vmatpush1.msra.mxu0 %v2203
    %2312 = vmatprep.subr.mxu0 %v2208
    %2313 = vmatpush1.msra.mxu0 %v2207
    %2314 = vmatprep.subr.mxu0 %v2212
    %2315 = vmatpush1.msra.mxu0 %v2211
    %2316 = vmatprep.subr.mxu0 0.0
    %2317 = vmatpush1.msra.mxu0 0.0
    %2318 = vmatprep.subr.mxu0 0.0
    %2319 = vmatpush1.msra.mxu0 0.0
    %2320 = vmatprep.subr.mxu0 0.0
    %2321 = vmatpush1.msra.mxu0 0.0
    %2322 = vmatprep.subr.mxu0 0.0
    %2323 = vmatpush1.msra.mxu0 0.0
    %2324 = vmatprep.subr.mxu0 0.0
    %2325 = vmatpush1.msra.mxu0 0.0
    %2326 = vmatprep.subr.mxu0 0.0
    %2327 = vmatpush1.msra.mxu0 0.0
    %2328 = vmatprep.subr.mxu0 0.0
    %2329 = vmatpush1.msra.mxu0 0.0
    %2330 = vmatprep.subr.mxu0 0.0
    %2331 = vmatpush1.msra.mxu0 0.0
    %2332 = vmatprep.subr.mxu0 0.0
    %2333 = vmatpush1.msra.mxu0 0.0
    %2334 = vmatprep.subr.mxu0 0.0
    %2335 = vmatpush1.msra.mxu0 0.0
    %2336 = vmatprep.subr.mxu0 0.0
    %2337 = vmatpush1.msra.mxu0 0.0
    %2338 = vmatprep.subr.mxu0 0.0
    %2339 = vmatpush1.msra.mxu0 0.0
    %2340 = vmatprep.subr.mxu0 0.0
    %2341 = vmatpush1.msra.mxu0 0.0
    %2342 = vmatprep.subr.mxu0 0.0
    %2343 = vmatpush1.msra.mxu0 0.0
    %2344 = vmatprep.subr.mxu0 0.0
    %2345 = vmatpush1.msra.mxu0 0.0
    %2346 = vmatprep.subr.mxu0 0.0
    %2347 = vmatpush1.msra.mxu0 0.0
    %2348 = vmatprep.mubr.f32.mxu0 0.0
    %2349 = vmatmul.mubr.f32.gmra.mrb[0].mxu0 %v2148
    %v2350 = vpop.f32.mrb[0].mxu0
    %v2351 = vadd.f32 0.0, %v2350
    %v2352 = vpop.f32.mrb[0].mxu0
    %v2353 = vadd.f32 0.0, %v2352
    %2354 = vdwg.mxu0
    %v2355 = vadd.f32 %v2144, %v2280
    %v2356 = vadd.f32 %v2145, %v2282
    %v2357 = vadd.f32 %v2146, %v2351
    %v2358 = vadd.f32 %v2147, %v2353
    %v2359 = vxor.u32 %v2355, 2147483648
    %v2360 = vmul.f32 %v2359, 1.442695
    %v2361 = vpow.pop %v2360
    %v2362 = vadd.f32 %v2361, 1.0
    %v2363 = vrcp.pop %v2362
    %v2364 = vmul.f32 1.0, %v2363
    %v2365 = vxor.u32 %v2356, 2147483648
    %v2366 = vmul.f32 %v2365, 1.442695
    %v2367 = vpow.pop %v2366
    %v2368 = vadd.f32 %v2367, 1.0
    %v2369 = vrcp.pop %v2368
    %v2370 = vmul.f32 1.0, %v2369
    %v2371 = vtanh.pop %v2357
    %v2372 = vxor.u32 %v2358, 2147483648
    %v2373 = vmul.f32 %v2372, 1.442695
    %v2374 = vpow.pop %v2373
    %v2375 = vadd.f32 %v2374, 1.0
    %v2376 = vrcp.pop %v2375
    %v2377 = vmul.f32 1.0, %v2376
    %v2378 = vld [vmem:[#allocation4] sm:$0xff]
    %v2379 = vmul.f32 %v2370, %v2378
    %v2380 = vmul.f32 %v2364, %v2371
    %v2381 = vadd.f32 %v2379, %v2380
    %v2382 = vtanh.pop %v2381
    %v2383 = vmul.f32 %v2377, %v2382
    %2384 = vst [vmem:[#allocation3] sm:$0xff] %v2383
    %2385 = vst [vmem:[#allocation4] sm:$0xff] %v2381
    %s2386 = scalar_lea.vmem [#allocation11], 56
    %2387 = vst [vmem:[%s2386] sm:$0xff] %v2383
    // Predicated region
    $region30: #{tpu_custom_call.1} parent=1 // pred_check
      _
    $region31: #{tpu_custom_call.1} parent=1 // pred_check_branch
      %2389 = sbr.rel (0) target = $region33
    $region32: #{tpu_custom_call.1} parent=1 // pred_region
      %s2391 = ssub.s32 1024, 1024
      %2392 = vsyncadd [#allocation7], %s2391
      %s2393 = sshll.u32 [#allocation11], 4
      %s2394 = int_to_ptr.vmem [resolvable:$true] %s2393
      %2399 = dma.vmem_to_hbm [thread:$0]  %s2394, 1024, %s4, [#allocation7], 128, 128, 8
    $region33: #{tpu_custom_call.1} parent=1 // pred_fallthru
      _
    // Predicated region
    $region34: #{tpu_custom_call.1} parent=1 // pred_check
      _
    $region35: #{tpu_custom_call.1} parent=1 // pred_check_branch
      %2401 = sbr.rel (0) target = $region37
    $region36: #{tpu_custom_call.1} parent=1 // pred_region
      %2402 = dma.done [#allocation7], 1024
    $region37: #{tpu_custom_call.1} parent=1 // pred_fallthru
      _
    %2403 = vsyncpa [#allocation6], 1
    %2404 = vsyncpa [#allocation9], 1
    %2405 = vsyncpa [#allocation7], 1

</llo_original>
